<compile_context>
chip_gen: v6e
topology: v6e:2x2x1
jax: 0.10.0
libtpu: 0.0.40
codegen_flags: <defaults>
</compile_context>

<pallas_src>
import functools

import jax
import jax.numpy as jnp
from jax.experimental import pallas as pl
from jax.experimental.pallas import tpu as pltpu


# ---------------------------------------------------------------------------
# Fused RCAB kernel: one grid step per batch element.
# ---------------------------------------------------------------------------
def _rcab_kernel(x_ref, w1_ref, b1_ref, w2_ref, b2_ref,
                 caw1_ref, cab1_ref, caw2_ref, cab2_ref,
                 o_ref, pad_ref, col_ref, *, H, W, C):
    # x_ref   : (1, H, W*C)   lane-dense input, x[0, h, w*C + c] = image[h, w, c]
    # w1_ref  : (9*C, C)      conv1 weights (rows ordered ky, kx, cin), mxu_dtype
    # b1_ref  : (1, C)        f32
    # w2_ref  : (9*C, C)      conv2 weights, mxu_dtype
    # b2_ref  : (1, C)        f32
    # caw1_ref: (Cr, C), cab1_ref: (Cr, 1)   1x1 squeeze conv (PyTorch layout), f32
    # caw2_ref: (Cr, C), cab2_ref: (1, C)    1x1 excite conv (stored transposed), f32
    # o_ref   : (1, H, W*C)   lane-dense output
    # pad_ref : VMEM (H+2, W+2, C) mxu_dtype — zero-padded conv input / activation
    # col_ref : VMEM (H, W, 9*C)   mxu_dtype — im2col staging buffer
    f32 = jnp.float32
    stg = pad_ref.dtype                       # staging / MXU-operand dtype

    # ---- zero ONLY the 1-pixel border (interior is fully overwritten) ------
    pad_ref[0:1, :, :] = jnp.zeros((1, W + 2, C), stg)
    pad_ref[H + 1:H + 2, :, :] = jnp.zeros((1, W + 2, C), stg)
    pad_ref[:, 0:1, :] = jnp.zeros((H + 2, 1, C), stg)
    pad_ref[:, W + 1:W + 2, :] = jnp.zeros((H + 2, 1, C), stg)

    # ---- stage x into the padded interior: one reshape + one slab store ----
    x_dense = x_ref[0]                                            # (H, W*C)
    pad_ref[1:H + 1, 1:W + 1, :] = x_dense.reshape(H, W, C).astype(stg)

    def conv3x3(w_ref, b_ref):
        # im2col: 9 shifted-window slab copies (no per-row slicing), then one
        # K = 9*C MXU contraction with f32 accumulation.
        for t in range(9):                    # 9 static iterations, slab copies
            ky, kx = t // 3, t % 3
            col_ref[:, :, t * C:(t + 1) * C] = pad_ref[ky:ky + H, kx:kx + W, :]
        acc = jax.lax.dot_general(
            col_ref[...], w_ref[...],
            dimension_numbers=(((2,), (0,)), ((), ())),
            preferred_element_type=f32)                           # (H, W, C) f32
        return acc + b_ref[...].reshape(1, 1, C)

    # conv1 -> ReLU fused into the write-back of the reused padded scratch
    h1 = conv3x3(w1_ref, b1_ref)
    pad_ref[1:H + 1, 1:W + 1, :] = jnp.maximum(h1, 0.0).astype(stg)

    # conv2 (no activation), f32
    h2 = conv3x3(w2_ref, b2_ref)                                  # (H, W, C)

    # ---- CALayer: global avg-pool -> squeeze -> ReLU -> excite -> sigmoid --
    # Tiny 1-row "matmuls" stay on VPU/XLU (broadcast multiply + reductions);
    # sigmoid goes to the EUP slot.  All f32.
    pooled = h2.sum(axis=0).sum(axis=0, keepdims=True) * (1.0 / (H * W))  # (1,C)
    y1 = jnp.sum(caw1_ref[...] * pooled, axis=1, keepdims=True) + cab1_ref[...]
    y1 = jnp.maximum(y1, 0.0)                                             # (Cr,1)
    y = jax.nn.sigmoid(
        jnp.sum(caw2_ref[...] * y1, axis=0, keepdims=True) + cab2_ref[...])  # (1,C)

    # ---- channel scale + residual: one lane-merge reshape, one dense store --
    scaled_dense = (h2 * y).reshape(H, W * C)                     # (H, W*C) f32
    o_ref[0] = (scaled_dense + x_dense.astype(f32)).astype(o_ref.dtype)


# ---------------------------------------------------------------------------
# Wrapper: NCHW in / NCHW out (matching the PyTorch module).
# ---------------------------------------------------------------------------
def rcab_forward(x_nchw, params, *, mxu_dtype=jnp.float32):
    N, C, H, W = x_nchw.shape
    Cr = params["ca_w1"].shape[0]

    # Lane-dense layout plumbing (pure XLA): x_dense[n, h, w*C + c] =
    # x_nchw[n, c, h, w]; the minor dim W*C is a multiple of 128 so HBM tiles
    # and block DMAs are dense.
    x_dense = jnp.transpose(x_nchw, (0, 2, 3, 1)).reshape(N, H, W * C)
    # Pre-cast 3x3 weights to the MXU operand dtype once, outside the kernel.
    w1 = params["conv1_w"].reshape(9 * C, C).astype(mxu_dtype)   # HWIO rows
    w2 = params["conv2_w"].reshape(9 * C, C).astype(mxu_dtype)

    kernel = functools.partial(_rcab_kernel, H=H, W=W, C=C)
    out_dense = pl.pallas_call(
        kernel,
        out_shape=jax.ShapeDtypeStruct((N, H, W * C), x_nchw.dtype),
        grid=(N,),
        in_specs=[
            pl.BlockSpec((1, H, W * C), lambda n: (n, 0, 0)),
            pl.BlockSpec((9 * C, C), lambda n: (0, 0)),
            pl.BlockSpec((1, C), lambda n: (0, 0)),
            pl.BlockSpec((9 * C, C), lambda n: (0, 0)),
            pl.BlockSpec((1, C), lambda n: (0, 0)),
            pl.BlockSpec((Cr, C), lambda n: (0, 0)),
            pl.BlockSpec((Cr, 1), lambda n: (0, 0)),
            pl.BlockSpec((Cr, C), lambda n: (0, 0)),
            pl.BlockSpec((1, C), lambda n: (0, 0)),
        ],
        out_specs=pl.BlockSpec((1, H, W * C), lambda n: (n, 0, 0)),
        scratch_shapes=[
            pltpu.VMEM((H + 2, W + 2, C), mxu_dtype),   # zero-padded input/act
            pltpu.VMEM((H, W, 9 * C), mxu_dtype),       # im2col staging
        ],
        compiler_params=pltpu.CompilerParams(
            dimension_semantics=("parallel",),          # batch -> 2 TCs on v7x
            vmem_limit_bytes=32 * 1024 * 1024),
    )(x_dense, w1, params["conv1_b"], w2, params["conv2_b"],
      params["ca_w1"], params["ca_b1"], params["ca_w2"], params["ca_b2"])

    out = out_dense.reshape(N, H, W, C)
    return jnp.transpose(out, (0, 3, 1, 2))             # -> NCHW


# ---------------------------------------------------------------------------
# Pure-JAX reference (correctness check).
# ---------------------------------------------------------------------------
def rcab_reference(x_nchw, params):
    x = jnp.transpose(x_nchw, (0, 2, 3, 1))             # NHWC
    dn = ("NHWC", "HWIO", "NHWC")
    hi = jax.lax.Precision.HIGHEST

    def conv(z, w, b):
        return jax.lax.conv_general_dilated(
            z, w, (1, 1), "SAME", dimension_numbers=dn,
            precision=hi) + b.reshape(1, 1, 1, -1)

    h = jax.nn.relu(conv(x, params["conv1_w"], params["conv1_b"]))
    h = conv(h, params["conv2_w"], params["conv2_b"])
    pooled = jnp.mean(h, axis=(1, 2))                                  # (N, C)
    y = jax.nn.relu(jnp.dot(pooled, params["ca_w1"].T, precision=hi)
                    + params["ca_b1"].reshape(1, -1))                  # (N, Cr)
    y = jax.nn.sigmoid(jnp.dot(y, params["ca_w2"], precision=hi)
                       + params["ca_b2"])                              # (N, C)
    out = h * y[:, None, None, :] + x
    return jnp.transpose(out, (0, 3, 1, 2))


if __name__ == "__main__":
    # RCAB(conv=default_conv, n_feat=16, kernel_size=3, reduction=4)
    N, C, H, W = 2, 16, 16, 16
    reduction = 4
    Cr = C // reduction

    key = jax.random.PRNGKey(0)
    ks = jax.random.split(key, 9)
    f32 = jnp.float32
    params = {
        # 3x3 conv weights stored HWIO (= transpose of PyTorch (O,I,kH,kW))
        "conv1_w": jax.random.normal(ks[0], (3, 3, C, C), f32) * 0.05,
        "conv1_b": jax.random.normal(ks[1], (1, C), f32) * 0.05,
        "conv2_w": jax.random.normal(ks[2], (3, 3, C, C), f32) * 0.05,
        "conv2_b": jax.random.normal(ks[3], (1, C), f32) * 0.05,
        # CA squeeze conv: PyTorch (Cr, C) weight / (Cr,) bias as (Cr, 1)
        "ca_w1": jax.random.normal(ks[4], (Cr, C), f32) * 0.1,
        "ca_b1": jax.random.normal(ks[5], (Cr, 1), f32) * 0.1,
        # CA excite conv: PyTorch (C, Cr) weight stored transposed as (Cr, C)
        "ca_w2": jax.random.normal(ks[6], (Cr, C), f32) * 0.1,
        "ca_b2": jax.random.normal(ks[7], (1, C), f32) * 0.1,
    }
    x = jax.random.normal(ks[8], (N, C, H, W), f32)

    ref = jax.block_until_ready(rcab_reference(x, params))

    # f32 MXU path (tight tolerance).
    fwd_f32 = jax.jit(functools.partial(rcab_forward, mxu_dtype=jnp.float32))
    out_f32 = jax.block_until_ready(fwd_f32(x, params))
    assert out_f32.shape == (N, C, H, W)
    err_f32 = float(jnp.max(jnp.abs(out_f32 - ref)))
    assert jnp.allclose(out_f32, ref, atol=2e-4, rtol=2e-4), err_f32

    # bf16 staging/MXU path (production default on v6e/v7x; looser tolerance).
    fwd_bf16 = jax.jit(functools.partial(rcab_forward, mxu_dtype=jnp.bfloat16))
    out_bf16 = jax.block_until_ready(fwd_bf16(x, params))
    err_bf16 = float(jnp.max(jnp.abs(out_bf16 - ref)))
    assert jnp.allclose(out_bf16, ref, atol=3e-2, rtol=3e-2), err_bf16

    print("KERNEL_OK")
</pallas_src>

<mosaic_0001>
module attributes {stable_mosaic.version = 11 : i64} {
  func.func @_rcab_kernel(%arg0: i32, %arg1: memref<1x16x256xf32, #tpu.memory_space<vmem>>, %arg2: memref<144x16xf32, #tpu.memory_space<vmem>>, %arg3: memref<1x16xf32, #tpu.memory_space<vmem>>, %arg4: memref<144x16xf32, #tpu.memory_space<vmem>>, %arg5: memref<1x16xf32, #tpu.memory_space<vmem>>, %arg6: memref<4x16xf32, #tpu.memory_space<vmem>>, %arg7: memref<4x1xf32, #tpu.memory_space<vmem>>, %arg8: memref<4x16xf32, #tpu.memory_space<vmem>>, %arg9: memref<1x16xf32, #tpu.memory_space<vmem>>, %arg10: memref<1x16x256xf32, #tpu.memory_space<vmem>>, %arg11: memref<18x18x16xf32, #tpu.memory_space<vmem>>, %arg12: memref<16x16x144xf32, #tpu.memory_space<vmem>>) attributes {dimension_semantics = [#tpu.dimension_semantics<parallel>], iteration_bounds = array<i64: 2>, scalar_prefetch = 0 : i64, scratch_operands = 2 : i64, tpu.core_type = #tpu.core_type<tc>, window_params = [{transform_indices = @transform_0, window_bounds = array<i64: 1, 16, 256>}, {pipeline_mode = #tpu.pipeline_mode<synchronous>, transform_indices = @transform_1, window_bounds = array<i64: 144, 16>}, {pipeline_mode = #tpu.pipeline_mode<synchronous>, transform_indices = @transform_2, window_bounds = array<i64: 1, 16>}, {pipeline_mode = #tpu.pipeline_mode<synchronous>, transform_indices = @transform_3, window_bounds = array<i64: 144, 16>}, {pipeline_mode = #tpu.pipeline_mode<synchronous>, transform_indices = @transform_4, window_bounds = array<i64: 1, 16>}, {pipeline_mode = #tpu.pipeline_mode<synchronous>, transform_indices = @transform_5, window_bounds = array<i64: 4, 16>}, {pipeline_mode = #tpu.pipeline_mode<synchronous>, transform_indices = @transform_6, window_bounds = array<i64: 4, 1>}, {pipeline_mode = #tpu.pipeline_mode<synchronous>, transform_indices = @transform_7, window_bounds = array<i64: 4, 16>}, {pipeline_mode = #tpu.pipeline_mode<synchronous>, transform_indices = @transform_8, window_bounds = array<i64: 1, 16>}, {transform_indices = @transform_9, window_bounds = array<i64: 1, 16, 256>}]} {
    %cst = arith.constant 0.000000e+00 : f32
    %0 = vector.broadcast %cst : f32 to vector<1x18x16xf32>
    %c0 = arith.constant 0 : index
    %c0_0 = arith.constant 0 : index
    %c0_1 = arith.constant 0 : index
    %1 = vector.load %arg11[%c0, %c0_0, %c0_1] : memref<18x18x16xf32, #tpu.memory_space<vmem>>, vector<1x18x16xf32>
    tpu.vector_store %arg11[%c0, %c0_0, %c0_1], %0 {strides = array<i32>} : memref<18x18x16xf32, #tpu.memory_space<vmem>>, vector<1x18x16xf32>,
    %cst_2 = arith.constant 0.000000e+00 : f32
    %2 = vector.broadcast %cst_2 : f32 to vector<1x18x16xf32>
    %c17 = arith.constant 17 : index
    %c0_3 = arith.constant 0 : index
    %c0_4 = arith.constant 0 : index
    %3 = vector.load %arg11[%c17, %c0_3, %c0_4] : memref<18x18x16xf32, #tpu.memory_space<vmem>>, vector<1x18x16xf32>
    tpu.vector_store %arg11[%c17, %c0_3, %c0_4], %2 {strides = array<i32>} : memref<18x18x16xf32, #tpu.memory_space<vmem>>, vector<1x18x16xf32>,
    %cst_5 = arith.constant 0.000000e+00 : f32
    %4 = vector.broadcast %cst_5 : f32 to vector<18x1x16xf32>
    %c0_6 = arith.constant 0 : index
    %c0_7 = arith.constant 0 : index
    %c0_8 = arith.constant 0 : index
    %5 = vector.load %arg11[%c0_6, %c0_7, %c0_8] : memref<18x18x16xf32, #tpu.memory_space<vmem>>, vector<18x1x16xf32>
    tpu.vector_store %arg11[%c0_6, %c0_7, %c0_8], %4 {strides = array<i32>} : memref<18x18x16xf32, #tpu.memory_space<vmem>>, vector<18x1x16xf32>,
    %cst_9 = arith.constant 0.000000e+00 : f32
    %6 = vector.broadcast %cst_9 : f32 to vector<18x1x16xf32>
    %c0_10 = arith.constant 0 : index
    %c17_11 = arith.constant 17 : index
    %c0_12 = arith.constant 0 : index
    %7 = vector.load %arg11[%c0_10, %c17_11, %c0_12] : memref<18x18x16xf32, #tpu.memory_space<vmem>>, vector<18x1x16xf32>
    tpu.vector_store %arg11[%c0_10, %c17_11, %c0_12], %6 {strides = array<i32>} : memref<18x18x16xf32, #tpu.memory_space<vmem>>, vector<18x1x16xf32>,
    %c0_13 = arith.constant 0 : index
    %c0_14 = arith.constant 0 : index
    %c0_15 = arith.constant 0 : index
    %8 = vector.load %arg1[%c0_13, %c0_14, %c0_15] : memref<1x16x256xf32, #tpu.memory_space<vmem>>, vector<1x16x256xf32>
    %9 = vector.shape_cast %8 : vector<1x16x256xf32> to vector<16x256xf32>
    %10 = vector.shape_cast %9 : vector<16x256xf32> to vector<16x16x16xf32>
    %c1 = arith.constant 1 : index
    %c1_16 = arith.constant 1 : index
    %c0_17 = arith.constant 0 : index
    %11 = vector.load %arg11[%c1, %c1_16, %c0_17] : memref<18x18x16xf32, #tpu.memory_space<vmem>>, vector<16x16x16xf32>
    tpu.vector_store %arg11[%c1, %c1_16, %c0_17], %10 {strides = array<i32>} : memref<18x18x16xf32, #tpu.memory_space<vmem>>, vector<16x16x16xf32>,
    %c0_18 = arith.constant 0 : index
    %c0_19 = arith.constant 0 : index
    %c0_20 = arith.constant 0 : index
    %12 = vector.load %arg11[%c0_18, %c0_19, %c0_20] : memref<18x18x16xf32, #tpu.memory_space<vmem>>, vector<16x16x16xf32>
    %c0_21 = arith.constant 0 : index
    %c0_22 = arith.constant 0 : index
    %c0_23 = arith.constant 0 : index
    %13 = vector.load %arg12[%c0_21, %c0_22, %c0_23] : memref<16x16x144xf32, #tpu.memory_space<vmem>>, vector<16x16x16xf32>
    tpu.vector_store %arg12[%c0_21, %c0_22, %c0_23], %12 {strides = array<i32>} : memref<16x16x144xf32, #tpu.memory_space<vmem>>, vector<16x16x16xf32>,
    %c0_24 = arith.constant 0 : index
    %c1_25 = arith.constant 1 : index
    %c0_26 = arith.constant 0 : index
    %14 = vector.load %arg11[%c0_24, %c1_25, %c0_26] : memref<18x18x16xf32, #tpu.memory_space<vmem>>, vector<16x16x16xf32>
    %c0_27 = arith.constant 0 : index
    %c0_28 = arith.constant 0 : index
    %c16 = arith.constant 16 : index
    %15 = vector.load %arg12[%c0_27, %c0_28, %c16] : memref<16x16x144xf32, #tpu.memory_space<vmem>>, vector<16x16x16xf32>
    tpu.vector_store %arg12[%c0_27, %c0_28, %c16], %14 {strides = array<i32>} : memref<16x16x144xf32, #tpu.memory_space<vmem>>, vector<16x16x16xf32>,
    %c0_29 = arith.constant 0 : index
    %c2 = arith.constant 2 : index
    %c0_30 = arith.constant 0 : index
    %16 = vector.load %arg11[%c0_29, %c2, %c0_30] : memref<18x18x16xf32, #tpu.memory_space<vmem>>, vector<16x16x16xf32>
    %c0_31 = arith.constant 0 : index
    %c0_32 = arith.constant 0 : index
    %c32 = arith.constant 32 : index
    %17 = vector.load %arg12[%c0_31, %c0_32, %c32] : memref<16x16x144xf32, #tpu.memory_space<vmem>>, vector<16x16x16xf32>
    tpu.vector_store %arg12[%c0_31, %c0_32, %c32], %16 {strides = array<i32>} : memref<16x16x144xf32, #tpu.memory_space<vmem>>, vector<16x16x16xf32>,
    %c1_33 = arith.constant 1 : index
    %c0_34 = arith.constant 0 : index
    %c0_35 = arith.constant 0 : index
    %18 = vector.load %arg11[%c1_33, %c0_34, %c0_35] : memref<18x18x16xf32, #tpu.memory_space<vmem>>, vector<16x16x16xf32>
    %c0_36 = arith.constant 0 : index
    %c0_37 = arith.constant 0 : index
    %c48 = arith.constant 48 : index
    %19 = vector.load %arg12[%c0_36, %c0_37, %c48] : memref<16x16x144xf32, #tpu.memory_space<vmem>>, vector<16x16x16xf32>
    tpu.vector_store %arg12[%c0_36, %c0_37, %c48], %18 {strides = array<i32>} : memref<16x16x144xf32, #tpu.memory_space<vmem>>, vector<16x16x16xf32>,
    %c1_38 = arith.constant 1 : index
    %c1_39 = arith.constant 1 : index
    %c0_40 = arith.constant 0 : index
    %20 = vector.load %arg11[%c1_38, %c1_39, %c0_40] : memref<18x18x16xf32, #tpu.memory_space<vmem>>, vector<16x16x16xf32>
    %c0_41 = arith.constant 0 : index
    %c0_42 = arith.constant 0 : index
    %c64 = arith.constant 64 : index
    %21 = vector.load %arg12[%c0_41, %c0_42, %c64] : memref<16x16x144xf32, #tpu.memory_space<vmem>>, vector<16x16x16xf32>
    tpu.vector_store %arg12[%c0_41, %c0_42, %c64], %20 {strides = array<i32>} : memref<16x16x144xf32, #tpu.memory_space<vmem>>, vector<16x16x16xf32>,
    %c1_43 = arith.constant 1 : index
    %c2_44 = arith.constant 2 : index
    %c0_45 = arith.constant 0 : index
    %22 = vector.load %arg11[%c1_43, %c2_44, %c0_45] : memref<18x18x16xf32, #tpu.memory_space<vmem>>, vector<16x16x16xf32>
    %c0_46 = arith.constant 0 : index
    %c0_47 = arith.constant 0 : index
    %c80 = arith.constant 80 : index
    %23 = vector.load %arg12[%c0_46, %c0_47, %c80] : memref<16x16x144xf32, #tpu.memory_space<vmem>>, vector<16x16x16xf32>
    tpu.vector_store %arg12[%c0_46, %c0_47, %c80], %22 {strides = array<i32>} : memref<16x16x144xf32, #tpu.memory_space<vmem>>, vector<16x16x16xf32>,
    %c2_48 = arith.constant 2 : index
    %c0_49 = arith.constant 0 : index
    %c0_50 = arith.constant 0 : index
    %24 = vector.load %arg11[%c2_48, %c0_49, %c0_50] : memref<18x18x16xf32, #tpu.memory_space<vmem>>, vector<16x16x16xf32>
    %c0_51 = arith.constant 0 : index
    %c0_52 = arith.constant 0 : index
    %c96 = arith.constant 96 : index
    %25 = vector.load %arg12[%c0_51, %c0_52, %c96] : memref<16x16x144xf32, #tpu.memory_space<vmem>>, vector<16x16x16xf32>
    tpu.vector_store %arg12[%c0_51, %c0_52, %c96], %24 {strides = array<i32>} : memref<16x16x144xf32, #tpu.memory_space<vmem>>, vector<16x16x16xf32>,
    %c2_53 = arith.constant 2 : index
    %c1_54 = arith.constant 1 : index
    %c0_55 = arith.constant 0 : index
    %26 = vector.load %arg11[%c2_53, %c1_54, %c0_55] : memref<18x18x16xf32, #tpu.memory_space<vmem>>, vector<16x16x16xf32>
    %c0_56 = arith.constant 0 : index
    %c0_57 = arith.constant 0 : index
    %c112 = arith.constant 112 : index
    %27 = vector.load %arg12[%c0_56, %c0_57, %c112] : memref<16x16x144xf32, #tpu.memory_space<vmem>>, vector<16x16x16xf32>
    tpu.vector_store %arg12[%c0_56, %c0_57, %c112], %26 {strides = array<i32>} : memref<16x16x144xf32, #tpu.memory_space<vmem>>, vector<16x16x16xf32>,
    %c2_58 = arith.constant 2 : index
    %c2_59 = arith.constant 2 : index
    %c0_60 = arith.constant 0 : index
    %28 = vector.load %arg11[%c2_58, %c2_59, %c0_60] : memref<18x18x16xf32, #tpu.memory_space<vmem>>, vector<16x16x16xf32>
    %c0_61 = arith.constant 0 : index
    %c0_62 = arith.constant 0 : index
    %c128 = arith.constant 128 : index
    %29 = vector.load %arg12[%c0_61, %c0_62, %c128] : memref<16x16x144xf32, #tpu.memory_space<vmem>>, vector<16x16x16xf32>
    tpu.vector_store %arg12[%c0_61, %c0_62, %c128], %28 {strides = array<i32>} : memref<16x16x144xf32, #tpu.memory_space<vmem>>, vector<16x16x16xf32>,
    %c0_63 = arith.constant 0 : index
    %c0_64 = arith.constant 0 : index
    %c0_65 = arith.constant 0 : index
    %30 = vector.load %arg12[%c0_63, %c0_64, %c0_65] : memref<16x16x144xf32, #tpu.memory_space<vmem>>, vector<16x16x144xf32>
    %c0_66 = arith.constant 0 : index
    %c0_67 = arith.constant 0 : index
    %31 = vector.load %arg2[%c0_66, %c0_67] : memref<144x16xf32, #tpu.memory_space<vmem>>, vector<144x16xf32>
    %cst_68 = arith.constant dense<0.000000e+00> : vector<16x16x16xf32>
    %32 = tpu.matmul %30, %31, %cst_68 {dimension_numbers = #tpu.dot_dimension_numbers<[2], [0], [0, 1], [1], [0, 0, 0, 1, 1, 1], [], []>} : vector<16x16x144xf32>, vector<144x16xf32>, vector<16x16x16xf32> -> vector<16x16x16xf32>
    %c0_69 = arith.constant 0 : index
    %c0_70 = arith.constant 0 : index
    %33 = vector.load %arg3[%c0_69, %c0_70] : memref<1x16xf32, #tpu.memory_space<vmem>>, vector<1x16xf32>
    %34 = vector.shape_cast %33 : vector<1x16xf32> to vector<1x1x16xf32>
    %35 = vector.broadcast %34 : vector<1x1x16xf32> to vector<16x16x16xf32>
    %36 = arith.addf %32, %35 : vector<16x16x16xf32>
    %cst_71 = arith.constant 0.000000e+00 : f32
    %37 = vector.broadcast %cst_71 : f32 to vector<16x16x16xf32>
    %38 = arith.maximumf %36, %37 : vector<16x16x16xf32>
    %c1_72 = arith.constant 1 : index
    %c1_73 = arith.constant 1 : index
    %c0_74 = arith.constant 0 : index
    %39 = vector.load %arg11[%c1_72, %c1_73, %c0_74] : memref<18x18x16xf32, #tpu.memory_space<vmem>>, vector<16x16x16xf32>
    tpu.vector_store %arg11[%c1_72, %c1_73, %c0_74], %38 {strides = array<i32>} : memref<18x18x16xf32, #tpu.memory_space<vmem>>, vector<16x16x16xf32>,
    %c0_75 = arith.constant 0 : index
    %c0_76 = arith.constant 0 : index
    %c0_77 = arith.constant 0 : index
    %40 = vector.load %arg11[%c0_75, %c0_76, %c0_77] : memref<18x18x16xf32, #tpu.memory_space<vmem>>, vector<16x16x16xf32>
    %c0_78 = arith.constant 0 : index
    %c0_79 = arith.constant 0 : index
    %c0_80 = arith.constant 0 : index
    %41 = vector.load %arg12[%c0_78, %c0_79, %c0_80] : memref<16x16x144xf32, #tpu.memory_space<vmem>>, vector<16x16x16xf32>
    tpu.vector_store %arg12[%c0_78, %c0_79, %c0_80], %40 {strides = array<i32>} : memref<16x16x144xf32, #tpu.memory_space<vmem>>, vector<16x16x16xf32>,
    %c0_81 = arith.constant 0 : index
    %c1_82 = arith.constant 1 : index
    %c0_83 = arith.constant 0 : index
    %42 = vector.load %arg11[%c0_81, %c1_82, %c0_83] : memref<18x18x16xf32, #tpu.memory_space<vmem>>, vector<16x16x16xf32>
    %c0_84 = arith.constant 0 : index
    %c0_85 = arith.constant 0 : index
    %c16_86 = arith.constant 16 : index
    %43 = vector.load %arg12[%c0_84, %c0_85, %c16_86] : memref<16x16x144xf32, #tpu.memory_space<vmem>>, vector<16x16x16xf32>
    tpu.vector_store %arg12[%c0_84, %c0_85, %c16_86], %42 {strides = array<i32>} : memref<16x16x144xf32, #tpu.memory_space<vmem>>, vector<16x16x16xf32>,
    %c0_87 = arith.constant 0 : index
    %c2_88 = arith.constant 2 : index
    %c0_89 = arith.constant 0 : index
    %44 = vector.load %arg11[%c0_87, %c2_88, %c0_89] : memref<18x18x16xf32, #tpu.memory_space<vmem>>, vector<16x16x16xf32>
    %c0_90 = arith.constant 0 : index
    %c0_91 = arith.constant 0 : index
    %c32_92 = arith.constant 32 : index
    %45 = vector.load %arg12[%c0_90, %c0_91, %c32_92] : memref<16x16x144xf32, #tpu.memory_space<vmem>>, vector<16x16x16xf32>
    tpu.vector_store %arg12[%c0_90, %c0_91, %c32_92], %44 {strides = array<i32>} : memref<16x16x144xf32, #tpu.memory_space<vmem>>, vector<16x16x16xf32>,
    %c1_93 = arith.constant 1 : index
    %c0_94 = arith.constant 0 : index
    %c0_95 = arith.constant 0 : index
    %46 = vector.load %arg11[%c1_93, %c0_94, %c0_95] : memref<18x18x16xf32, #tpu.memory_space<vmem>>, vector<16x16x16xf32>
    %c0_96 = arith.constant 0 : index
    %c0_97 = arith.constant 0 : index
    %c48_98 = arith.constant 48 : index
    %47 = vector.load %arg12[%c0_96, %c0_97, %c48_98] : memref<16x16x144xf32, #tpu.memory_space<vmem>>, vector<16x16x16xf32>
    tpu.vector_store %arg12[%c0_96, %c0_97, %c48_98], %46 {strides = array<i32>} : memref<16x16x144xf32, #tpu.memory_space<vmem>>, vector<16x16x16xf32>,
    %c1_99 = arith.constant 1 : index
    %c1_100 = arith.constant 1 : index
    %c0_101 = arith.constant 0 : index
    %48 = vector.load %arg11[%c1_99, %c1_100, %c0_101] : memref<18x18x16xf32, #tpu.memory_space<vmem>>, vector<16x16x16xf32>
    %c0_102 = arith.constant 0 : index
    %c0_103 = arith.constant 0 : index
    %c64_104 = arith.constant 64 : index
    %49 = vector.load %arg12[%c0_102, %c0_103, %c64_104] : memref<16x16x144xf32, #tpu.memory_space<vmem>>, vector<16x16x16xf32>
    tpu.vector_store %arg12[%c0_102, %c0_103, %c64_104], %48 {strides = array<i32>} : memref<16x16x144xf32, #tpu.memory_space<vmem>>, vector<16x16x16xf32>,
    %c1_105 = arith.constant 1 : index
    %c2_106 = arith.constant 2 : index
    %c0_107 = arith.constant 0 : index
    %50 = vector.load %arg11[%c1_105, %c2_106, %c0_107] : memref<18x18x16xf32, #tpu.memory_space<vmem>>, vector<16x16x16xf32>
    %c0_108 = arith.constant 0 : index
    %c0_109 = arith.constant 0 : index
    %c80_110 = arith.constant 80 : index
    %51 = vector.load %arg12[%c0_108, %c0_109, %c80_110] : memref<16x16x144xf32, #tpu.memory_space<vmem>>, vector<16x16x16xf32>
    tpu.vector_store %arg12[%c0_108, %c0_109, %c80_110], %50 {strides = array<i32>} : memref<16x16x144xf32, #tpu.memory_space<vmem>>, vector<16x16x16xf32>,
    %c2_111 = arith.constant 2 : index
    %c0_112 = arith.constant 0 : index
    %c0_113 = arith.constant 0 : index
    %52 = vector.load %arg11[%c2_111, %c0_112, %c0_113] : memref<18x18x16xf32, #tpu.memory_space<vmem>>, vector<16x16x16xf32>
    %c0_114 = arith.constant 0 : index
    %c0_115 = arith.constant 0 : index
    %c96_116 = arith.constant 96 : index
    %53 = vector.load %arg12[%c0_114, %c0_115, %c96_116] : memref<16x16x144xf32, #tpu.memory_space<vmem>>, vector<16x16x16xf32>
    tpu.vector_store %arg12[%c0_114, %c0_115, %c96_116], %52 {strides = array<i32>} : memref<16x16x144xf32, #tpu.memory_space<vmem>>, vector<16x16x16xf32>,
    %c2_117 = arith.constant 2 : index
    %c1_118 = arith.constant 1 : index
    %c0_119 = arith.constant 0 : index
    %54 = vector.load %arg11[%c2_117, %c1_118, %c0_119] : memref<18x18x16xf32, #tpu.memory_space<vmem>>, vector<16x16x16xf32>
    %c0_120 = arith.constant 0 : index
    %c0_121 = arith.constant 0 : index
    %c112_122 = arith.constant 112 : index
    %55 = vector.load %arg12[%c0_120, %c0_121, %c112_122] : memref<16x16x144xf32, #tpu.memory_space<vmem>>, vector<16x16x16xf32>
    tpu.vector_store %arg12[%c0_120, %c0_121, %c112_122], %54 {strides = array<i32>} : memref<16x16x144xf32, #tpu.memory_space<vmem>>, vector<16x16x16xf32>,
    %c2_123 = arith.constant 2 : index
    %c2_124 = arith.constant 2 : index
    %c0_125 = arith.constant 0 : index
    %56 = vector.load %arg11[%c2_123, %c2_124, %c0_125] : memref<18x18x16xf32, #tpu.memory_space<vmem>>, vector<16x16x16xf32>
    %c0_126 = arith.constant 0 : index
    %c0_127 = arith.constant 0 : index
    %c128_128 = arith.constant 128 : index
    %57 = vector.load %arg12[%c0_126, %c0_127, %c128_128] : memref<16x16x144xf32, #tpu.memory_space<vmem>>, vector<16x16x16xf32>
    tpu.vector_store %arg12[%c0_126, %c0_127, %c128_128], %56 {strides = array<i32>} : memref<16x16x144xf32, #tpu.memory_space<vmem>>, vector<16x16x16xf32>,
    %c0_129 = arith.constant 0 : index
    %c0_130 = arith.constant 0 : index
    %c0_131 = arith.constant 0 : index
    %58 = vector.load %arg12[%c0_129, %c0_130, %c0_131] : memref<16x16x144xf32, #tpu.memory_space<vmem>>, vector<16x16x144xf32>
    %c0_132 = arith.constant 0 : index
    %c0_133 = arith.constant 0 : index
    %59 = vector.load %arg4[%c0_132, %c0_133] : memref<144x16xf32, #tpu.memory_space<vmem>>, vector<144x16xf32>
    %cst_134 = arith.constant dense<0.000000e+00> : vector<16x16x16xf32>
    %60 = tpu.matmul %58, %59, %cst_134 {dimension_numbers = #tpu.dot_dimension_numbers<[2], [0], [0, 1], [1], [0, 0, 0, 1, 1, 1], [], []>} : vector<16x16x144xf32>, vector<144x16xf32>, vector<16x16x16xf32> -> vector<16x16x16xf32>
    %c0_135 = arith.constant 0 : index
    %c0_136 = arith.constant 0 : index
    %61 = vector.load %arg5[%c0_135, %c0_136] : memref<1x16xf32, #tpu.memory_space<vmem>>, vector<1x16xf32>
    %62 = vector.shape_cast %61 : vector<1x16xf32> to vector<1x1x16xf32>
    %63 = vector.broadcast %62 : vector<1x1x16xf32> to vector<16x16x16xf32>
    %64 = arith.addf %60, %63 : vector<16x16x16xf32>
    %cst_137 = arith.constant dense<0.000000e+00> : vector<16x16xf32>
    %65 = vector.multi_reduction <add>, %64, %cst_137 [0] : vector<16x16x16xf32> to vector<16x16xf32>
    %cst_138 = arith.constant dense<0.000000e+00> : vector<16xf32>
    %66 = vector.multi_reduction <add>, %65, %cst_138 [0] : vector<16x16xf32> to vector<16xf32>
    %67 = vector.shape_cast %66 : vector<16xf32> to vector<1x16xf32>
    %cst_139 = arith.constant 3.906250e-03 : f32
    %68 = vector.broadcast %cst_139 : f32 to vector<1x16xf32>
    %69 = arith.mulf %67, %68 : vector<1x16xf32>
    %c0_140 = arith.constant 0 : index
    %c0_141 = arith.constant 0 : index
    %70 = vector.load %arg6[%c0_140, %c0_141] : memref<4x16xf32, #tpu.memory_space<vmem>>, vector<4x16xf32>
    %71 = vector.broadcast %69 : vector<1x16xf32> to vector<4x16xf32>
    %72 = arith.mulf %70, %71 : vector<4x16xf32>
    %cst_142 = arith.constant dense<0.000000e+00> : vector<4xf32>
    %73 = vector.multi_reduction <add>, %72, %cst_142 [1] : vector<4x16xf32> to vector<4xf32>
    %74 = vector.shape_cast %73 : vector<4xf32> to vector<4x1xf32>
    %c0_143 = arith.constant 0 : index
    %c0_144 = arith.constant 0 : index
    %75 = vector.load %arg7[%c0_143, %c0_144] : memref<4x1xf32, #tpu.memory_space<vmem>>, vector<4x1xf32>
    %76 = arith.addf %74, %75 : vector<4x1xf32>
    %cst_145 = arith.constant 0.000000e+00 : f32
    %77 = vector.broadcast %cst_145 : f32 to vector<4x1xf32>
    %78 = arith.maximumf %76, %77 : vector<4x1xf32>
    %c0_146 = arith.constant 0 : index
    %c0_147 = arith.constant 0 : index
    %79 = vector.load %arg8[%c0_146, %c0_147] : memref<4x16xf32, #tpu.memory_space<vmem>>, vector<4x16xf32>
    %80 = vector.broadcast %78 : vector<4x1xf32> to vector<4x16xf32>
    %81 = arith.mulf %79, %80 : vector<4x16xf32>
    %cst_148 = arith.constant dense<0.000000e+00> : vector<16xf32>
    %82 = vector.multi_reduction <add>, %81, %cst_148 [0] : vector<4x16xf32> to vector<16xf32>
    %83 = vector.shape_cast %82 : vector<16xf32> to vector<1x16xf32>
    %c0_149 = arith.constant 0 : index
    %c0_150 = arith.constant 0 : index
    %84 = vector.load %arg9[%c0_149, %c0_150] : memref<1x16xf32, #tpu.memory_space<vmem>>, vector<1x16xf32>
    %85 = arith.addf %83, %84 : vector<1x16xf32>
    %86 = arith.negf %85 : vector<1x16xf32>
    %87 = math.exp %86 : vector<1x16xf32>
    %cst_151 = arith.constant 1.000000e+00 : f32
    %88 = vector.broadcast %cst_151 : f32 to vector<1x16xf32>
    %89 = arith.addf %88, %87 : vector<1x16xf32>
    %90 = arith.divf %88, %89 : vector<1x16xf32>
    %91 = vector.shape_cast %90 : vector<1x16xf32> to vector<1x1x16xf32>
    %92 = vector.broadcast %91 : vector<1x1x16xf32> to vector<16x16x16xf32>
    %93 = arith.mulf %64, %92 : vector<16x16x16xf32>
    %94 = vector.shape_cast %93 : vector<16x16x16xf32> to vector<16x256xf32>
    %95 = arith.addf %94, %9 : vector<16x256xf32>
    %c0_152 = arith.constant 0 : index
    %c0_153 = arith.constant 0 : index
    %c0_154 = arith.constant 0 : index
    %96 = vector.load %arg10[%c0_152, %c0_153, %c0_154] : memref<1x16x256xf32, #tpu.memory_space<vmem>>, vector<1x16x256xf32>
    %97 = vector.shape_cast %96 : vector<1x16x256xf32> to vector<16x256xf32>
    %98 = vector.shape_cast %95 : vector<16x256xf32> to vector<1x16x256xf32>
    tpu.vector_store %arg10[%c0_152, %c0_153, %c0_154], %98 {strides = array<i32>} : memref<1x16x256xf32, #tpu.memory_space<vmem>>, vector<1x16x256xf32>,
    return
  }
  func.func @transform_0(%arg0: i32) -> (i32, i32, i32) {
    %c0_i32 = arith.constant 0 : i32
    %c0_i32_0 = arith.constant 0 : i32
    %c0_i32_1 = arith.constant 0 : i32
    return %arg0, %c0_i32, %c0_i32_0 : i32, i32, i32
  }
  func.func @transform_1(%arg0: i32) -> (i32, i32) {
    %c0_i32 = arith.constant 0 : i32
    %c0_i32_0 = arith.constant 0 : i32
    %c0_i32_1 = arith.constant 0 : i32
    return %c0_i32, %c0_i32_0 : i32, i32
  }
  func.func @transform_2(%arg0: i32) -> (i32, i32) {
    %c0_i32 = arith.constant 0 : i32
    %c0_i32_0 = arith.constant 0 : i32
    %c0_i32_1 = arith.constant 0 : i32
    return %c0_i32, %c0_i32_0 : i32, i32
  }
  func.func @transform_3(%arg0: i32) -> (i32, i32) {
    %c0_i32 = arith.constant 0 : i32
    %c0_i32_0 = arith.constant 0 : i32
    %c0_i32_1 = arith.constant 0 : i32
    return %c0_i32, %c0_i32_0 : i32, i32
  }
  func.func @transform_4(%arg0: i32) -> (i32, i32) {
    %c0_i32 = arith.constant 0 : i32
    %c0_i32_0 = arith.constant 0 : i32
    %c0_i32_1 = arith.constant 0 : i32
    return %c0_i32, %c0_i32_0 : i32, i32
  }
  func.func @transform_5(%arg0: i32) -> (i32, i32) {
    %c0_i32 = arith.constant 0 : i32
    %c0_i32_0 = arith.constant 0 : i32
    %c0_i32_1 = arith.constant 0 : i32
    return %c0_i32, %c0_i32_0 : i32, i32
  }
  func.func @transform_6(%arg0: i32) -> (i32, i32) {
    %c0_i32 = arith.constant 0 : i32
    %c0_i32_0 = arith.constant 0 : i32
    %c0_i32_1 = arith.constant 0 : i32
    return %c0_i32, %c0_i32_0 : i32, i32
  }
  func.func @transform_7(%arg0: i32) -> (i32, i32) {
    %c0_i32 = arith.constant 0 : i32
    %c0_i32_0 = arith.constant 0 : i32
    %c0_i32_1 = arith.constant 0 : i32
    return %c0_i32, %c0_i32_0 : i32, i32
  }
  func.func @transform_8(%arg0: i32) -> (i32, i32) {
    %c0_i32 = arith.constant 0 : i32
    %c0_i32_0 = arith.constant 0 : i32
    %c0_i32_1 = arith.constant 0 : i32
    return %c0_i32, %c0_i32_0 : i32, i32
  }
  func.func @transform_9(%arg0: i32) -> (i32, i32, i32) {
    %c0_i32 = arith.constant 0 : i32
    %c0_i32_0 = arith.constant 0 : i32
    %c0_i32_1 = arith.constant 0 : i32
    return %arg0, %c0_i32, %c0_i32_0 : i32, i32, i32
  }
}

</mosaic_0001>

<llo_original>
// kernel: rcab_forward.1
$region0: #{rcab_forward.1}
  #allocation0 [shape = 'u32[]', space=smem, size = 0x4, offset = 0x4, fixed_abs, tag = 'smem constant byte address 0x4 - core index']
  #allocation1 [shape = 'u32[144,128]{1,0:T(1,128)}', space=vmem, size = 0x12000, scoped, tag = 'internal scratch']
  #allocation2 [shape = 'f32[18,18,16]{2,1,0:T(8,128)}', space=vmem, size = 0x36000, scoped, tag = 'scratch operand']
  #allocation3 [shape = 'f32[16,16,144]{2,1,0:T(8,128)}', space=vmem, size = 0x40000, scoped, tag = 'scratch operand']
  %s0 = inlined_call_operand.vmem [shape: f32[2,16,256], index: 0, kind: input, shape index: {}]
  %s1 = inlined_call_operand.vmem [shape: f32[144,16], index: 1, kind: input, shape index: {}]
  %s2 = inlined_call_operand.vmem [shape: f32[1,16], index: 2, kind: input, shape index: {}]
  %s3 = inlined_call_operand.vmem [shape: f32[144,16], index: 3, kind: input, shape index: {}]
  %s4 = inlined_call_operand.vmem [shape: f32[1,16], index: 4, kind: input, shape index: {}]
  %s5 = inlined_call_operand.vmem [shape: f32[4,16], index: 5, kind: input, shape index: {}]
  %s6 = inlined_call_operand.vmem [shape: f32[4,1], index: 6, kind: input, shape index: {}]
  %s7 = inlined_call_operand.vmem [shape: f32[4,16], index: 7, kind: input, shape index: {}]
  %s8 = inlined_call_operand.vmem [shape: f32[1,16], index: 8, kind: input, shape index: {}]
  %s9 = inlined_call_operand.vmem [shape: f32[2,16,256], index: 9, kind: output, shape index: {}]
  %s10 = sld [smem:[#allocation0]]
  $region69: #{rcab_forward.1} parent=0
    _
  %s12 = ssub.s32 1, %s10
  %s13 = scalar_select 0, %s12, %s10
  loop: start=0, step=1, limit=4
  $region2: #{rcab_forward.1} parent=0 // loop_pre_header
    _
  $region3: #{rcab_forward.1} parent=0 // loop_header
    %s15 = sphi 0, %s19
    %p16 = scmp.ge.s32.totalorder %s15, 4
    %s25 = sphi 0, %s27
    %s28 = sphi 0, %s25
    %s29 = sphi 0, %s28
    %s45 = sphi 0, %s29
    %s49 = sphi 0, %s49
    %s51 = sphi 0, %s49
    %s52 = sphi 0, %s51
    %s66 = sphi 0, %s52
    %s70 = sphi 0, %s70
    %s72 = sphi 0, %s70
    %s73 = sphi 0, %s72
    %s87 = sphi 0, %s73
    %s91 = sphi 0, %s91
    %s93 = sphi 0, %s91
    %s94 = sphi 0, %s93
    %s108 = sphi 0, %s94
    %s112 = sphi 0, %s112
    %s114 = sphi 0, %s112
    %s115 = sphi 0, %s114
    %s129 = sphi 0, %s115
    %s133 = sphi 0, %s133
    %s135 = sphi 0, %s133
    %s136 = sphi 0, %s135
    %s150 = sphi 0, %s136
    %s154 = sphi 0, %s154
    %s156 = sphi 0, %s154
    %s157 = sphi 0, %s156
    %s171 = sphi 0, %s157
    %s175 = sphi 0, %s175
    %s177 = sphi 0, %s175
    %s178 = sphi 0, %s177
    %s192 = sphi 0, %s178
    %s196 = sphi 0, %s196
    %s198 = sphi 0, %s196
    %s199 = sphi 0, %s198
    %s213 = sphi 0, %s199
    %s219 = sphi 0, %s221
    %s222 = sphi 0, %s219
    %s223 = sphi 0, %s222
    %s239 = sphi 0, %s223
  $region4: #{rcab_forward.1} parent=0 // loop_header_branch
    %18 = sbr.rel (%p16) target = $region8
  $region5: #{rcab_forward.1} parent=0 // loop_body
    %s20 = ssub.s32 %s15, 1
    %s21 = ssub.s32 %s15, 2
    %s22 = sadd.s32 %s15, 1
    %s23 = ssub.s32 %s15, %s22
    %p24 = scmp.eq.s32.totalorder %s23, 0
    %s26 = sadd.s32 %s25, 1
    %s27 = scalar_select %p24, %s25, %s26
    %p30 = pneg %p24
    %p31 = scmp.eq.s32.totalorder %s15, 1
    %p32 = por %p30, %p31
    %p33 = scmp.ne.s32.totalorder %s25, %s28
    %p34 = scmp.eq.s32.totalorder %s15, 0
    %p35 = por %p33, %p34
    %p36 = scmp.ne.s32.totalorder %s25, %s28
    %p37 = scmp.eq.s32.totalorder %s20, 1
    %p38 = por %p36, %p37
    %p39 = scmp.ne.s32.totalorder %s28, %s29
    %p40 = scmp.eq.s32.totalorder %s20, 0
    %p41 = por %p39, %p40
    %p42 = scmp.ne.s32.totalorder %s28, %s29
    %p43 = scmp.eq.s32.totalorder %s21, 1
    %p44 = por %p42, %p43
    %p46 = scmp.ne.s32.totalorder %s29, %s45
    %p47 = scmp.eq.s32.totalorder %s21, 0
    %p48 = por %p46, %p47
    %s50 = sadd.s32 %s49, 1
    %p53 = scmp.eq.s32.totalorder %s15, 1
    %p54 = scmp.ne.s32.totalorder %s49, %s51
    %p55 = scmp.eq.s32.totalorder %s15, 0
    %p56 = por %p54, %p55
    %p57 = scmp.ne.s32.totalorder %s49, %s51
    %p58 = scmp.eq.s32.totalorder %s20, 1
    %p59 = por %p57, %p58
    %p60 = scmp.ne.s32.totalorder %s51, %s52
    %p61 = scmp.eq.s32.totalorder %s20, 0
    %p62 = por %p60, %p61
    %p63 = scmp.ne.s32.totalorder %s51, %s52
    %p64 = scmp.eq.s32.totalorder %s21, 1
    %p65 = por %p63, %p64
    %p67 = scmp.ne.s32.totalorder %s52, %s66
    %p68 = scmp.eq.s32.totalorder %s21, 0
    %p69 = por %p67, %p68
    %s71 = sadd.s32 %s70, 1
    %p74 = scmp.eq.s32.totalorder %s15, 1
    %p75 = scmp.ne.s32.totalorder %s70, %s72
    %p76 = scmp.eq.s32.totalorder %s15, 0
    %p77 = por %p75, %p76
    %p78 = scmp.ne.s32.totalorder %s70, %s72
    %p79 = scmp.eq.s32.totalorder %s20, 1
    %p80 = por %p78, %p79
    %p81 = scmp.ne.s32.totalorder %s72, %s73
    %p82 = scmp.eq.s32.totalorder %s20, 0
    %p83 = por %p81, %p82
    %p84 = scmp.ne.s32.totalorder %s72, %s73
    %p85 = scmp.eq.s32.totalorder %s21, 1
    %p86 = por %p84, %p85
    %p88 = scmp.ne.s32.totalorder %s73, %s87
    %p89 = scmp.eq.s32.totalorder %s21, 0
    %p90 = por %p88, %p89
    %s92 = sadd.s32 %s91, 1
    %p95 = scmp.eq.s32.totalorder %s15, 1
    %p96 = scmp.ne.s32.totalorder %s91, %s93
    %p97 = scmp.eq.s32.totalorder %s15, 0
    %p98 = por %p96, %p97
    %p99 = scmp.ne.s32.totalorder %s91, %s93
    %p100 = scmp.eq.s32.totalorder %s20, 1
    %p101 = por %p99, %p100
    %p102 = scmp.ne.s32.totalorder %s93, %s94
    %p103 = scmp.eq.s32.totalorder %s20, 0
    %p104 = por %p102, %p103
    %p105 = scmp.ne.s32.totalorder %s93, %s94
    %p106 = scmp.eq.s32.totalorder %s21, 1
    %p107 = por %p105, %p106
    %p109 = scmp.ne.s32.totalorder %s94, %s108
    %p110 = scmp.eq.s32.totalorder %s21, 0
    %p111 = por %p109, %p110
    %s113 = sadd.s32 %s112, 1
    %p116 = scmp.eq.s32.totalorder %s15, 1
    %p117 = scmp.ne.s32.totalorder %s112, %s114
    %p118 = scmp.eq.s32.totalorder %s15, 0
    %p119 = por %p117, %p118
    %p120 = scmp.ne.s32.totalorder %s112, %s114
    %p121 = scmp.eq.s32.totalorder %s20, 1
    %p122 = por %p120, %p121
    %p123 = scmp.ne.s32.totalorder %s114, %s115
    %p124 = scmp.eq.s32.totalorder %s20, 0
    %p125 = por %p123, %p124
    %p126 = scmp.ne.s32.totalorder %s114, %s115
    %p127 = scmp.eq.s32.totalorder %s21, 1
    %p128 = por %p126, %p127
    %p130 = scmp.ne.s32.totalorder %s115, %s129
    %p131 = scmp.eq.s32.totalorder %s21, 0
    %p132 = por %p130, %p131
    %s134 = sadd.s32 %s133, 1
    %p137 = scmp.eq.s32.totalorder %s15, 1
    %p138 = scmp.ne.s32.totalorder %s133, %s135
    %p139 = scmp.eq.s32.totalorder %s15, 0
    %p140 = por %p138, %p139
    %p141 = scmp.ne.s32.totalorder %s133, %s135
    %p142 = scmp.eq.s32.totalorder %s20, 1
    %p143 = por %p141, %p142
    %p144 = scmp.ne.s32.totalorder %s135, %s136
    %p145 = scmp.eq.s32.totalorder %s20, 0
    %p146 = por %p144, %p145
    %p147 = scmp.ne.s32.totalorder %s135, %s136
    %p148 = scmp.eq.s32.totalorder %s21, 1
    %p149 = por %p147, %p148
    %p151 = scmp.ne.s32.totalorder %s136, %s150
    %p152 = scmp.eq.s32.totalorder %s21, 0
    %p153 = por %p151, %p152
    %s155 = sadd.s32 %s154, 1
    %p158 = scmp.eq.s32.totalorder %s15, 1
    %p159 = scmp.ne.s32.totalorder %s154, %s156
    %p160 = scmp.eq.s32.totalorder %s15, 0
    %p161 = por %p159, %p160
    %p162 = scmp.ne.s32.totalorder %s154, %s156
    %p163 = scmp.eq.s32.totalorder %s20, 1
    %p164 = por %p162, %p163
    %p165 = scmp.ne.s32.totalorder %s156, %s157
    %p166 = scmp.eq.s32.totalorder %s20, 0
    %p167 = por %p165, %p166
    %p168 = scmp.ne.s32.totalorder %s156, %s157
    %p169 = scmp.eq.s32.totalorder %s21, 1
    %p170 = por %p168, %p169
    %p172 = scmp.ne.s32.totalorder %s157, %s171
    %p173 = scmp.eq.s32.totalorder %s21, 0
    %p174 = por %p172, %p173
    %s176 = sadd.s32 %s175, 1
    %p179 = scmp.eq.s32.totalorder %s15, 1
    %p180 = scmp.ne.s32.totalorder %s175, %s177
    %p181 = scmp.eq.s32.totalorder %s15, 0
    %p182 = por %p180, %p181
    %p183 = scmp.ne.s32.totalorder %s175, %s177
    %p184 = scmp.eq.s32.totalorder %s20, 1
    %p185 = por %p183, %p184
    %p186 = scmp.ne.s32.totalorder %s177, %s178
    %p187 = scmp.eq.s32.totalorder %s20, 0
    %p188 = por %p186, %p187
    %p189 = scmp.ne.s32.totalorder %s177, %s178
    %p190 = scmp.eq.s32.totalorder %s21, 1
    %p191 = por %p189, %p190
    %p193 = scmp.ne.s32.totalorder %s178, %s192
    %p194 = scmp.eq.s32.totalorder %s21, 0
    %p195 = por %p193, %p194
    %s197 = sadd.s32 %s196, 1
    %p200 = scmp.eq.s32.totalorder %s15, 1
    %p201 = scmp.ne.s32.totalorder %s196, %s198
    %p202 = scmp.eq.s32.totalorder %s15, 0
    %p203 = por %p201, %p202
    %p204 = scmp.ne.s32.totalorder %s196, %s198
    %p205 = scmp.eq.s32.totalorder %s20, 1
    %p206 = por %p204, %p205
    %p207 = scmp.ne.s32.totalorder %s198, %s199
    %p208 = scmp.eq.s32.totalorder %s20, 0
    %p209 = por %p207, %p208
    %p210 = scmp.ne.s32.totalorder %s198, %s199
    %p211 = scmp.eq.s32.totalorder %s21, 1
    %p212 = por %p210, %p211
    %p214 = scmp.ne.s32.totalorder %s199, %s213
    %p215 = scmp.eq.s32.totalorder %s21, 0
    %p216 = por %p214, %p215
    %s217 = ssub.s32 %s15, %s22
    %p218 = scmp.eq.s32.totalorder %s217, 0
    %s220 = sadd.s32 %s219, 1
    %s221 = scalar_select %p218, %s219, %s220
    %p224 = pneg %p218
    %p225 = scmp.eq.s32.totalorder %s15, 1
    %p226 = por %p224, %p225
    %p227 = scmp.ne.s32.totalorder %s219, %s222
    %p228 = scmp.eq.s32.totalorder %s15, 0
    %p229 = por %p227, %p228
    %p230 = scmp.ne.s32.totalorder %s219, %s222
    %p231 = scmp.eq.s32.totalorder %s20, 1
    %p232 = por %p230, %p231
    %p233 = scmp.ne.s32.totalorder %s222, %s223
    %p234 = scmp.eq.s32.totalorder %s20, 0
    %p235 = por %p233, %p234
    %p236 = scmp.ne.s32.totalorder %s222, %s223
    %p237 = scmp.eq.s32.totalorder %s21, 1
    %p238 = por %p236, %p237
    %p240 = scmp.ne.s32.totalorder %s223, %s239
    %p241 = scmp.eq.s32.totalorder %s21, 0
    %p242 = por %p240, %p241
    %p243 = scmp.le.s32.totalorder 1, %s15
    %p244 = scmp.lt.s32.totalorder %s15, 3
    %p245 = pnand %p243, %p244
    %p246 = pneg %p245
    // Predicated region
    $region9: #{rcab_forward.1} parent=5 // pred_check
      _
    $region10: #{rcab_forward.1} parent=5 // pred_check_branch
      %248 = sbr.rel (%p245) target = $region12
    $region11: #{rcab_forward.1} parent=5 // pred_region
      %s249 = ssub.s32 %s15, 1
      // Predicated region
      $region13: #{rcab_forward.1} parent=11 // pred_check
        %p250 = pneg %p62
      $region14: #{rcab_forward.1} parent=11 // pred_check_branch
        %252 = sbr.rel (%p250) target = $region16
      $region15: #{rcab_forward.1} parent=11 // pred_region
        _
      $region16: #{rcab_forward.1} parent=11 // pred_fallthru
        _
      // Predicated region
      $region17: #{rcab_forward.1} parent=11 // pred_check
        %p253 = pneg %p83
      $region18: #{rcab_forward.1} parent=11 // pred_check_branch
        %255 = sbr.rel (%p253) target = $region20
      $region19: #{rcab_forward.1} parent=11 // pred_region
        _
      $region20: #{rcab_forward.1} parent=11 // pred_fallthru
        _
      // Predicated region
      $region21: #{rcab_forward.1} parent=11 // pred_check
        %p256 = pneg %p104
      $region22: #{rcab_forward.1} parent=11 // pred_check_branch
        %258 = sbr.rel (%p256) target = $region24
      $region23: #{rcab_forward.1} parent=11 // pred_region
        _
      $region24: #{rcab_forward.1} parent=11 // pred_fallthru
        _
      // Predicated region
      $region25: #{rcab_forward.1} parent=11 // pred_check
        %p259 = pneg %p125
      $region26: #{rcab_forward.1} parent=11 // pred_check_branch
        %261 = sbr.rel (%p259) target = $region28
      $region27: #{rcab_forward.1} parent=11 // pred_region
        _
      $region28: #{rcab_forward.1} parent=11 // pred_fallthru
        _
      // Predicated region
      $region29: #{rcab_forward.1} parent=11 // pred_check
        %p262 = pneg %p146
      $region30: #{rcab_forward.1} parent=11 // pred_check_branch
        %264 = sbr.rel (%p262) target = $region32
      $region31: #{rcab_forward.1} parent=11 // pred_region
        _
      $region32: #{rcab_forward.1} parent=11 // pred_fallthru
        _
      // Predicated region
      $region33: #{rcab_forward.1} parent=11 // pred_check
        %p265 = pneg %p167
      $region34: #{rcab_forward.1} parent=11 // pred_check_branch
        %267 = sbr.rel (%p265) target = $region36
      $region35: #{rcab_forward.1} parent=11 // pred_region
        _
      $region36: #{rcab_forward.1} parent=11 // pred_fallthru
        _
      // Predicated region
      $region37: #{rcab_forward.1} parent=11 // pred_check
        %p268 = pneg %p188
      $region38: #{rcab_forward.1} parent=11 // pred_check_branch
        %270 = sbr.rel (%p268) target = $region40
      $region39: #{rcab_forward.1} parent=11 // pred_region
        _
      $region40: #{rcab_forward.1} parent=11 // pred_fallthru
        _
      // Predicated region
      $region41: #{rcab_forward.1} parent=11 // pred_check
        %p271 = pneg %p209
      $region42: #{rcab_forward.1} parent=11 // pred_check_branch
        %273 = sbr.rel (%p271) target = $region44
      $region43: #{rcab_forward.1} parent=11 // pred_region
        _
      $region44: #{rcab_forward.1} parent=11 // pred_fallthru
        _
    $region12: #{rcab_forward.1} parent=5 // pred_fallthru
      _
    %p274 = scmp.lt.s32.totalorder %s15, 2
    // Predicated region
    $region45: #{rcab_forward.1} parent=5 // pred_check
      %p275 = pneg %p274
    $region46: #{rcab_forward.1} parent=5 // pred_check_branch
      %277 = sbr.rel (%p275) target = $region48
    $region47: #{rcab_forward.1} parent=5 // pred_region
      // Predicated region
      $region49: #{rcab_forward.1} parent=47 // pred_check
        %p278 = pneg %p35
      $region50: #{rcab_forward.1} parent=47 // pred_check_branch
        %280 = sbr.rel (%p278) target = $region52
      $region51: #{rcab_forward.1} parent=47 // pred_region
        %p281 = scmp.lt.s32.totalorder %s15, 1
        %s282 = scalar_select %p281, %s15, 1
        %s283 = smul.addr %s282, 4
        %s284 = smul.addr %s283, 8
        %s285 = scalar_lea.vmem %s0, %s284
      $region52: #{rcab_forward.1} parent=47 // pred_fallthru
        _
    $region48: #{rcab_forward.1} parent=5 // pred_fallthru
      _
    %p286 = scmp.le.s32.totalorder 1, %s15
    %p287 = scmp.lt.s32.totalorder %s15, 3
    %p288 = pnand %p286, %p287
    %p289 = pneg %p288
    // Predicated region
    $region53: #{rcab_forward.1} parent=5 // pred_check
      _
    $region54: #{rcab_forward.1} parent=5 // pred_check_branch
      %291 = sbr.rel (%p288) target = $region56
    $region55: #{rcab_forward.1} parent=5 // pred_region
      %s292 = ssub.s32 %s15, 1
      %p293 = scmp.lt.s32.totalorder %s20, 1
      %s294 = scalar_select %p293, %s20, 1
      %s295 = smul.addr %s294, 4
      %s296 = smul.addr %s295, 8
      %s297 = scalar_lea.vmem %s0, %s296
      %p298 = pneg %p41
      %p299 = pneg %p38
      %p300 = pneg %p62
      %p301 = pneg %p59
      %p302 = pneg %p83
      %p303 = pneg %p80
      %p304 = pneg %p104
      %p305 = pneg %p101
      %p306 = pneg %p125
      %p307 = pneg %p122
      %p308 = pneg %p146
      %p309 = pneg %p143
      %p310 = pneg %p167
      %p311 = pneg %p164
      %p312 = pneg %p188
      %p313 = pneg %p185
      %p314 = pneg %p209
      %p315 = pneg %p206
      %p316 = pneg %p235
      %p317 = pneg %p232
      %p318 = scmp.lt.s32.totalorder %s20, 1
      %s319 = scalar_select %p318, %s20, 1
      %s320 = smul.addr %s319, 4
      %s321 = smul.addr %s320, 8
      %s322 = scalar_lea.vmem %s9, %s321
      %p323 = scmp.lt.s32.totalorder %s20, 1
      %s324 = scalar_select %p323, %s20, 1
      %s325 = smul.addr %s324, 4
      %s326 = smul.addr %s325, 8
      %s327 = scalar_lea.vmem %s0, %s326
      %p328 = scmp.lt.s32.totalorder %s20, 1
      %s329 = scalar_select %p328, %s20, 1
      %s330 = smul.addr %s329, 4
      %s331 = smul.addr %s330, 8
      %s332 = scalar_lea.vmem %s9, %s331
      %vm333 = vcmask 130048
      %334 = vst.msk [vmem:[#allocation2] sm:$0xff] %vm333, 0.0
      %335 = vst.msk [vmem:[#allocation2 + $0x8] sm:$0xff] %vm333, 0.0
      %vm336 = vcmask 123904
      %337 = vst.msk [vmem:[#allocation2 + $0x10] sm:$0x3] %vm336, 0.0
      %s338 = scalar_lea.vmem [#allocation2], 408
      %339 = vst.msk [vmem:[%s338] sm:$0xff] %vm333, 0.0
      %340 = vst.msk [vmem:[%s338 + $0x8] sm:$0xff] %vm333, 0.0
      %341 = vst.msk [vmem:[%s338 + $0x10] sm:$0x3] %vm336, 0.0
      %vm342 = vcmask 122880
      %343 = vst.msk [vmem:[#allocation2] sm:$0x1] %vm342, 0.0
      %344 = vst.msk [vmem:[#allocation2 + $0x18] sm:$0x1] %vm342, 0.0
      %345 = vst.msk [vmem:[#allocation2 + $0x30] sm:$0x1] %vm342, 0.0
      %346 = vst.msk [vmem:[#allocation2 + $0x48] sm:$0x1] %vm342, 0.0
      %347 = vst.msk [vmem:[#allocation2 + $0x60] sm:$0x1] %vm342, 0.0
      %348 = vst.msk [vmem:[#allocation2 + $0x78] sm:$0x1] %vm342, 0.0
      %349 = vst.msk [vmem:[#allocation2 + $0x90] sm:$0x1] %vm342, 0.0
      %350 = vst.msk [vmem:[#allocation2 + $0xa8] sm:$0x1] %vm342, 0.0
      %351 = vst.msk [vmem:[#allocation2 + $0xc0] sm:$0x1] %vm342, 0.0
      %352 = vst.msk [vmem:[#allocation2 + $0xd8] sm:$0x1] %vm342, 0.0
      %353 = vst.msk [vmem:[#allocation2 + $0xf0] sm:$0x1] %vm342, 0.0
      %354 = vst.msk [vmem:[#allocation2 + $0x108] sm:$0x1] %vm342, 0.0
      %355 = vst.msk [vmem:[#allocation2 + $0x120] sm:$0x1] %vm342, 0.0
      %356 = vst.msk [vmem:[#allocation2 + $0x138] sm:$0x1] %vm342, 0.0
      %357 = vst.msk [vmem:[#allocation2 + $0x150] sm:$0x1] %vm342, 0.0
      %358 = vst.msk [vmem:[#allocation2 + $0x168] sm:$0x1] %vm342, 0.0
      %359 = vst.msk [vmem:[#allocation2 + $0x180] sm:$0x1] %vm342, 0.0
      %360 = vst.msk [vmem:[#allocation2 + $0x198] sm:$0x1] %vm342, 0.0
      %361 = vst.msk [vmem:[#allocation2 + $0x11] sm:$0x1] %vm342, 0.0
      %362 = vst.msk [vmem:[#allocation2 + $0x29] sm:$0x1] %vm342, 0.0
      %363 = vst.msk [vmem:[#allocation2 + $0x41] sm:$0x1] %vm342, 0.0
      %364 = vst.msk [vmem:[#allocation2 + $0x59] sm:$0x1] %vm342, 0.0
      %365 = vst.msk [vmem:[#allocation2 + $0x71] sm:$0x1] %vm342, 0.0
      %366 = vst.msk [vmem:[#allocation2 + $0x89] sm:$0x1] %vm342, 0.0
      %367 = vst.msk [vmem:[#allocation2 + $0xa1] sm:$0x1] %vm342, 0.0
      %368 = vst.msk [vmem:[#allocation2 + $0xb9] sm:$0x1] %vm342, 0.0
      %369 = vst.msk [vmem:[#allocation2 + $0xd1] sm:$0x1] %vm342, 0.0
      %370 = vst.msk [vmem:[#allocation2 + $0xe9] sm:$0x1] %vm342, 0.0
      %371 = vst.msk [vmem:[#allocation2 + $0x101] sm:$0x1] %vm342, 0.0
      %372 = vst.msk [vmem:[#allocation2 + $0x119] sm:$0x1] %vm342, 0.0
      %373 = vst.msk [vmem:[#allocation2 + $0x131] sm:$0x1] %vm342, 0.0
      %374 = vst.msk [vmem:[#allocation2 + $0x149] sm:$0x1] %vm342, 0.0
      %375 = vst.msk [vmem:[#allocation2 + $0x161] sm:$0x1] %vm342, 0.0
      %376 = vst.msk [vmem:[#allocation2 + $0x179] sm:$0x1] %vm342, 0.0
      %377 = vst.msk [vmem:[#allocation2 + $0x191] sm:$0x1] %vm342, 0.0
      %378 = vst.msk [vmem:[#allocation2 + $0x1a9] sm:$0x1] %vm342, 0.0
      %v379 = vld [vmem:[%s327] sm:$0xff]
      %v380 = vld [vmem:[%s327 + $0x8] sm:$0xff]
      %v381 = vld [vmem:[%s327 + $0x10] sm:$0xff]
      %v382 = vld [vmem:[%s327 + $0x18] sm:$0xff]
      %385 = vrot.lane.b32.xlu0 %v379, 112
      %v386 = vpop.permute.xlu0 %385
      %387 = vrot.lane.b32.xlu0 %v381, 112
      %v388 = vpop.permute.xlu0 %387
      %391 = vrot.lane.b32.xlu0 %v379, 96
      %v392 = vpop.permute.xlu0 %391
      %393 = vrot.lane.b32.xlu0 %v381, 96
      %v394 = vpop.permute.xlu0 %393
      %397 = vrot.lane.b32.xlu0 %v379, 80
      %v398 = vpop.permute.xlu0 %397
      %399 = vrot.lane.b32.xlu0 %v381, 80
      %v400 = vpop.permute.xlu0 %399
      %403 = vrot.lane.b32.xlu0 %v379, 64
      %v404 = vpop.permute.xlu0 %403
      %405 = vrot.lane.b32.xlu0 %v381, 64
      %v406 = vpop.permute.xlu0 %405
      %409 = vrot.lane.b32.xlu0 %v379, 48
      %v410 = vpop.permute.xlu0 %409
      %411 = vrot.lane.b32.xlu0 %v381, 48
      %v412 = vpop.permute.xlu0 %411
      %415 = vrot.lane.b32.xlu0 %v379, 32
      %v416 = vpop.permute.xlu0 %415
      %417 = vrot.lane.b32.xlu0 %v381, 32
      %v418 = vpop.permute.xlu0 %417
      %421 = vrot.lane.b32.xlu0 %v379, 16
      %v422 = vpop.permute.xlu0 %421
      %423 = vrot.lane.b32.xlu0 %v381, 16
      %v424 = vpop.permute.xlu0 %423
      %429 = vrot.lane.b32.xlu0 %v380, 112
      %v430 = vpop.permute.xlu0 %429
      %431 = vrot.lane.b32.xlu0 %v382, 112
      %v432 = vpop.permute.xlu0 %431
      %435 = vrot.lane.b32.xlu0 %v380, 96
      %v436 = vpop.permute.xlu0 %435
      %437 = vrot.lane.b32.xlu0 %v382, 96
      %v438 = vpop.permute.xlu0 %437
      %441 = vrot.lane.b32.xlu0 %v380, 80
      %v442 = vpop.permute.xlu0 %441
      %443 = vrot.lane.b32.xlu0 %v382, 80
      %v444 = vpop.permute.xlu0 %443
      %447 = vrot.lane.b32.xlu0 %v380, 64
      %v448 = vpop.permute.xlu0 %447
      %449 = vrot.lane.b32.xlu0 %v382, 64
      %v450 = vpop.permute.xlu0 %449
      %453 = vrot.lane.b32.xlu0 %v380, 48
      %v454 = vpop.permute.xlu0 %453
      %455 = vrot.lane.b32.xlu0 %v382, 48
      %v456 = vpop.permute.xlu0 %455
      %459 = vrot.lane.b32.xlu0 %v380, 32
      %v460 = vpop.permute.xlu0 %459
      %461 = vrot.lane.b32.xlu0 %v382, 32
      %v462 = vpop.permute.xlu0 %461
      %465 = vrot.lane.b32.xlu0 %v380, 16
      %v466 = vpop.permute.xlu0 %465
      %467 = vrot.lane.b32.xlu0 %v382, 16
      %v468 = vpop.permute.xlu0 %467
      %v471 = vcombine.low %v379, %v392
      %v472 = vcombine.high %v379, %v392
      %v474 = vunpack.c.l.s4 1983009808
      %v475 = vunpack.c.0.s8 %v474
      %v476 = vlaneseq
      %v477 = vshrl.u32 %v476, 7
      %v478 = vsub.s32 %v475, %v477
      %v479 = vrot.slane %v471, %v478
      %v481 = vunpack.c.l.s4 1983009808
      %v482 = vunpack.c.0.s8 %v481
      %v483 = vlaneseq
      %v484 = vshrl.u32 %v483, 7
      %v485 = vsub.s32 %v482, %v484
      %v486 = vrot.slane %v472, %v485
      %v487 = vcombine.low %v386, %v398
      %v488 = vcombine.high %v386, %v398
      %v490 = vunpack.c.l.s4 1983009808
      %v491 = vunpack.c.0.s8 %v490
      %v492 = vlaneseq
      %v493 = vshrl.u32 %v492, 7
      %v494 = vsub.s32 %v491, %v493
      %v495 = vrot.slane %v487, %v494
      %v497 = vunpack.c.l.s4 1983009808
      %v498 = vunpack.c.0.s8 %v497
      %v499 = vlaneseq
      %v500 = vshrl.u32 %v499, 7
      %v501 = vsub.s32 %v498, %v500
      %v502 = vrot.slane %v488, %v501
      %v503 = vcombine.low %v404, %v416
      %v504 = vcombine.high %v404, %v416
      %v506 = vunpack.c.l.s4 1983009808
      %v507 = vunpack.c.0.s8 %v506
      %v508 = vlaneseq
      %v509 = vshrl.u32 %v508, 7
      %v510 = vsub.s32 %v507, %v509
      %v511 = vrot.slane %v503, %v510
      %v513 = vunpack.c.l.s4 1983009808
      %v514 = vunpack.c.0.s8 %v513
      %v515 = vlaneseq
      %v516 = vshrl.u32 %v515, 7
      %v517 = vsub.s32 %v514, %v516
      %v518 = vrot.slane %v504, %v517
      %v519 = vcombine.low %v410, %v422
      %v520 = vcombine.high %v410, %v422
      %v522 = vunpack.c.l.s4 1983009808
      %v523 = vunpack.c.0.s8 %v522
      %v524 = vlaneseq
      %v525 = vshrl.u32 %v524, 7
      %v526 = vsub.s32 %v523, %v525
      %v527 = vrot.slane %v519, %v526
      %v529 = vunpack.c.l.s4 1983009808
      %v530 = vunpack.c.0.s8 %v529
      %v531 = vlaneseq
      %v532 = vshrl.u32 %v531, 7
      %v533 = vsub.s32 %v530, %v532
      %v534 = vrot.slane %v520, %v533
      %v535 = vcombine.low %v479, %v495
      %v536 = vcombine.high %v479, %v495
      %v538 = vunpack.c.l.s4 1934713408
      %v539 = vunpack.c.0.s8 %v538
      %v540 = vlaneseq
      %v541 = vshrl.u32 %v540, 7
      %v542 = vsub.s32 %v539, %v541
      %v543 = vrot.slane %v535, %v542
      %v545 = vunpack.c.l.s4 1934713408
      %v546 = vunpack.c.0.s8 %v545
      %v547 = vlaneseq
      %v548 = vshrl.u32 %v547, 7
      %v549 = vsub.s32 %v546, %v548
      %v550 = vrot.slane %v536, %v549
      %v551 = vcombine.low %v486, %v502
      %v552 = vcombine.high %v486, %v502
      %v554 = vunpack.c.l.s4 1934713408
      %v555 = vunpack.c.0.s8 %v554
      %v556 = vlaneseq
      %v557 = vshrl.u32 %v556, 7
      %v558 = vsub.s32 %v555, %v557
      %v559 = vrot.slane %v551, %v558
      %v561 = vunpack.c.l.s4 1934713408
      %v562 = vunpack.c.0.s8 %v561
      %v563 = vlaneseq
      %v564 = vshrl.u32 %v563, 7
      %v565 = vsub.s32 %v562, %v564
      %v566 = vrot.slane %v552, %v565
      %v567 = vcombine.low %v511, %v527
      %v568 = vcombine.high %v511, %v527
      %v570 = vunpack.c.l.s4 1934713408
      %v571 = vunpack.c.0.s8 %v570
      %v572 = vlaneseq
      %v573 = vshrl.u32 %v572, 7
      %v574 = vsub.s32 %v571, %v573
      %v575 = vrot.slane %v567, %v574
      %v577 = vunpack.c.l.s4 1934713408
      %v578 = vunpack.c.0.s8 %v577
      %v579 = vlaneseq
      %v580 = vshrl.u32 %v579, 7
      %v581 = vsub.s32 %v578, %v580
      %v582 = vrot.slane %v568, %v581
      %v583 = vcombine.low %v518, %v534
      %v584 = vcombine.high %v518, %v534
      %v586 = vunpack.c.l.s4 1934713408
      %v587 = vunpack.c.0.s8 %v586
      %v588 = vlaneseq
      %v589 = vshrl.u32 %v588, 7
      %v590 = vsub.s32 %v587, %v589
      %v591 = vrot.slane %v583, %v590
      %v593 = vunpack.c.l.s4 1934713408
      %v594 = vunpack.c.0.s8 %v593
      %v595 = vlaneseq
      %v596 = vshrl.u32 %v595, 7
      %v597 = vsub.s32 %v594, %v596
      %v598 = vrot.slane %v584, %v597
      %v599 = vcombine.low %v543, %v575
      %v600 = vcombine.high %v543, %v575
      %v601 = vcombine.low %v550, %v582
      %v602 = vcombine.high %v550, %v582
      %v603 = vcombine.low %v559, %v591
      %v604 = vcombine.high %v559, %v591
      %v605 = vcombine.low %v566, %v598
      %v606 = vcombine.high %v566, %v598
      %v607 = vcombine.low %v380, %v436
      %v608 = vcombine.high %v380, %v436
      %v610 = vunpack.c.l.s4 1983009808
      %v611 = vunpack.c.0.s8 %v610
      %v612 = vlaneseq
      %v613 = vshrl.u32 %v612, 7
      %v614 = vsub.s32 %v611, %v613
      %v615 = vrot.slane %v607, %v614
      %v617 = vunpack.c.l.s4 1983009808
      %v618 = vunpack.c.0.s8 %v617
      %v619 = vlaneseq
      %v620 = vshrl.u32 %v619, 7
      %v621 = vsub.s32 %v618, %v620
      %v622 = vrot.slane %v608, %v621
      %v623 = vcombine.low %v430, %v442
      %v624 = vcombine.high %v430, %v442
      %v626 = vunpack.c.l.s4 1983009808
      %v627 = vunpack.c.0.s8 %v626
      %v628 = vlaneseq
      %v629 = vshrl.u32 %v628, 7
      %v630 = vsub.s32 %v627, %v629
      %v631 = vrot.slane %v623, %v630
      %v633 = vunpack.c.l.s4 1983009808
      %v634 = vunpack.c.0.s8 %v633
      %v635 = vlaneseq
      %v636 = vshrl.u32 %v635, 7
      %v637 = vsub.s32 %v634, %v636
      %v638 = vrot.slane %v624, %v637
      %v639 = vcombine.low %v448, %v460
      %v640 = vcombine.high %v448, %v460
      %v642 = vunpack.c.l.s4 1983009808
      %v643 = vunpack.c.0.s8 %v642
      %v644 = vlaneseq
      %v645 = vshrl.u32 %v644, 7
      %v646 = vsub.s32 %v643, %v645
      %v647 = vrot.slane %v639, %v646
      %v649 = vunpack.c.l.s4 1983009808
      %v650 = vunpack.c.0.s8 %v649
      %v651 = vlaneseq
      %v652 = vshrl.u32 %v651, 7
      %v653 = vsub.s32 %v650, %v652
      %v654 = vrot.slane %v640, %v653
      %v655 = vcombine.low %v454, %v466
      %v656 = vcombine.high %v454, %v466
      %v658 = vunpack.c.l.s4 1983009808
      %v659 = vunpack.c.0.s8 %v658
      %v660 = vlaneseq
      %v661 = vshrl.u32 %v660, 7
      %v662 = vsub.s32 %v659, %v661
      %v663 = vrot.slane %v655, %v662
      %v665 = vunpack.c.l.s4 1983009808
      %v666 = vunpack.c.0.s8 %v665
      %v667 = vlaneseq
      %v668 = vshrl.u32 %v667, 7
      %v669 = vsub.s32 %v666, %v668
      %v670 = vrot.slane %v656, %v669
      %v671 = vcombine.low %v615, %v631
      %v672 = vcombine.high %v615, %v631
      %v674 = vunpack.c.l.s4 1934713408
      %v675 = vunpack.c.0.s8 %v674
      %v676 = vlaneseq
      %v677 = vshrl.u32 %v676, 7
      %v678 = vsub.s32 %v675, %v677
      %v679 = vrot.slane %v671, %v678
      %v681 = vunpack.c.l.s4 1934713408
      %v682 = vunpack.c.0.s8 %v681
      %v683 = vlaneseq
      %v684 = vshrl.u32 %v683, 7
      %v685 = vsub.s32 %v682, %v684
      %v686 = vrot.slane %v672, %v685
      %v687 = vcombine.low %v622, %v638
      %v688 = vcombine.high %v622, %v638
      %v690 = vunpack.c.l.s4 1934713408
      %v691 = vunpack.c.0.s8 %v690
      %v692 = vlaneseq
      %v693 = vshrl.u32 %v692, 7
      %v694 = vsub.s32 %v691, %v693
      %v695 = vrot.slane %v687, %v694
      %v697 = vunpack.c.l.s4 1934713408
      %v698 = vunpack.c.0.s8 %v697
      %v699 = vlaneseq
      %v700 = vshrl.u32 %v699, 7
      %v701 = vsub.s32 %v698, %v700
      %v702 = vrot.slane %v688, %v701
      %v703 = vcombine.low %v647, %v663
      %v704 = vcombine.high %v647, %v663
      %v706 = vunpack.c.l.s4 1934713408
      %v707 = vunpack.c.0.s8 %v706
      %v708 = vlaneseq
      %v709 = vshrl.u32 %v708, 7
      %v710 = vsub.s32 %v707, %v709
      %v711 = vrot.slane %v703, %v710
      %v713 = vunpack.c.l.s4 1934713408
      %v714 = vunpack.c.0.s8 %v713
      %v715 = vlaneseq
      %v716 = vshrl.u32 %v715, 7
      %v717 = vsub.s32 %v714, %v716
      %v718 = vrot.slane %v704, %v717
      %v719 = vcombine.low %v654, %v670
      %v720 = vcombine.high %v654, %v670
      %v722 = vunpack.c.l.s4 1934713408
      %v723 = vunpack.c.0.s8 %v722
      %v724 = vlaneseq
      %v725 = vshrl.u32 %v724, 7
      %v726 = vsub.s32 %v723, %v725
      %v727 = vrot.slane %v719, %v726
      %v729 = vunpack.c.l.s4 1934713408
      %v730 = vunpack.c.0.s8 %v729
      %v731 = vlaneseq
      %v732 = vshrl.u32 %v731, 7
      %v733 = vsub.s32 %v730, %v732
      %v734 = vrot.slane %v720, %v733
      %v735 = vcombine.low %v679, %v711
      %v736 = vcombine.high %v679, %v711
      %v737 = vcombine.low %v686, %v718
      %v738 = vcombine.high %v686, %v718
      %v739 = vcombine.low %v695, %v727
      %v740 = vcombine.high %v695, %v727
      %v741 = vcombine.low %v702, %v734
      %v742 = vcombine.high %v702, %v734
      %v743 = vcombine.low %v381, %v394
      %v744 = vcombine.high %v381, %v394
      %v746 = vunpack.c.l.s4 1983009808
      %v747 = vunpack.c.0.s8 %v746
      %v748 = vlaneseq
      %v749 = vshrl.u32 %v748, 7
      %v750 = vsub.s32 %v747, %v749
      %v751 = vrot.slane %v743, %v750
      %v753 = vunpack.c.l.s4 1983009808
      %v754 = vunpack.c.0.s8 %v753
      %v755 = vlaneseq
      %v756 = vshrl.u32 %v755, 7
      %v757 = vsub.s32 %v754, %v756
      %v758 = vrot.slane %v744, %v757
      %v759 = vcombine.low %v388, %v400
      %v760 = vcombine.high %v388, %v400
      %v762 = vunpack.c.l.s4 1983009808
      %v763 = vunpack.c.0.s8 %v762
      %v764 = vlaneseq
      %v765 = vshrl.u32 %v764, 7
      %v766 = vsub.s32 %v763, %v765
      %v767 = vrot.slane %v759, %v766
      %v769 = vunpack.c.l.s4 1983009808
      %v770 = vunpack.c.0.s8 %v769
      %v771 = vlaneseq
      %v772 = vshrl.u32 %v771, 7
      %v773 = vsub.s32 %v770, %v772
      %v774 = vrot.slane %v760, %v773
      %v775 = vcombine.low %v406, %v418
      %v776 = vcombine.high %v406, %v418
      %v778 = vunpack.c.l.s4 1983009808
      %v779 = vunpack.c.0.s8 %v778
      %v780 = vlaneseq
      %v781 = vshrl.u32 %v780, 7
      %v782 = vsub.s32 %v779, %v781
      %v783 = vrot.slane %v775, %v782
      %v785 = vunpack.c.l.s4 1983009808
      %v786 = vunpack.c.0.s8 %v785
      %v787 = vlaneseq
      %v788 = vshrl.u32 %v787, 7
      %v789 = vsub.s32 %v786, %v788
      %v790 = vrot.slane %v776, %v789
      %v791 = vcombine.low %v412, %v424
      %v792 = vcombine.high %v412, %v424
      %v794 = vunpack.c.l.s4 1983009808
      %v795 = vunpack.c.0.s8 %v794
      %v796 = vlaneseq
      %v797 = vshrl.u32 %v796, 7
      %v798 = vsub.s32 %v795, %v797
      %v799 = vrot.slane %v791, %v798
      %v801 = vunpack.c.l.s4 1983009808
      %v802 = vunpack.c.0.s8 %v801
      %v803 = vlaneseq
      %v804 = vshrl.u32 %v803, 7
      %v805 = vsub.s32 %v802, %v804
      %v806 = vrot.slane %v792, %v805
      %v807 = vcombine.low %v751, %v767
      %v808 = vcombine.high %v751, %v767
      %v810 = vunpack.c.l.s4 1934713408
      %v811 = vunpack.c.0.s8 %v810
      %v812 = vlaneseq
      %v813 = vshrl.u32 %v812, 7
      %v814 = vsub.s32 %v811, %v813
      %v815 = vrot.slane %v807, %v814
      %v817 = vunpack.c.l.s4 1934713408
      %v818 = vunpack.c.0.s8 %v817
      %v819 = vlaneseq
      %v820 = vshrl.u32 %v819, 7
      %v821 = vsub.s32 %v818, %v820
      %v822 = vrot.slane %v808, %v821
      %v823 = vcombine.low %v758, %v774
      %v824 = vcombine.high %v758, %v774
      %v826 = vunpack.c.l.s4 1934713408
      %v827 = vunpack.c.0.s8 %v826
      %v828 = vlaneseq
      %v829 = vshrl.u32 %v828, 7
      %v830 = vsub.s32 %v827, %v829
      %v831 = vrot.slane %v823, %v830
      %v833 = vunpack.c.l.s4 1934713408
      %v834 = vunpack.c.0.s8 %v833
      %v835 = vlaneseq
      %v836 = vshrl.u32 %v835, 7
      %v837 = vsub.s32 %v834, %v836
      %v838 = vrot.slane %v824, %v837
      %v839 = vcombine.low %v783, %v799
      %v840 = vcombine.high %v783, %v799
      %v842 = vunpack.c.l.s4 1934713408
      %v843 = vunpack.c.0.s8 %v842
      %v844 = vlaneseq
      %v845 = vshrl.u32 %v844, 7
      %v846 = vsub.s32 %v843, %v845
      %v847 = vrot.slane %v839, %v846
      %v849 = vunpack.c.l.s4 1934713408
      %v850 = vunpack.c.0.s8 %v849
      %v851 = vlaneseq
      %v852 = vshrl.u32 %v851, 7
      %v853 = vsub.s32 %v850, %v852
      %v854 = vrot.slane %v840, %v853
      %v855 = vcombine.low %v790, %v806
      %v856 = vcombine.high %v790, %v806
      %v858 = vunpack.c.l.s4 1934713408
      %v859 = vunpack.c.0.s8 %v858
      %v860 = vlaneseq
      %v861 = vshrl.u32 %v860, 7
      %v862 = vsub.s32 %v859, %v861
      %v863 = vrot.slane %v855, %v862
      %v865 = vunpack.c.l.s4 1934713408
      %v866 = vunpack.c.0.s8 %v865
      %v867 = vlaneseq
      %v868 = vshrl.u32 %v867, 7
      %v869 = vsub.s32 %v866, %v868
      %v870 = vrot.slane %v856, %v869
      %v871 = vcombine.low %v815, %v847
      %v872 = vcombine.high %v815, %v847
      %v873 = vcombine.low %v822, %v854
      %v874 = vcombine.high %v822, %v854
      %v875 = vcombine.low %v831, %v863
      %v876 = vcombine.high %v831, %v863
      %v877 = vcombine.low %v838, %v870
      %v878 = vcombine.high %v838, %v870
      %v879 = vcombine.low %v382, %v438
      %v880 = vcombine.high %v382, %v438
      %v882 = vunpack.c.l.s4 1983009808
      %v883 = vunpack.c.0.s8 %v882
      %v884 = vlaneseq
      %v885 = vshrl.u32 %v884, 7
      %v886 = vsub.s32 %v883, %v885
      %v887 = vrot.slane %v879, %v886
      %v889 = vunpack.c.l.s4 1983009808
      %v890 = vunpack.c.0.s8 %v889
      %v891 = vlaneseq
      %v892 = vshrl.u32 %v891, 7
      %v893 = vsub.s32 %v890, %v892
      %v894 = vrot.slane %v880, %v893
      %v895 = vcombine.low %v432, %v444
      %v896 = vcombine.high %v432, %v444
      %v898 = vunpack.c.l.s4 1983009808
      %v899 = vunpack.c.0.s8 %v898
      %v900 = vlaneseq
      %v901 = vshrl.u32 %v900, 7
      %v902 = vsub.s32 %v899, %v901
      %v903 = vrot.slane %v895, %v902
      %v905 = vunpack.c.l.s4 1983009808
      %v906 = vunpack.c.0.s8 %v905
      %v907 = vlaneseq
      %v908 = vshrl.u32 %v907, 7
      %v909 = vsub.s32 %v906, %v908
      %v910 = vrot.slane %v896, %v909
      %v911 = vcombine.low %v450, %v462
      %v912 = vcombine.high %v450, %v462
      %v914 = vunpack.c.l.s4 1983009808
      %v915 = vunpack.c.0.s8 %v914
      %v916 = vlaneseq
      %v917 = vshrl.u32 %v916, 7
      %v918 = vsub.s32 %v915, %v917
      %v919 = vrot.slane %v911, %v918
      %v921 = vunpack.c.l.s4 1983009808
      %v922 = vunpack.c.0.s8 %v921
      %v923 = vlaneseq
      %v924 = vshrl.u32 %v923, 7
      %v925 = vsub.s32 %v922, %v924
      %v926 = vrot.slane %v912, %v925
      %v927 = vcombine.low %v456, %v468
      %v928 = vcombine.high %v456, %v468
      %v930 = vunpack.c.l.s4 1983009808
      %v931 = vunpack.c.0.s8 %v930
      %v932 = vlaneseq
      %v933 = vshrl.u32 %v932, 7
      %v934 = vsub.s32 %v931, %v933
      %v935 = vrot.slane %v927, %v934
      %v937 = vunpack.c.l.s4 1983009808
      %v938 = vunpack.c.0.s8 %v937
      %v939 = vlaneseq
      %v940 = vshrl.u32 %v939, 7
      %v941 = vsub.s32 %v938, %v940
      %v942 = vrot.slane %v928, %v941
      %v943 = vcombine.low %v887, %v903
      %v944 = vcombine.high %v887, %v903
      %v946 = vunpack.c.l.s4 1934713408
      %v947 = vunpack.c.0.s8 %v946
      %v948 = vlaneseq
      %v949 = vshrl.u32 %v948, 7
      %v950 = vsub.s32 %v947, %v949
      %v951 = vrot.slane %v943, %v950
      %v953 = vunpack.c.l.s4 1934713408
      %v954 = vunpack.c.0.s8 %v953
      %v955 = vlaneseq
      %v956 = vshrl.u32 %v955, 7
      %v957 = vsub.s32 %v954, %v956
      %v958 = vrot.slane %v944, %v957
      %v959 = vcombine.low %v894, %v910
      %v960 = vcombine.high %v894, %v910
      %v962 = vunpack.c.l.s4 1934713408
      %v963 = vunpack.c.0.s8 %v962
      %v964 = vlaneseq
      %v965 = vshrl.u32 %v964, 7
      %v966 = vsub.s32 %v963, %v965
      %v967 = vrot.slane %v959, %v966
      %v969 = vunpack.c.l.s4 1934713408
      %v970 = vunpack.c.0.s8 %v969
      %v971 = vlaneseq
      %v972 = vshrl.u32 %v971, 7
      %v973 = vsub.s32 %v970, %v972
      %v974 = vrot.slane %v960, %v973
      %v975 = vcombine.low %v919, %v935
      %v976 = vcombine.high %v919, %v935
      %v978 = vunpack.c.l.s4 1934713408
      %v979 = vunpack.c.0.s8 %v978
      %v980 = vlaneseq
      %v981 = vshrl.u32 %v980, 7
      %v982 = vsub.s32 %v979, %v981
      %v983 = vrot.slane %v975, %v982
      %v985 = vunpack.c.l.s4 1934713408
      %v986 = vunpack.c.0.s8 %v985
      %v987 = vlaneseq
      %v988 = vshrl.u32 %v987, 7
      %v989 = vsub.s32 %v986, %v988
      %v990 = vrot.slane %v976, %v989
      %v991 = vcombine.low %v926, %v942
      %v992 = vcombine.high %v926, %v942
      %v994 = vunpack.c.l.s4 1934713408
      %v995 = vunpack.c.0.s8 %v994
      %v996 = vlaneseq
      %v997 = vshrl.u32 %v996, 7
      %v998 = vsub.s32 %v995, %v997
      %v999 = vrot.slane %v991, %v998
      %v1001 = vunpack.c.l.s4 1934713408
      %v1002 = vunpack.c.0.s8 %v1001
      %v1003 = vlaneseq
      %v1004 = vshrl.u32 %v1003, 7
      %v1005 = vsub.s32 %v1002, %v1004
      %v1006 = vrot.slane %v992, %v1005
      %v1007 = vcombine.low %v951, %v983
      %v1008 = vcombine.high %v951, %v983
      %v1009 = vcombine.low %v958, %v990
      %v1010 = vcombine.high %v958, %v990
      %v1011 = vcombine.low %v967, %v999
      %v1012 = vcombine.high %v967, %v999
      %v1013 = vcombine.low %v974, %v1006
      %v1014 = vcombine.high %v974, %v1006
      %s1015 = scalar_lea.vmem [#allocation2], 24
      %1016 = vst.msk [vmem:[%s1015 + $0x1] sm:$0xff] %vm333, %v599
      %1017 = vst.msk [vmem:[%s1015 + $0x9] sm:$0xff] %vm333, %v735
      %1018 = vst.msk [vmem:[%s1015 + $0x19] sm:$0xff] %vm333, %v600
      %1019 = vst.msk [vmem:[%s1015 + $0x21] sm:$0xff] %vm333, %v736
      %1020 = vst.msk [vmem:[%s1015 + $0x31] sm:$0xff] %vm333, %v601
      %1021 = vst.msk [vmem:[%s1015 + $0x39] sm:$0xff] %vm333, %v737
      %1022 = vst.msk [vmem:[%s1015 + $0x49] sm:$0xff] %vm333, %v602
      %1023 = vst.msk [vmem:[%s1015 + $0x51] sm:$0xff] %vm333, %v738
      %1024 = vst.msk [vmem:[%s1015 + $0x61] sm:$0xff] %vm333, %v603
      %1025 = vst.msk [vmem:[%s1015 + $0x69] sm:$0xff] %vm333, %v739
      %1026 = vst.msk [vmem:[%s1015 + $0x79] sm:$0xff] %vm333, %v604
      %1027 = vst.msk [vmem:[%s1015 + $0x81] sm:$0xff] %vm333, %v740
      %1028 = vst.msk [vmem:[%s1015 + $0x91] sm:$0xff] %vm333, %v605
      %1029 = vst.msk [vmem:[%s1015 + $0x99] sm:$0xff] %vm333, %v741
      %1030 = vst.msk [vmem:[%s1015 + $0xa9] sm:$0xff] %vm333, %v606
      %1031 = vst.msk [vmem:[%s1015 + $0xb1] sm:$0xff] %vm333, %v742
      %1032 = vst.msk [vmem:[%s1015 + $0xc1] sm:$0xff] %vm333, %v871
      %1033 = vst.msk [vmem:[%s1015 + $0xc9] sm:$0xff] %vm333, %v1007
      %1034 = vst.msk [vmem:[%s1015 + $0xd9] sm:$0xff] %vm333, %v872
      %1035 = vst.msk [vmem:[%s1015 + $0xe1] sm:$0xff] %vm333, %v1008
      %1036 = vst.msk [vmem:[%s1015 + $0xf1] sm:$0xff] %vm333, %v873
      %1037 = vst.msk [vmem:[%s1015 + $0xf9] sm:$0xff] %vm333, %v1009
      %1038 = vst.msk [vmem:[%s1015 + $0x109] sm:$0xff] %vm333, %v874
      %1039 = vst.msk [vmem:[%s1015 + $0x111] sm:$0xff] %vm333, %v1010
      %1040 = vst.msk [vmem:[%s1015 + $0x121] sm:$0xff] %vm333, %v875
      %1041 = vst.msk [vmem:[%s1015 + $0x129] sm:$0xff] %vm333, %v1011
      %1042 = vst.msk [vmem:[%s1015 + $0x139] sm:$0xff] %vm333, %v876
      %1043 = vst.msk [vmem:[%s1015 + $0x141] sm:$0xff] %vm333, %v1012
      %1044 = vst.msk [vmem:[%s1015 + $0x151] sm:$0xff] %vm333, %v877
      %1045 = vst.msk [vmem:[%s1015 + $0x159] sm:$0xff] %vm333, %v1013
      %1046 = vst.msk [vmem:[%s1015 + $0x169] sm:$0xff] %vm333, %v878
      %1047 = vst.msk [vmem:[%s1015 + $0x171] sm:$0xff] %vm333, %v1014
      %v1048 = vld [vmem:[#allocation2] sm:$0xff]
      %v1049 = vld [vmem:[#allocation2 + $0x8] sm:$0xff]
      %v1050 = vld [vmem:[#allocation2 + $0x18] sm:$0xff]
      %v1051 = vld [vmem:[#allocation2 + $0x20] sm:$0xff]
      %v1052 = vld [vmem:[#allocation2 + $0x30] sm:$0xff]
      %v1053 = vld [vmem:[#allocation2 + $0x38] sm:$0xff]
      %v1054 = vld [vmem:[#allocation2 + $0x48] sm:$0xff]
      %v1055 = vld [vmem:[#allocation2 + $0x50] sm:$0xff]
      %v1056 = vld [vmem:[#allocation2 + $0x60] sm:$0xff]
      %v1057 = vld [vmem:[#allocation2 + $0x68] sm:$0xff]
      %v1058 = vld [vmem:[#allocation2 + $0x78] sm:$0xff]
      %v1059 = vld [vmem:[#allocation2 + $0x80] sm:$0xff]
      %v1060 = vld [vmem:[#allocation2 + $0x90] sm:$0xff]
      %v1061 = vld [vmem:[#allocation2 + $0x98] sm:$0xff]
      %v1062 = vld [vmem:[#allocation2 + $0xa8] sm:$0xff]
      %v1063 = vld [vmem:[#allocation2 + $0xb0] sm:$0xff]
      %v1064 = vld [vmem:[#allocation2 + $0xc0] sm:$0xff]
      %v1065 = vld [vmem:[#allocation2 + $0xc8] sm:$0xff]
      %v1066 = vld [vmem:[#allocation2 + $0xd8] sm:$0xff]
      %v1067 = vld [vmem:[#allocation2 + $0xe0] sm:$0xff]
      %v1068 = vld [vmem:[#allocation2 + $0xf0] sm:$0xff]
      %v1069 = vld [vmem:[#allocation2 + $0xf8] sm:$0xff]
      %v1070 = vld [vmem:[#allocation2 + $0x108] sm:$0xff]
      %v1071 = vld [vmem:[#allocation2 + $0x110] sm:$0xff]
      %v1072 = vld [vmem:[#allocation2 + $0x120] sm:$0xff]
      %v1073 = vld [vmem:[#allocation2 + $0x128] sm:$0xff]
      %v1074 = vld [vmem:[#allocation2 + $0x138] sm:$0xff]
      %v1075 = vld [vmem:[#allocation2 + $0x140] sm:$0xff]
      %v1076 = vld [vmem:[#allocation2 + $0x150] sm:$0xff]
      %v1077 = vld [vmem:[#allocation2 + $0x158] sm:$0xff]
      %v1078 = vld [vmem:[#allocation2 + $0x168] sm:$0xff]
      %v1079 = vld [vmem:[#allocation2 + $0x170] sm:$0xff]
      %1080 = vst.msk [vmem:[#allocation3] sm:$0xff] %vm333, %v1048
      %1081 = vst.msk [vmem:[#allocation3 + $0x10] sm:$0xff] %vm333, %v1049
      %1082 = vst.msk [vmem:[#allocation3 + $0x20] sm:$0xff] %vm333, %v1050
      %1083 = vst.msk [vmem:[#allocation3 + $0x30] sm:$0xff] %vm333, %v1051
      %1084 = vst.msk [vmem:[#allocation3 + $0x40] sm:$0xff] %vm333, %v1052
      %1085 = vst.msk [vmem:[#allocation3 + $0x50] sm:$0xff] %vm333, %v1053
      %1086 = vst.msk [vmem:[#allocation3 + $0x60] sm:$0xff] %vm333, %v1054
      %1087 = vst.msk [vmem:[#allocation3 + $0x70] sm:$0xff] %vm333, %v1055
      %1088 = vst.msk [vmem:[#allocation3 + $0x80] sm:$0xff] %vm333, %v1056
      %1089 = vst.msk [vmem:[#allocation3 + $0x90] sm:$0xff] %vm333, %v1057
      %1090 = vst.msk [vmem:[#allocation3 + $0xa0] sm:$0xff] %vm333, %v1058
      %1091 = vst.msk [vmem:[#allocation3 + $0xb0] sm:$0xff] %vm333, %v1059
      %1092 = vst.msk [vmem:[#allocation3 + $0xc0] sm:$0xff] %vm333, %v1060
      %1093 = vst.msk [vmem:[#allocation3 + $0xd0] sm:$0xff] %vm333, %v1061
      %1094 = vst.msk [vmem:[#allocation3 + $0xe0] sm:$0xff] %vm333, %v1062
      %1095 = vst.msk [vmem:[#allocation3 + $0xf0] sm:$0xff] %vm333, %v1063
      %1096 = vst.msk [vmem:[#allocation3 + $0x100] sm:$0xff] %vm333, %v1064
      %1097 = vst.msk [vmem:[#allocation3 + $0x110] sm:$0xff] %vm333, %v1065
      %1098 = vst.msk [vmem:[#allocation3 + $0x120] sm:$0xff] %vm333, %v1066
      %1099 = vst.msk [vmem:[#allocation3 + $0x130] sm:$0xff] %vm333, %v1067
      %1100 = vst.msk [vmem:[#allocation3 + $0x140] sm:$0xff] %vm333, %v1068
      %1101 = vst.msk [vmem:[#allocation3 + $0x150] sm:$0xff] %vm333, %v1069
      %1102 = vst.msk [vmem:[#allocation3 + $0x160] sm:$0xff] %vm333, %v1070
      %1103 = vst.msk [vmem:[#allocation3 + $0x170] sm:$0xff] %vm333, %v1071
      %1104 = vst.msk [vmem:[#allocation3 + $0x180] sm:$0xff] %vm333, %v1072
      %1105 = vst.msk [vmem:[#allocation3 + $0x190] sm:$0xff] %vm333, %v1073
      %1106 = vst.msk [vmem:[#allocation3 + $0x1a0] sm:$0xff] %vm333, %v1074
      %1107 = vst.msk [vmem:[#allocation3 + $0x1b0] sm:$0xff] %vm333, %v1075
      %1108 = vst.msk [vmem:[#allocation3 + $0x1c0] sm:$0xff] %vm333, %v1076
      %1109 = vst.msk [vmem:[#allocation3 + $0x1d0] sm:$0xff] %vm333, %v1077
      %1110 = vst.msk [vmem:[#allocation3 + $0x1e0] sm:$0xff] %vm333, %v1078
      %1111 = vst.msk [vmem:[#allocation3 + $0x1f0] sm:$0xff] %vm333, %v1079
      %v1112 = vld [vmem:[#allocation2 + $0x1] sm:$0xff]
      %v1113 = vld [vmem:[#allocation2 + $0x9] sm:$0xff]
      %v1114 = vld [vmem:[#allocation2 + $0x19] sm:$0xff]
      %v1115 = vld [vmem:[#allocation2 + $0x21] sm:$0xff]
      %v1116 = vld [vmem:[#allocation2 + $0x31] sm:$0xff]
      %v1117 = vld [vmem:[#allocation2 + $0x39] sm:$0xff]
      %v1118 = vld [vmem:[#allocation2 + $0x49] sm:$0xff]
      %v1119 = vld [vmem:[#allocation2 + $0x51] sm:$0xff]
      %v1120 = vld [vmem:[#allocation2 + $0x61] sm:$0xff]
      %v1121 = vld [vmem:[#allocation2 + $0x69] sm:$0xff]
      %v1122 = vld [vmem:[#allocation2 + $0x79] sm:$0xff]
      %v1123 = vld [vmem:[#allocation2 + $0x81] sm:$0xff]
      %v1124 = vld [vmem:[#allocation2 + $0x91] sm:$0xff]
      %v1125 = vld [vmem:[#allocation2 + $0x99] sm:$0xff]
      %v1126 = vld [vmem:[#allocation2 + $0xa9] sm:$0xff]
      %v1127 = vld [vmem:[#allocation2 + $0xb1] sm:$0xff]
      %v1128 = vld [vmem:[#allocation2 + $0xc1] sm:$0xff]
      %v1129 = vld [vmem:[#allocation2 + $0xc9] sm:$0xff]
      %v1130 = vld [vmem:[#allocation2 + $0xd9] sm:$0xff]
      %v1131 = vld [vmem:[#allocation2 + $0xe1] sm:$0xff]
      %v1132 = vld [vmem:[#allocation2 + $0xf1] sm:$0xff]
      %v1133 = vld [vmem:[#allocation2 + $0xf9] sm:$0xff]
      %v1134 = vld [vmem:[#allocation2 + $0x109] sm:$0xff]
      %v1135 = vld [vmem:[#allocation2 + $0x111] sm:$0xff]
      %v1136 = vld [vmem:[#allocation2 + $0x121] sm:$0xff]
      %v1137 = vld [vmem:[#allocation2 + $0x129] sm:$0xff]
      %v1138 = vld [vmem:[#allocation2 + $0x139] sm:$0xff]
      %v1139 = vld [vmem:[#allocation2 + $0x141] sm:$0xff]
      %v1140 = vld [vmem:[#allocation2 + $0x151] sm:$0xff]
      %v1141 = vld [vmem:[#allocation2 + $0x159] sm:$0xff]
      %v1142 = vld [vmem:[#allocation2 + $0x169] sm:$0xff]
      %v1143 = vld [vmem:[#allocation2 + $0x171] sm:$0xff]
      %1176 = vrot.lane.b32.xlu0 %v1112, 16
      %v1177 = vpop.permute.xlu0 %1176
      %1178 = vrot.lane.b32.xlu0 %v1113, 16
      %v1179 = vpop.permute.xlu0 %1178
      %1180 = vrot.lane.b32.xlu0 %v1114, 16
      %v1181 = vpop.permute.xlu0 %1180
      %1182 = vrot.lane.b32.xlu0 %v1115, 16
      %v1183 = vpop.permute.xlu0 %1182
      %1184 = vrot.lane.b32.xlu0 %v1116, 16
      %v1185 = vpop.permute.xlu0 %1184
      %1186 = vrot.lane.b32.xlu0 %v1117, 16
      %v1187 = vpop.permute.xlu0 %1186
      %1188 = vrot.lane.b32.xlu0 %v1118, 16
      %v1189 = vpop.permute.xlu0 %1188
      %1190 = vrot.lane.b32.xlu0 %v1119, 16
      %v1191 = vpop.permute.xlu0 %1190
      %1192 = vrot.lane.b32.xlu0 %v1120, 16
      %v1193 = vpop.permute.xlu0 %1192
      %1194 = vrot.lane.b32.xlu0 %v1121, 16
      %v1195 = vpop.permute.xlu0 %1194
      %1196 = vrot.lane.b32.xlu0 %v1122, 16
      %v1197 = vpop.permute.xlu0 %1196
      %1198 = vrot.lane.b32.xlu0 %v1123, 16
      %v1199 = vpop.permute.xlu0 %1198
      %1200 = vrot.lane.b32.xlu0 %v1124, 16
      %v1201 = vpop.permute.xlu0 %1200
      %1202 = vrot.lane.b32.xlu0 %v1125, 16
      %v1203 = vpop.permute.xlu0 %1202
      %1204 = vrot.lane.b32.xlu0 %v1126, 16
      %v1205 = vpop.permute.xlu0 %1204
      %1206 = vrot.lane.b32.xlu0 %v1127, 16
      %v1207 = vpop.permute.xlu0 %1206
      %1208 = vrot.lane.b32.xlu0 %v1128, 16
      %v1209 = vpop.permute.xlu0 %1208
      %1210 = vrot.lane.b32.xlu0 %v1129, 16
      %v1211 = vpop.permute.xlu0 %1210
      %1212 = vrot.lane.b32.xlu0 %v1130, 16
      %v1213 = vpop.permute.xlu0 %1212
      %1214 = vrot.lane.b32.xlu0 %v1131, 16
      %v1215 = vpop.permute.xlu0 %1214
      %1216 = vrot.lane.b32.xlu0 %v1132, 16
      %v1217 = vpop.permute.xlu0 %1216
      %1218 = vrot.lane.b32.xlu0 %v1133, 16
      %v1219 = vpop.permute.xlu0 %1218
      %1220 = vrot.lane.b32.xlu0 %v1134, 16
      %v1221 = vpop.permute.xlu0 %1220
      %1222 = vrot.lane.b32.xlu0 %v1135, 16
      %v1223 = vpop.permute.xlu0 %1222
      %1224 = vrot.lane.b32.xlu0 %v1136, 16
      %v1225 = vpop.permute.xlu0 %1224
      %1226 = vrot.lane.b32.xlu0 %v1137, 16
      %v1227 = vpop.permute.xlu0 %1226
      %1228 = vrot.lane.b32.xlu0 %v1138, 16
      %v1229 = vpop.permute.xlu0 %1228
      %1230 = vrot.lane.b32.xlu0 %v1139, 16
      %v1231 = vpop.permute.xlu0 %1230
      %1232 = vrot.lane.b32.xlu0 %v1140, 16
      %v1233 = vpop.permute.xlu0 %1232
      %1234 = vrot.lane.b32.xlu0 %v1141, 16
      %v1235 = vpop.permute.xlu0 %1234
      %1236 = vrot.lane.b32.xlu0 %v1142, 16
      %v1237 = vpop.permute.xlu0 %1236
      %1238 = vrot.lane.b32.xlu0 %v1143, 16
      %v1239 = vpop.permute.xlu0 %1238
      %vm1272 = vcmask 261248
      %1273 = vst.msk [vmem:[#allocation3] sm:$0xff] %vm1272, %v1177
      %1274 = vst.msk [vmem:[#allocation3 + $0x10] sm:$0xff] %vm1272, %v1179
      %1275 = vst.msk [vmem:[#allocation3 + $0x20] sm:$0xff] %vm1272, %v1181
      %1276 = vst.msk [vmem:[#allocation3 + $0x30] sm:$0xff] %vm1272, %v1183
      %1277 = vst.msk [vmem:[#allocation3 + $0x40] sm:$0xff] %vm1272, %v1185
      %1278 = vst.msk [vmem:[#allocation3 + $0x50] sm:$0xff] %vm1272, %v1187
      %1279 = vst.msk [vmem:[#allocation3 + $0x60] sm:$0xff] %vm1272, %v1189
      %1280 = vst.msk [vmem:[#allocation3 + $0x70] sm:$0xff] %vm1272, %v1191
      %1281 = vst.msk [vmem:[#allocation3 + $0x80] sm:$0xff] %vm1272, %v1193
      %1282 = vst.msk [vmem:[#allocation3 + $0x90] sm:$0xff] %vm1272, %v1195
      %1283 = vst.msk [vmem:[#allocation3 + $0xa0] sm:$0xff] %vm1272, %v1197
      %1284 = vst.msk [vmem:[#allocation3 + $0xb0] sm:$0xff] %vm1272, %v1199
      %1285 = vst.msk [vmem:[#allocation3 + $0xc0] sm:$0xff] %vm1272, %v1201
      %1286 = vst.msk [vmem:[#allocation3 + $0xd0] sm:$0xff] %vm1272, %v1203
      %1287 = vst.msk [vmem:[#allocation3 + $0xe0] sm:$0xff] %vm1272, %v1205
      %1288 = vst.msk [vmem:[#allocation3 + $0xf0] sm:$0xff] %vm1272, %v1207
      %1289 = vst.msk [vmem:[#allocation3 + $0x100] sm:$0xff] %vm1272, %v1209
      %1290 = vst.msk [vmem:[#allocation3 + $0x110] sm:$0xff] %vm1272, %v1211
      %1291 = vst.msk [vmem:[#allocation3 + $0x120] sm:$0xff] %vm1272, %v1213
      %1292 = vst.msk [vmem:[#allocation3 + $0x130] sm:$0xff] %vm1272, %v1215
      %1293 = vst.msk [vmem:[#allocation3 + $0x140] sm:$0xff] %vm1272, %v1217
      %1294 = vst.msk [vmem:[#allocation3 + $0x150] sm:$0xff] %vm1272, %v1219
      %1295 = vst.msk [vmem:[#allocation3 + $0x160] sm:$0xff] %vm1272, %v1221
      %1296 = vst.msk [vmem:[#allocation3 + $0x170] sm:$0xff] %vm1272, %v1223
      %1297 = vst.msk [vmem:[#allocation3 + $0x180] sm:$0xff] %vm1272, %v1225
      %1298 = vst.msk [vmem:[#allocation3 + $0x190] sm:$0xff] %vm1272, %v1227
      %1299 = vst.msk [vmem:[#allocation3 + $0x1a0] sm:$0xff] %vm1272, %v1229
      %1300 = vst.msk [vmem:[#allocation3 + $0x1b0] sm:$0xff] %vm1272, %v1231
      %1301 = vst.msk [vmem:[#allocation3 + $0x1c0] sm:$0xff] %vm1272, %v1233
      %1302 = vst.msk [vmem:[#allocation3 + $0x1d0] sm:$0xff] %vm1272, %v1235
      %1303 = vst.msk [vmem:[#allocation3 + $0x1e0] sm:$0xff] %vm1272, %v1237
      %1304 = vst.msk [vmem:[#allocation3 + $0x1f0] sm:$0xff] %vm1272, %v1239
      %v1305 = vld [vmem:[#allocation2 + $0x2] sm:$0xff]
      %v1306 = vld [vmem:[#allocation2 + $0xa] sm:$0xff]
      %v1307 = vld [vmem:[#allocation2 + $0x1a] sm:$0xff]
      %v1308 = vld [vmem:[#allocation2 + $0x22] sm:$0xff]
      %v1309 = vld [vmem:[#allocation2 + $0x32] sm:$0xff]
      %v1310 = vld [vmem:[#allocation2 + $0x3a] sm:$0xff]
      %v1311 = vld [vmem:[#allocation2 + $0x4a] sm:$0xff]
      %v1312 = vld [vmem:[#allocation2 + $0x52] sm:$0xff]
      %v1313 = vld [vmem:[#allocation2 + $0x62] sm:$0xff]
      %v1314 = vld [vmem:[#allocation2 + $0x6a] sm:$0xff]
      %v1315 = vld [vmem:[#allocation2 + $0x7a] sm:$0xff]
      %v1316 = vld [vmem:[#allocation2 + $0x82] sm:$0xff]
      %v1317 = vld [vmem:[#allocation2 + $0x92] sm:$0xff]
      %v1318 = vld [vmem:[#allocation2 + $0x9a] sm:$0xff]
      %v1319 = vld [vmem:[#allocation2 + $0xaa] sm:$0xff]
      %v1320 = vld [vmem:[#allocation2 + $0xb2] sm:$0xff]
      %v1321 = vld [vmem:[#allocation2 + $0xc2] sm:$0xff]
      %v1322 = vld [vmem:[#allocation2 + $0xca] sm:$0xff]
      %v1323 = vld [vmem:[#allocation2 + $0xda] sm:$0xff]
      %v1324 = vld [vmem:[#allocation2 + $0xe2] sm:$0xff]
      %v1325 = vld [vmem:[#allocation2 + $0xf2] sm:$0xff]
      %v1326 = vld [vmem:[#allocation2 + $0xfa] sm:$0xff]
      %v1327 = vld [vmem:[#allocation2 + $0x10a] sm:$0xff]
      %v1328 = vld [vmem:[#allocation2 + $0x112] sm:$0xff]
      %v1329 = vld [vmem:[#allocation2 + $0x122] sm:$0xff]
      %v1330 = vld [vmem:[#allocation2 + $0x12a] sm:$0xff]
      %v1331 = vld [vmem:[#allocation2 + $0x13a] sm:$0xff]
      %v1332 = vld [vmem:[#allocation2 + $0x142] sm:$0xff]
      %v1333 = vld [vmem:[#allocation2 + $0x152] sm:$0xff]
      %v1334 = vld [vmem:[#allocation2 + $0x15a] sm:$0xff]
      %v1335 = vld [vmem:[#allocation2 + $0x16a] sm:$0xff]
      %v1336 = vld [vmem:[#allocation2 + $0x172] sm:$0xff]
      %1369 = vrot.lane.b32.xlu0 %v1305, 32
      %v1370 = vpop.permute.xlu0 %1369
      %1371 = vrot.lane.b32.xlu0 %v1306, 32
      %v1372 = vpop.permute.xlu0 %1371
      %1373 = vrot.lane.b32.xlu0 %v1307, 32
      %v1374 = vpop.permute.xlu0 %1373
      %1375 = vrot.lane.b32.xlu0 %v1308, 32
      %v1376 = vpop.permute.xlu0 %1375
      %1377 = vrot.lane.b32.xlu0 %v1309, 32
      %v1378 = vpop.permute.xlu0 %1377
      %1379 = vrot.lane.b32.xlu0 %v1310, 32
      %v1380 = vpop.permute.xlu0 %1379
      %1381 = vrot.lane.b32.xlu0 %v1311, 32
      %v1382 = vpop.permute.xlu0 %1381
      %1383 = vrot.lane.b32.xlu0 %v1312, 32
      %v1384 = vpop.permute.xlu0 %1383
      %1385 = vrot.lane.b32.xlu0 %v1313, 32
      %v1386 = vpop.permute.xlu0 %1385
      %1387 = vrot.lane.b32.xlu0 %v1314, 32
      %v1388 = vpop.permute.xlu0 %1387
      %1389 = vrot.lane.b32.xlu0 %v1315, 32
      %v1390 = vpop.permute.xlu0 %1389
      %1391 = vrot.lane.b32.xlu0 %v1316, 32
      %v1392 = vpop.permute.xlu0 %1391
      %1393 = vrot.lane.b32.xlu0 %v1317, 32
      %v1394 = vpop.permute.xlu0 %1393
      %1395 = vrot.lane.b32.xlu0 %v1318, 32
      %v1396 = vpop.permute.xlu0 %1395
      %1397 = vrot.lane.b32.xlu0 %v1319, 32
      %v1398 = vpop.permute.xlu0 %1397
      %1399 = vrot.lane.b32.xlu0 %v1320, 32
      %v1400 = vpop.permute.xlu0 %1399
      %1401 = vrot.lane.b32.xlu0 %v1321, 32
      %v1402 = vpop.permute.xlu0 %1401
      %1403 = vrot.lane.b32.xlu0 %v1322, 32
      %v1404 = vpop.permute.xlu0 %1403
      %1405 = vrot.lane.b32.xlu0 %v1323, 32
      %v1406 = vpop.permute.xlu0 %1405
      %1407 = vrot.lane.b32.xlu0 %v1324, 32
      %v1408 = vpop.permute.xlu0 %1407
      %1409 = vrot.lane.b32.xlu0 %v1325, 32
      %v1410 = vpop.permute.xlu0 %1409
      %1411 = vrot.lane.b32.xlu0 %v1326, 32
      %v1412 = vpop.permute.xlu0 %1411
      %1413 = vrot.lane.b32.xlu0 %v1327, 32
      %v1414 = vpop.permute.xlu0 %1413
      %1415 = vrot.lane.b32.xlu0 %v1328, 32
      %v1416 = vpop.permute.xlu0 %1415
      %1417 = vrot.lane.b32.xlu0 %v1329, 32
      %v1418 = vpop.permute.xlu0 %1417
      %1419 = vrot.lane.b32.xlu0 %v1330, 32
      %v1420 = vpop.permute.xlu0 %1419
      %1421 = vrot.lane.b32.xlu0 %v1331, 32
      %v1422 = vpop.permute.xlu0 %1421
      %1423 = vrot.lane.b32.xlu0 %v1332, 32
      %v1424 = vpop.permute.xlu0 %1423
      %1425 = vrot.lane.b32.xlu0 %v1333, 32
      %v1426 = vpop.permute.xlu0 %1425
      %1427 = vrot.lane.b32.xlu0 %v1334, 32
      %v1428 = vpop.permute.xlu0 %1427
      %1429 = vrot.lane.b32.xlu0 %v1335, 32
      %v1430 = vpop.permute.xlu0 %1429
      %1431 = vrot.lane.b32.xlu0 %v1336, 32
      %v1432 = vpop.permute.xlu0 %1431
      %vm1465 = vcmask 392448
      %1466 = vst.msk [vmem:[#allocation3] sm:$0xff] %vm1465, %v1370
      %1467 = vst.msk [vmem:[#allocation3 + $0x10] sm:$0xff] %vm1465, %v1372
      %1468 = vst.msk [vmem:[#allocation3 + $0x20] sm:$0xff] %vm1465, %v1374
      %1469 = vst.msk [vmem:[#allocation3 + $0x30] sm:$0xff] %vm1465, %v1376
      %1470 = vst.msk [vmem:[#allocation3 + $0x40] sm:$0xff] %vm1465, %v1378
      %1471 = vst.msk [vmem:[#allocation3 + $0x50] sm:$0xff] %vm1465, %v1380
      %1472 = vst.msk [vmem:[#allocation3 + $0x60] sm:$0xff] %vm1465, %v1382
      %1473 = vst.msk [vmem:[#allocation3 + $0x70] sm:$0xff] %vm1465, %v1384
      %1474 = vst.msk [vmem:[#allocation3 + $0x80] sm:$0xff] %vm1465, %v1386
      %1475 = vst.msk [vmem:[#allocation3 + $0x90] sm:$0xff] %vm1465, %v1388
      %1476 = vst.msk [vmem:[#allocation3 + $0xa0] sm:$0xff] %vm1465, %v1390
      %1477 = vst.msk [vmem:[#allocation3 + $0xb0] sm:$0xff] %vm1465, %v1392
      %1478 = vst.msk [vmem:[#allocation3 + $0xc0] sm:$0xff] %vm1465, %v1394
      %1479 = vst.msk [vmem:[#allocation3 + $0xd0] sm:$0xff] %vm1465, %v1396
      %1480 = vst.msk [vmem:[#allocation3 + $0xe0] sm:$0xff] %vm1465, %v1398
      %1481 = vst.msk [vmem:[#allocation3 + $0xf0] sm:$0xff] %vm1465, %v1400
      %1482 = vst.msk [vmem:[#allocation3 + $0x100] sm:$0xff] %vm1465, %v1402
      %1483 = vst.msk [vmem:[#allocation3 + $0x110] sm:$0xff] %vm1465, %v1404
      %1484 = vst.msk [vmem:[#allocation3 + $0x120] sm:$0xff] %vm1465, %v1406
      %1485 = vst.msk [vmem:[#allocation3 + $0x130] sm:$0xff] %vm1465, %v1408
      %1486 = vst.msk [vmem:[#allocation3 + $0x140] sm:$0xff] %vm1465, %v1410
      %1487 = vst.msk [vmem:[#allocation3 + $0x150] sm:$0xff] %vm1465, %v1412
      %1488 = vst.msk [vmem:[#allocation3 + $0x160] sm:$0xff] %vm1465, %v1414
      %1489 = vst.msk [vmem:[#allocation3 + $0x170] sm:$0xff] %vm1465, %v1416
      %1490 = vst.msk [vmem:[#allocation3 + $0x180] sm:$0xff] %vm1465, %v1418
      %1491 = vst.msk [vmem:[#allocation3 + $0x190] sm:$0xff] %vm1465, %v1420
      %1492 = vst.msk [vmem:[#allocation3 + $0x1a0] sm:$0xff] %vm1465, %v1422
      %1493 = vst.msk [vmem:[#allocation3 + $0x1b0] sm:$0xff] %vm1465, %v1424
      %1494 = vst.msk [vmem:[#allocation3 + $0x1c0] sm:$0xff] %vm1465, %v1426
      %1495 = vst.msk [vmem:[#allocation3 + $0x1d0] sm:$0xff] %vm1465, %v1428
      %1496 = vst.msk [vmem:[#allocation3 + $0x1e0] sm:$0xff] %vm1465, %v1430
      %1497 = vst.msk [vmem:[#allocation3 + $0x1f0] sm:$0xff] %vm1465, %v1432
      %v1498 = vld [vmem:[%s1015] sm:$0xff]
      %v1499 = vld [vmem:[%s1015 + $0x8] sm:$0xff]
      %v1500 = vld [vmem:[%s1015 + $0x18] sm:$0xff]
      %v1501 = vld [vmem:[%s1015 + $0x20] sm:$0xff]
      %v1502 = vld [vmem:[%s1015 + $0x30] sm:$0xff]
      %v1503 = vld [vmem:[%s1015 + $0x38] sm:$0xff]
      %v1504 = vld [vmem:[%s1015 + $0x48] sm:$0xff]
      %v1505 = vld [vmem:[%s1015 + $0x50] sm:$0xff]
      %v1506 = vld [vmem:[%s1015 + $0x60] sm:$0xff]
      %v1507 = vld [vmem:[%s1015 + $0x68] sm:$0xff]
      %v1508 = vld [vmem:[%s1015 + $0x78] sm:$0xff]
      %v1509 = vld [vmem:[%s1015 + $0x80] sm:$0xff]
      %v1510 = vld [vmem:[%s1015 + $0x90] sm:$0xff]
      %v1511 = vld [vmem:[%s1015 + $0x98] sm:$0xff]
      %v1512 = vld [vmem:[%s1015 + $0xa8] sm:$0xff]
      %v1513 = vld [vmem:[%s1015 + $0xb0] sm:$0xff]
      %v1514 = vld [vmem:[%s1015 + $0xc0] sm:$0xff]
      %v1515 = vld [vmem:[%s1015 + $0xc8] sm:$0xff]
      %v1516 = vld [vmem:[%s1015 + $0xd8] sm:$0xff]
      %v1517 = vld [vmem:[%s1015 + $0xe0] sm:$0xff]
      %v1518 = vld [vmem:[%s1015 + $0xf0] sm:$0xff]
      %v1519 = vld [vmem:[%s1015 + $0xf8] sm:$0xff]
      %v1520 = vld [vmem:[%s1015 + $0x108] sm:$0xff]
      %v1521 = vld [vmem:[%s1015 + $0x110] sm:$0xff]
      %v1522 = vld [vmem:[%s1015 + $0x120] sm:$0xff]
      %v1523 = vld [vmem:[%s1015 + $0x128] sm:$0xff]
      %v1524 = vld [vmem:[%s1015 + $0x138] sm:$0xff]
      %v1525 = vld [vmem:[%s1015 + $0x140] sm:$0xff]
      %v1526 = vld [vmem:[%s1015 + $0x150] sm:$0xff]
      %v1527 = vld [vmem:[%s1015 + $0x158] sm:$0xff]
      %v1528 = vld [vmem:[%s1015 + $0x168] sm:$0xff]
      %v1529 = vld [vmem:[%s1015 + $0x170] sm:$0xff]
      %1562 = vrot.lane.b32.xlu0 %v1498, 48
      %v1563 = vpop.permute.xlu0 %1562
      %1564 = vrot.lane.b32.xlu0 %v1499, 48
      %v1565 = vpop.permute.xlu0 %1564
      %1566 = vrot.lane.b32.xlu0 %v1500, 48
      %v1567 = vpop.permute.xlu0 %1566
      %1568 = vrot.lane.b32.xlu0 %v1501, 48
      %v1569 = vpop.permute.xlu0 %1568
      %1570 = vrot.lane.b32.xlu0 %v1502, 48
      %v1571 = vpop.permute.xlu0 %1570
      %1572 = vrot.lane.b32.xlu0 %v1503, 48
      %v1573 = vpop.permute.xlu0 %1572
      %1574 = vrot.lane.b32.xlu0 %v1504, 48
      %v1575 = vpop.permute.xlu0 %1574
      %1576 = vrot.lane.b32.xlu0 %v1505, 48
      %v1577 = vpop.permute.xlu0 %1576
      %1578 = vrot.lane.b32.xlu0 %v1506, 48
      %v1579 = vpop.permute.xlu0 %1578
      %1580 = vrot.lane.b32.xlu0 %v1507, 48
      %v1581 = vpop.permute.xlu0 %1580
      %1582 = vrot.lane.b32.xlu0 %v1508, 48
      %v1583 = vpop.permute.xlu0 %1582
      %1584 = vrot.lane.b32.xlu0 %v1509, 48
      %v1585 = vpop.permute.xlu0 %1584
      %1586 = vrot.lane.b32.xlu0 %v1510, 48
      %v1587 = vpop.permute.xlu0 %1586
      %1588 = vrot.lane.b32.xlu0 %v1511, 48
      %v1589 = vpop.permute.xlu0 %1588
      %1590 = vrot.lane.b32.xlu0 %v1512, 48
      %v1591 = vpop.permute.xlu0 %1590
      %1592 = vrot.lane.b32.xlu0 %v1513, 48
      %v1593 = vpop.permute.xlu0 %1592
      %1594 = vrot.lane.b32.xlu0 %v1514, 48
      %v1595 = vpop.permute.xlu0 %1594
      %1596 = vrot.lane.b32.xlu0 %v1515, 48
      %v1597 = vpop.permute.xlu0 %1596
      %1598 = vrot.lane.b32.xlu0 %v1516, 48
      %v1599 = vpop.permute.xlu0 %1598
      %1600 = vrot.lane.b32.xlu0 %v1517, 48
      %v1601 = vpop.permute.xlu0 %1600
      %1602 = vrot.lane.b32.xlu0 %v1518, 48
      %v1603 = vpop.permute.xlu0 %1602
      %1604 = vrot.lane.b32.xlu0 %v1519, 48
      %v1605 = vpop.permute.xlu0 %1604
      %1606 = vrot.lane.b32.xlu0 %v1520, 48
      %v1607 = vpop.permute.xlu0 %1606
      %1608 = vrot.lane.b32.xlu0 %v1521, 48
      %v1609 = vpop.permute.xlu0 %1608
      %1610 = vrot.lane.b32.xlu0 %v1522, 48
      %v1611 = vpop.permute.xlu0 %1610
      %1612 = vrot.lane.b32.xlu0 %v1523, 48
      %v1613 = vpop.permute.xlu0 %1612
      %1614 = vrot.lane.b32.xlu0 %v1524, 48
      %v1615 = vpop.permute.xlu0 %1614
      %1616 = vrot.lane.b32.xlu0 %v1525, 48
      %v1617 = vpop.permute.xlu0 %1616
      %1618 = vrot.lane.b32.xlu0 %v1526, 48
      %v1619 = vpop.permute.xlu0 %1618
      %1620 = vrot.lane.b32.xlu0 %v1527, 48
      %v1621 = vpop.permute.xlu0 %1620
      %1622 = vrot.lane.b32.xlu0 %v1528, 48
      %v1623 = vpop.permute.xlu0 %1622
      %1624 = vrot.lane.b32.xlu0 %v1529, 48
      %v1625 = vpop.permute.xlu0 %1624
      %vm1658 = vcmask 523648
      %1659 = vst.msk [vmem:[#allocation3] sm:$0xff] %vm1658, %v1563
      %1660 = vst.msk [vmem:[#allocation3 + $0x10] sm:$0xff] %vm1658, %v1565
      %1661 = vst.msk [vmem:[#allocation3 + $0x20] sm:$0xff] %vm1658, %v1567
      %1662 = vst.msk [vmem:[#allocation3 + $0x30] sm:$0xff] %vm1658, %v1569
      %1663 = vst.msk [vmem:[#allocation3 + $0x40] sm:$0xff] %vm1658, %v1571
      %1664 = vst.msk [vmem:[#allocation3 + $0x50] sm:$0xff] %vm1658, %v1573
      %1665 = vst.msk [vmem:[#allocation3 + $0x60] sm:$0xff] %vm1658, %v1575
      %1666 = vst.msk [vmem:[#allocation3 + $0x70] sm:$0xff] %vm1658, %v1577
      %1667 = vst.msk [vmem:[#allocation3 + $0x80] sm:$0xff] %vm1658, %v1579
      %1668 = vst.msk [vmem:[#allocation3 + $0x90] sm:$0xff] %vm1658, %v1581
      %1669 = vst.msk [vmem:[#allocation3 + $0xa0] sm:$0xff] %vm1658, %v1583
      %1670 = vst.msk [vmem:[#allocation3 + $0xb0] sm:$0xff] %vm1658, %v1585
      %1671 = vst.msk [vmem:[#allocation3 + $0xc0] sm:$0xff] %vm1658, %v1587
      %1672 = vst.msk [vmem:[#allocation3 + $0xd0] sm:$0xff] %vm1658, %v1589
      %1673 = vst.msk [vmem:[#allocation3 + $0xe0] sm:$0xff] %vm1658, %v1591
      %1674 = vst.msk [vmem:[#allocation3 + $0xf0] sm:$0xff] %vm1658, %v1593
      %1675 = vst.msk [vmem:[#allocation3 + $0x100] sm:$0xff] %vm1658, %v1595
      %1676 = vst.msk [vmem:[#allocation3 + $0x110] sm:$0xff] %vm1658, %v1597
      %1677 = vst.msk [vmem:[#allocation3 + $0x120] sm:$0xff] %vm1658, %v1599
      %1678 = vst.msk [vmem:[#allocation3 + $0x130] sm:$0xff] %vm1658, %v1601
      %1679 = vst.msk [vmem:[#allocation3 + $0x140] sm:$0xff] %vm1658, %v1603
      %1680 = vst.msk [vmem:[#allocation3 + $0x150] sm:$0xff] %vm1658, %v1605
      %1681 = vst.msk [vmem:[#allocation3 + $0x160] sm:$0xff] %vm1658, %v1607
      %1682 = vst.msk [vmem:[#allocation3 + $0x170] sm:$0xff] %vm1658, %v1609
      %1683 = vst.msk [vmem:[#allocation3 + $0x180] sm:$0xff] %vm1658, %v1611
      %1684 = vst.msk [vmem:[#allocation3 + $0x190] sm:$0xff] %vm1658, %v1613
      %1685 = vst.msk [vmem:[#allocation3 + $0x1a0] sm:$0xff] %vm1658, %v1615
      %1686 = vst.msk [vmem:[#allocation3 + $0x1b0] sm:$0xff] %vm1658, %v1617
      %1687 = vst.msk [vmem:[#allocation3 + $0x1c0] sm:$0xff] %vm1658, %v1619
      %1688 = vst.msk [vmem:[#allocation3 + $0x1d0] sm:$0xff] %vm1658, %v1621
      %1689 = vst.msk [vmem:[#allocation3 + $0x1e0] sm:$0xff] %vm1658, %v1623
      %1690 = vst.msk [vmem:[#allocation3 + $0x1f0] sm:$0xff] %vm1658, %v1625
      %v1691 = vld [vmem:[%s1015 + $0x1] sm:$0xff]
      %v1692 = vld [vmem:[%s1015 + $0x9] sm:$0xff]
      %v1693 = vld [vmem:[%s1015 + $0x19] sm:$0xff]
      %v1694 = vld [vmem:[%s1015 + $0x21] sm:$0xff]
      %v1695 = vld [vmem:[%s1015 + $0x31] sm:$0xff]
      %v1696 = vld [vmem:[%s1015 + $0x39] sm:$0xff]
      %v1697 = vld [vmem:[%s1015 + $0x49] sm:$0xff]
      %v1698 = vld [vmem:[%s1015 + $0x51] sm:$0xff]
      %v1699 = vld [vmem:[%s1015 + $0x61] sm:$0xff]
      %v1700 = vld [vmem:[%s1015 + $0x69] sm:$0xff]
      %v1701 = vld [vmem:[%s1015 + $0x79] sm:$0xff]
      %v1702 = vld [vmem:[%s1015 + $0x81] sm:$0xff]
      %v1703 = vld [vmem:[%s1015 + $0x91] sm:$0xff]
      %v1704 = vld [vmem:[%s1015 + $0x99] sm:$0xff]
      %v1705 = vld [vmem:[%s1015 + $0xa9] sm:$0xff]
      %v1706 = vld [vmem:[%s1015 + $0xb1] sm:$0xff]
      %v1707 = vld [vmem:[%s1015 + $0xc1] sm:$0xff]
      %v1708 = vld [vmem:[%s1015 + $0xc9] sm:$0xff]
      %v1709 = vld [vmem:[%s1015 + $0xd9] sm:$0xff]
      %v1710 = vld [vmem:[%s1015 + $0xe1] sm:$0xff]
      %v1711 = vld [vmem:[%s1015 + $0xf1] sm:$0xff]
      %v1712 = vld [vmem:[%s1015 + $0xf9] sm:$0xff]
      %v1713 = vld [vmem:[%s1015 + $0x109] sm:$0xff]
      %v1714 = vld [vmem:[%s1015 + $0x111] sm:$0xff]
      %v1715 = vld [vmem:[%s1015 + $0x121] sm:$0xff]
      %v1716 = vld [vmem:[%s1015 + $0x129] sm:$0xff]
      %v1717 = vld [vmem:[%s1015 + $0x139] sm:$0xff]
      %v1718 = vld [vmem:[%s1015 + $0x141] sm:$0xff]
      %v1719 = vld [vmem:[%s1015 + $0x151] sm:$0xff]
      %v1720 = vld [vmem:[%s1015 + $0x159] sm:$0xff]
      %v1721 = vld [vmem:[%s1015 + $0x169] sm:$0xff]
      %v1722 = vld [vmem:[%s1015 + $0x171] sm:$0xff]
      %1755 = vrot.lane.b32.xlu0 %v1691, 64
      %v1756 = vpop.permute.xlu0 %1755
      %1757 = vrot.lane.b32.xlu0 %v1692, 64
      %v1758 = vpop.permute.xlu0 %1757
      %1759 = vrot.lane.b32.xlu0 %v1693, 64
      %v1760 = vpop.permute.xlu0 %1759
      %1761 = vrot.lane.b32.xlu0 %v1694, 64
      %v1762 = vpop.permute.xlu0 %1761
      %1763 = vrot.lane.b32.xlu0 %v1695, 64
      %v1764 = vpop.permute.xlu0 %1763
      %1765 = vrot.lane.b32.xlu0 %v1696, 64
      %v1766 = vpop.permute.xlu0 %1765
      %1767 = vrot.lane.b32.xlu0 %v1697, 64
      %v1768 = vpop.permute.xlu0 %1767
      %1769 = vrot.lane.b32.xlu0 %v1698, 64
      %v1770 = vpop.permute.xlu0 %1769
      %1771 = vrot.lane.b32.xlu0 %v1699, 64
      %v1772 = vpop.permute.xlu0 %1771
      %1773 = vrot.lane.b32.xlu0 %v1700, 64
      %v1774 = vpop.permute.xlu0 %1773
      %1775 = vrot.lane.b32.xlu0 %v1701, 64
      %v1776 = vpop.permute.xlu0 %1775
      %1777 = vrot.lane.b32.xlu0 %v1702, 64
      %v1778 = vpop.permute.xlu0 %1777
      %1779 = vrot.lane.b32.xlu0 %v1703, 64
      %v1780 = vpop.permute.xlu0 %1779
      %1781 = vrot.lane.b32.xlu0 %v1704, 64
      %v1782 = vpop.permute.xlu0 %1781
      %1783 = vrot.lane.b32.xlu0 %v1705, 64
      %v1784 = vpop.permute.xlu0 %1783
      %1785 = vrot.lane.b32.xlu0 %v1706, 64
      %v1786 = vpop.permute.xlu0 %1785
      %1787 = vrot.lane.b32.xlu0 %v1707, 64
      %v1788 = vpop.permute.xlu0 %1787
      %1789 = vrot.lane.b32.xlu0 %v1708, 64
      %v1790 = vpop.permute.xlu0 %1789
      %1791 = vrot.lane.b32.xlu0 %v1709, 64
      %v1792 = vpop.permute.xlu0 %1791
      %1793 = vrot.lane.b32.xlu0 %v1710, 64
      %v1794 = vpop.permute.xlu0 %1793
      %1795 = vrot.lane.b32.xlu0 %v1711, 64
      %v1796 = vpop.permute.xlu0 %1795
      %1797 = vrot.lane.b32.xlu0 %v1712, 64
      %v1798 = vpop.permute.xlu0 %1797
      %1799 = vrot.lane.b32.xlu0 %v1713, 64
      %v1800 = vpop.permute.xlu0 %1799
      %1801 = vrot.lane.b32.xlu0 %v1714, 64
      %v1802 = vpop.permute.xlu0 %1801
      %1803 = vrot.lane.b32.xlu0 %v1715, 64
      %v1804 = vpop.permute.xlu0 %1803
      %1805 = vrot.lane.b32.xlu0 %v1716, 64
      %v1806 = vpop.permute.xlu0 %1805
      %1807 = vrot.lane.b32.xlu0 %v1717, 64
      %v1808 = vpop.permute.xlu0 %1807
      %1809 = vrot.lane.b32.xlu0 %v1718, 64
      %v1810 = vpop.permute.xlu0 %1809
      %1811 = vrot.lane.b32.xlu0 %v1719, 64
      %v1812 = vpop.permute.xlu0 %1811
      %1813 = vrot.lane.b32.xlu0 %v1720, 64
      %v1814 = vpop.permute.xlu0 %1813
      %1815 = vrot.lane.b32.xlu0 %v1721, 64
      %v1816 = vpop.permute.xlu0 %1815
      %1817 = vrot.lane.b32.xlu0 %v1722, 64
      %v1818 = vpop.permute.xlu0 %1817
      %vm1851 = vcmask 654848
      %1852 = vst.msk [vmem:[#allocation3] sm:$0xff] %vm1851, %v1756
      %1853 = vst.msk [vmem:[#allocation3 + $0x10] sm:$0xff] %vm1851, %v1758
      %1854 = vst.msk [vmem:[#allocation3 + $0x20] sm:$0xff] %vm1851, %v1760
      %1855 = vst.msk [vmem:[#allocation3 + $0x30] sm:$0xff] %vm1851, %v1762
      %1856 = vst.msk [vmem:[#allocation3 + $0x40] sm:$0xff] %vm1851, %v1764
      %1857 = vst.msk [vmem:[#allocation3 + $0x50] sm:$0xff] %vm1851, %v1766
      %1858 = vst.msk [vmem:[#allocation3 + $0x60] sm:$0xff] %vm1851, %v1768
      %1859 = vst.msk [vmem:[#allocation3 + $0x70] sm:$0xff] %vm1851, %v1770
      %1860 = vst.msk [vmem:[#allocation3 + $0x80] sm:$0xff] %vm1851, %v1772
      %1861 = vst.msk [vmem:[#allocation3 + $0x90] sm:$0xff] %vm1851, %v1774
      %1862 = vst.msk [vmem:[#allocation3 + $0xa0] sm:$0xff] %vm1851, %v1776
      %1863 = vst.msk [vmem:[#allocation3 + $0xb0] sm:$0xff] %vm1851, %v1778
      %1864 = vst.msk [vmem:[#allocation3 + $0xc0] sm:$0xff] %vm1851, %v1780
      %1865 = vst.msk [vmem:[#allocation3 + $0xd0] sm:$0xff] %vm1851, %v1782
      %1866 = vst.msk [vmem:[#allocation3 + $0xe0] sm:$0xff] %vm1851, %v1784
      %1867 = vst.msk [vmem:[#allocation3 + $0xf0] sm:$0xff] %vm1851, %v1786
      %1868 = vst.msk [vmem:[#allocation3 + $0x100] sm:$0xff] %vm1851, %v1788
      %1869 = vst.msk [vmem:[#allocation3 + $0x110] sm:$0xff] %vm1851, %v1790
      %1870 = vst.msk [vmem:[#allocation3 + $0x120] sm:$0xff] %vm1851, %v1792
      %1871 = vst.msk [vmem:[#allocation3 + $0x130] sm:$0xff] %vm1851, %v1794
      %1872 = vst.msk [vmem:[#allocation3 + $0x140] sm:$0xff] %vm1851, %v1796
      %1873 = vst.msk [vmem:[#allocation3 + $0x150] sm:$0xff] %vm1851, %v1798
      %1874 = vst.msk [vmem:[#allocation3 + $0x160] sm:$0xff] %vm1851, %v1800
      %1875 = vst.msk [vmem:[#allocation3 + $0x170] sm:$0xff] %vm1851, %v1802
      %1876 = vst.msk [vmem:[#allocation3 + $0x180] sm:$0xff] %vm1851, %v1804
      %1877 = vst.msk [vmem:[#allocation3 + $0x190] sm:$0xff] %vm1851, %v1806
      %1878 = vst.msk [vmem:[#allocation3 + $0x1a0] sm:$0xff] %vm1851, %v1808
      %1879 = vst.msk [vmem:[#allocation3 + $0x1b0] sm:$0xff] %vm1851, %v1810
      %1880 = vst.msk [vmem:[#allocation3 + $0x1c0] sm:$0xff] %vm1851, %v1812
      %1881 = vst.msk [vmem:[#allocation3 + $0x1d0] sm:$0xff] %vm1851, %v1814
      %1882 = vst.msk [vmem:[#allocation3 + $0x1e0] sm:$0xff] %vm1851, %v1816
      %1883 = vst.msk [vmem:[#allocation3 + $0x1f0] sm:$0xff] %vm1851, %v1818
      %v1884 = vld [vmem:[%s1015 + $0x2] sm:$0xff]
      %v1885 = vld [vmem:[%s1015 + $0xa] sm:$0xff]
      %v1886 = vld [vmem:[%s1015 + $0x1a] sm:$0xff]
      %v1887 = vld [vmem:[%s1015 + $0x22] sm:$0xff]
      %v1888 = vld [vmem:[%s1015 + $0x32] sm:$0xff]
      %v1889 = vld [vmem:[%s1015 + $0x3a] sm:$0xff]
      %v1890 = vld [vmem:[%s1015 + $0x4a] sm:$0xff]
      %v1891 = vld [vmem:[%s1015 + $0x52] sm:$0xff]
      %v1892 = vld [vmem:[%s1015 + $0x62] sm:$0xff]
      %v1893 = vld [vmem:[%s1015 + $0x6a] sm:$0xff]
      %v1894 = vld [vmem:[%s1015 + $0x7a] sm:$0xff]
      %v1895 = vld [vmem:[%s1015 + $0x82] sm:$0xff]
      %v1896 = vld [vmem:[%s1015 + $0x92] sm:$0xff]
      %v1897 = vld [vmem:[%s1015 + $0x9a] sm:$0xff]
      %v1898 = vld [vmem:[%s1015 + $0xaa] sm:$0xff]
      %v1899 = vld [vmem:[%s1015 + $0xb2] sm:$0xff]
      %v1900 = vld [vmem:[%s1015 + $0xc2] sm:$0xff]
      %v1901 = vld [vmem:[%s1015 + $0xca] sm:$0xff]
      %v1902 = vld [vmem:[%s1015 + $0xda] sm:$0xff]
      %v1903 = vld [vmem:[%s1015 + $0xe2] sm:$0xff]
      %v1904 = vld [vmem:[%s1015 + $0xf2] sm:$0xff]
      %v1905 = vld [vmem:[%s1015 + $0xfa] sm:$0xff]
      %v1906 = vld [vmem:[%s1015 + $0x10a] sm:$0xff]
      %v1907 = vld [vmem:[%s1015 + $0x112] sm:$0xff]
      %v1908 = vld [vmem:[%s1015 + $0x122] sm:$0xff]
      %v1909 = vld [vmem:[%s1015 + $0x12a] sm:$0xff]
      %v1910 = vld [vmem:[%s1015 + $0x13a] sm:$0xff]
      %v1911 = vld [vmem:[%s1015 + $0x142] sm:$0xff]
      %v1912 = vld [vmem:[%s1015 + $0x152] sm:$0xff]
      %v1913 = vld [vmem:[%s1015 + $0x15a] sm:$0xff]
      %v1914 = vld [vmem:[%s1015 + $0x16a] sm:$0xff]
      %v1915 = vld [vmem:[%s1015 + $0x172] sm:$0xff]
      %1948 = vrot.lane.b32.xlu0 %v1884, 80
      %v1949 = vpop.permute.xlu0 %1948
      %1950 = vrot.lane.b32.xlu0 %v1885, 80
      %v1951 = vpop.permute.xlu0 %1950
      %1952 = vrot.lane.b32.xlu0 %v1886, 80
      %v1953 = vpop.permute.xlu0 %1952
      %1954 = vrot.lane.b32.xlu0 %v1887, 80
      %v1955 = vpop.permute.xlu0 %1954
      %1956 = vrot.lane.b32.xlu0 %v1888, 80
      %v1957 = vpop.permute.xlu0 %1956
      %1958 = vrot.lane.b32.xlu0 %v1889, 80
      %v1959 = vpop.permute.xlu0 %1958
      %1960 = vrot.lane.b32.xlu0 %v1890, 80
      %v1961 = vpop.permute.xlu0 %1960
      %1962 = vrot.lane.b32.xlu0 %v1891, 80
      %v1963 = vpop.permute.xlu0 %1962
      %1964 = vrot.lane.b32.xlu0 %v1892, 80
      %v1965 = vpop.permute.xlu0 %1964
      %1966 = vrot.lane.b32.xlu0 %v1893, 80
      %v1967 = vpop.permute.xlu0 %1966
      %1968 = vrot.lane.b32.xlu0 %v1894, 80
      %v1969 = vpop.permute.xlu0 %1968
      %1970 = vrot.lane.b32.xlu0 %v1895, 80
      %v1971 = vpop.permute.xlu0 %1970
      %1972 = vrot.lane.b32.xlu0 %v1896, 80
      %v1973 = vpop.permute.xlu0 %1972
      %1974 = vrot.lane.b32.xlu0 %v1897, 80
      %v1975 = vpop.permute.xlu0 %1974
      %1976 = vrot.lane.b32.xlu0 %v1898, 80
      %v1977 = vpop.permute.xlu0 %1976
      %1978 = vrot.lane.b32.xlu0 %v1899, 80
      %v1979 = vpop.permute.xlu0 %1978
      %1980 = vrot.lane.b32.xlu0 %v1900, 80
      %v1981 = vpop.permute.xlu0 %1980
      %1982 = vrot.lane.b32.xlu0 %v1901, 80
      %v1983 = vpop.permute.xlu0 %1982
      %1984 = vrot.lane.b32.xlu0 %v1902, 80
      %v1985 = vpop.permute.xlu0 %1984
      %1986 = vrot.lane.b32.xlu0 %v1903, 80
      %v1987 = vpop.permute.xlu0 %1986
      %1988 = vrot.lane.b32.xlu0 %v1904, 80
      %v1989 = vpop.permute.xlu0 %1988
      %1990 = vrot.lane.b32.xlu0 %v1905, 80
      %v1991 = vpop.permute.xlu0 %1990
      %1992 = vrot.lane.b32.xlu0 %v1906, 80
      %v1993 = vpop.permute.xlu0 %1992
      %1994 = vrot.lane.b32.xlu0 %v1907, 80
      %v1995 = vpop.permute.xlu0 %1994
      %1996 = vrot.lane.b32.xlu0 %v1908, 80
      %v1997 = vpop.permute.xlu0 %1996
      %1998 = vrot.lane.b32.xlu0 %v1909, 80
      %v1999 = vpop.permute.xlu0 %1998
      %2000 = vrot.lane.b32.xlu0 %v1910, 80
      %v2001 = vpop.permute.xlu0 %2000
      %2002 = vrot.lane.b32.xlu0 %v1911, 80
      %v2003 = vpop.permute.xlu0 %2002
      %2004 = vrot.lane.b32.xlu0 %v1912, 80
      %v2005 = vpop.permute.xlu0 %2004
      %2006 = vrot.lane.b32.xlu0 %v1913, 80
      %v2007 = vpop.permute.xlu0 %2006
      %2008 = vrot.lane.b32.xlu0 %v1914, 80
      %v2009 = vpop.permute.xlu0 %2008
      %2010 = vrot.lane.b32.xlu0 %v1915, 80
      %v2011 = vpop.permute.xlu0 %2010
      %vm2044 = vcmask 786048
      %2045 = vst.msk [vmem:[#allocation3] sm:$0xff] %vm2044, %v1949
      %2046 = vst.msk [vmem:[#allocation3 + $0x10] sm:$0xff] %vm2044, %v1951
      %2047 = vst.msk [vmem:[#allocation3 + $0x20] sm:$0xff] %vm2044, %v1953
      %2048 = vst.msk [vmem:[#allocation3 + $0x30] sm:$0xff] %vm2044, %v1955
      %2049 = vst.msk [vmem:[#allocation3 + $0x40] sm:$0xff] %vm2044, %v1957
      %2050 = vst.msk [vmem:[#allocation3 + $0x50] sm:$0xff] %vm2044, %v1959
      %2051 = vst.msk [vmem:[#allocation3 + $0x60] sm:$0xff] %vm2044, %v1961
      %2052 = vst.msk [vmem:[#allocation3 + $0x70] sm:$0xff] %vm2044, %v1963
      %2053 = vst.msk [vmem:[#allocation3 + $0x80] sm:$0xff] %vm2044, %v1965
      %2054 = vst.msk [vmem:[#allocation3 + $0x90] sm:$0xff] %vm2044, %v1967
      %2055 = vst.msk [vmem:[#allocation3 + $0xa0] sm:$0xff] %vm2044, %v1969
      %2056 = vst.msk [vmem:[#allocation3 + $0xb0] sm:$0xff] %vm2044, %v1971
      %2057 = vst.msk [vmem:[#allocation3 + $0xc0] sm:$0xff] %vm2044, %v1973
      %2058 = vst.msk [vmem:[#allocation3 + $0xd0] sm:$0xff] %vm2044, %v1975
      %2059 = vst.msk [vmem:[#allocation3 + $0xe0] sm:$0xff] %vm2044, %v1977
      %2060 = vst.msk [vmem:[#allocation3 + $0xf0] sm:$0xff] %vm2044, %v1979
      %2061 = vst.msk [vmem:[#allocation3 + $0x100] sm:$0xff] %vm2044, %v1981
      %2062 = vst.msk [vmem:[#allocation3 + $0x110] sm:$0xff] %vm2044, %v1983
      %2063 = vst.msk [vmem:[#allocation3 + $0x120] sm:$0xff] %vm2044, %v1985
      %2064 = vst.msk [vmem:[#allocation3 + $0x130] sm:$0xff] %vm2044, %v1987
      %2065 = vst.msk [vmem:[#allocation3 + $0x140] sm:$0xff] %vm2044, %v1989
      %2066 = vst.msk [vmem:[#allocation3 + $0x150] sm:$0xff] %vm2044, %v1991
      %2067 = vst.msk [vmem:[#allocation3 + $0x160] sm:$0xff] %vm2044, %v1993
      %2068 = vst.msk [vmem:[#allocation3 + $0x170] sm:$0xff] %vm2044, %v1995
      %2069 = vst.msk [vmem:[#allocation3 + $0x180] sm:$0xff] %vm2044, %v1997
      %2070 = vst.msk [vmem:[#allocation3 + $0x190] sm:$0xff] %vm2044, %v1999
      %2071 = vst.msk [vmem:[#allocation3 + $0x1a0] sm:$0xff] %vm2044, %v2001
      %2072 = vst.msk [vmem:[#allocation3 + $0x1b0] sm:$0xff] %vm2044, %v2003
      %2073 = vst.msk [vmem:[#allocation3 + $0x1c0] sm:$0xff] %vm2044, %v2005
      %2074 = vst.msk [vmem:[#allocation3 + $0x1d0] sm:$0xff] %vm2044, %v2007
      %2075 = vst.msk [vmem:[#allocation3 + $0x1e0] sm:$0xff] %vm2044, %v2009
      %2076 = vst.msk [vmem:[#allocation3 + $0x1f0] sm:$0xff] %vm2044, %v2011
      %s2077 = scalar_lea.vmem [#allocation2], 48
      %v2078 = vld [vmem:[%s2077] sm:$0xff]
      %v2079 = vld [vmem:[%s2077 + $0x8] sm:$0xff]
      %v2080 = vld [vmem:[%s2077 + $0x18] sm:$0xff]
      %v2081 = vld [vmem:[%s2077 + $0x20] sm:$0xff]
      %v2082 = vld [vmem:[%s2077 + $0x30] sm:$0xff]
      %v2083 = vld [vmem:[%s2077 + $0x38] sm:$0xff]
      %v2084 = vld [vmem:[%s2077 + $0x48] sm:$0xff]
      %v2085 = vld [vmem:[%s2077 + $0x50] sm:$0xff]
      %v2086 = vld [vmem:[%s2077 + $0x60] sm:$0xff]
      %v2087 = vld [vmem:[%s2077 + $0x68] sm:$0xff]
      %v2088 = vld [vmem:[%s2077 + $0x78] sm:$0xff]
      %v2089 = vld [vmem:[%s2077 + $0x80] sm:$0xff]
      %v2090 = vld [vmem:[%s2077 + $0x90] sm:$0xff]
      %v2091 = vld [vmem:[%s2077 + $0x98] sm:$0xff]
      %v2092 = vld [vmem:[%s2077 + $0xa8] sm:$0xff]
      %v2093 = vld [vmem:[%s2077 + $0xb0] sm:$0xff]
      %v2094 = vld [vmem:[%s2077 + $0xc0] sm:$0xff]
      %v2095 = vld [vmem:[%s2077 + $0xc8] sm:$0xff]
      %v2096 = vld [vmem:[%s2077 + $0xd8] sm:$0xff]
      %v2097 = vld [vmem:[%s2077 + $0xe0] sm:$0xff]
      %v2098 = vld [vmem:[%s2077 + $0xf0] sm:$0xff]
      %v2099 = vld [vmem:[%s2077 + $0xf8] sm:$0xff]
      %v2100 = vld [vmem:[%s2077 + $0x108] sm:$0xff]
      %v2101 = vld [vmem:[%s2077 + $0x110] sm:$0xff]
      %v2102 = vld [vmem:[%s2077 + $0x120] sm:$0xff]
      %v2103 = vld [vmem:[%s2077 + $0x128] sm:$0xff]
      %v2104 = vld [vmem:[%s2077 + $0x138] sm:$0xff]
      %v2105 = vld [vmem:[%s2077 + $0x140] sm:$0xff]
      %v2106 = vld [vmem:[%s2077 + $0x150] sm:$0xff]
      %v2107 = vld [vmem:[%s2077 + $0x158] sm:$0xff]
      %v2108 = vld [vmem:[%s2077 + $0x168] sm:$0xff]
      %v2109 = vld [vmem:[%s2077 + $0x170] sm:$0xff]
      %2142 = vrot.lane.b32.xlu0 %v2078, 96
      %v2143 = vpop.permute.xlu0 %2142
      %2144 = vrot.lane.b32.xlu0 %v2079, 96
      %v2145 = vpop.permute.xlu0 %2144
      %2146 = vrot.lane.b32.xlu0 %v2080, 96
      %v2147 = vpop.permute.xlu0 %2146
      %2148 = vrot.lane.b32.xlu0 %v2081, 96
      %v2149 = vpop.permute.xlu0 %2148
      %2150 = vrot.lane.b32.xlu0 %v2082, 96
      %v2151 = vpop.permute.xlu0 %2150
      %2152 = vrot.lane.b32.xlu0 %v2083, 96
      %v2153 = vpop.permute.xlu0 %2152
      %2154 = vrot.lane.b32.xlu0 %v2084, 96
      %v2155 = vpop.permute.xlu0 %2154
      %2156 = vrot.lane.b32.xlu0 %v2085, 96
      %v2157 = vpop.permute.xlu0 %2156
      %2158 = vrot.lane.b32.xlu0 %v2086, 96
      %v2159 = vpop.permute.xlu0 %2158
      %2160 = vrot.lane.b32.xlu0 %v2087, 96
      %v2161 = vpop.permute.xlu0 %2160
      %2162 = vrot.lane.b32.xlu0 %v2088, 96
      %v2163 = vpop.permute.xlu0 %2162
      %2164 = vrot.lane.b32.xlu0 %v2089, 96
      %v2165 = vpop.permute.xlu0 %2164
      %2166 = vrot.lane.b32.xlu0 %v2090, 96
      %v2167 = vpop.permute.xlu0 %2166
      %2168 = vrot.lane.b32.xlu0 %v2091, 96
      %v2169 = vpop.permute.xlu0 %2168
      %2170 = vrot.lane.b32.xlu0 %v2092, 96
      %v2171 = vpop.permute.xlu0 %2170
      %2172 = vrot.lane.b32.xlu0 %v2093, 96
      %v2173 = vpop.permute.xlu0 %2172
      %2174 = vrot.lane.b32.xlu0 %v2094, 96
      %v2175 = vpop.permute.xlu0 %2174
      %2176 = vrot.lane.b32.xlu0 %v2095, 96
      %v2177 = vpop.permute.xlu0 %2176
      %2178 = vrot.lane.b32.xlu0 %v2096, 96
      %v2179 = vpop.permute.xlu0 %2178
      %2180 = vrot.lane.b32.xlu0 %v2097, 96
      %v2181 = vpop.permute.xlu0 %2180
      %2182 = vrot.lane.b32.xlu0 %v2098, 96
      %v2183 = vpop.permute.xlu0 %2182
      %2184 = vrot.lane.b32.xlu0 %v2099, 96
      %v2185 = vpop.permute.xlu0 %2184
      %2186 = vrot.lane.b32.xlu0 %v2100, 96
      %v2187 = vpop.permute.xlu0 %2186
      %2188 = vrot.lane.b32.xlu0 %v2101, 96
      %v2189 = vpop.permute.xlu0 %2188
      %2190 = vrot.lane.b32.xlu0 %v2102, 96
      %v2191 = vpop.permute.xlu0 %2190
      %2192 = vrot.lane.b32.xlu0 %v2103, 96
      %v2193 = vpop.permute.xlu0 %2192
      %2194 = vrot.lane.b32.xlu0 %v2104, 96
      %v2195 = vpop.permute.xlu0 %2194
      %2196 = vrot.lane.b32.xlu0 %v2105, 96
      %v2197 = vpop.permute.xlu0 %2196
      %2198 = vrot.lane.b32.xlu0 %v2106, 96
      %v2199 = vpop.permute.xlu0 %2198
      %2200 = vrot.lane.b32.xlu0 %v2107, 96
      %v2201 = vpop.permute.xlu0 %2200
      %2202 = vrot.lane.b32.xlu0 %v2108, 96
      %v2203 = vpop.permute.xlu0 %2202
      %2204 = vrot.lane.b32.xlu0 %v2109, 96
      %v2205 = vpop.permute.xlu0 %2204
      %vm2238 = vcmask 917248
      %2239 = vst.msk [vmem:[#allocation3] sm:$0xff] %vm2238, %v2143
      %2240 = vst.msk [vmem:[#allocation3 + $0x10] sm:$0xff] %vm2238, %v2145
      %2241 = vst.msk [vmem:[#allocation3 + $0x20] sm:$0xff] %vm2238, %v2147
      %2242 = vst.msk [vmem:[#allocation3 + $0x30] sm:$0xff] %vm2238, %v2149
      %2243 = vst.msk [vmem:[#allocation3 + $0x40] sm:$0xff] %vm2238, %v2151
      %2244 = vst.msk [vmem:[#allocation3 + $0x50] sm:$0xff] %vm2238, %v2153
      %2245 = vst.msk [vmem:[#allocation3 + $0x60] sm:$0xff] %vm2238, %v2155
      %2246 = vst.msk [vmem:[#allocation3 + $0x70] sm:$0xff] %vm2238, %v2157
      %2247 = vst.msk [vmem:[#allocation3 + $0x80] sm:$0xff] %vm2238, %v2159
      %2248 = vst.msk [vmem:[#allocation3 + $0x90] sm:$0xff] %vm2238, %v2161
      %2249 = vst.msk [vmem:[#allocation3 + $0xa0] sm:$0xff] %vm2238, %v2163
      %2250 = vst.msk [vmem:[#allocation3 + $0xb0] sm:$0xff] %vm2238, %v2165
      %2251 = vst.msk [vmem:[#allocation3 + $0xc0] sm:$0xff] %vm2238, %v2167
      %2252 = vst.msk [vmem:[#allocation3 + $0xd0] sm:$0xff] %vm2238, %v2169
      %2253 = vst.msk [vmem:[#allocation3 + $0xe0] sm:$0xff] %vm2238, %v2171
      %2254 = vst.msk [vmem:[#allocation3 + $0xf0] sm:$0xff] %vm2238, %v2173
      %2255 = vst.msk [vmem:[#allocation3 + $0x100] sm:$0xff] %vm2238, %v2175
      %2256 = vst.msk [vmem:[#allocation3 + $0x110] sm:$0xff] %vm2238, %v2177
      %2257 = vst.msk [vmem:[#allocation3 + $0x120] sm:$0xff] %vm2238, %v2179
      %2258 = vst.msk [vmem:[#allocation3 + $0x130] sm:$0xff] %vm2238, %v2181
      %2259 = vst.msk [vmem:[#allocation3 + $0x140] sm:$0xff] %vm2238, %v2183
      %2260 = vst.msk [vmem:[#allocation3 + $0x150] sm:$0xff] %vm2238, %v2185
      %2261 = vst.msk [vmem:[#allocation3 + $0x160] sm:$0xff] %vm2238, %v2187
      %2262 = vst.msk [vmem:[#allocation3 + $0x170] sm:$0xff] %vm2238, %v2189
      %2263 = vst.msk [vmem:[#allocation3 + $0x180] sm:$0xff] %vm2238, %v2191
      %2264 = vst.msk [vmem:[#allocation3 + $0x190] sm:$0xff] %vm2238, %v2193
      %2265 = vst.msk [vmem:[#allocation3 + $0x1a0] sm:$0xff] %vm2238, %v2195
      %2266 = vst.msk [vmem:[#allocation3 + $0x1b0] sm:$0xff] %vm2238, %v2197
      %2267 = vst.msk [vmem:[#allocation3 + $0x1c0] sm:$0xff] %vm2238, %v2199
      %2268 = vst.msk [vmem:[#allocation3 + $0x1d0] sm:$0xff] %vm2238, %v2201
      %2269 = vst.msk [vmem:[#allocation3 + $0x1e0] sm:$0xff] %vm2238, %v2203
      %2270 = vst.msk [vmem:[#allocation3 + $0x1f0] sm:$0xff] %vm2238, %v2205
      %v2271 = vld [vmem:[%s2077 + $0x1] sm:$0xff]
      %v2272 = vld [vmem:[%s2077 + $0x9] sm:$0xff]
      %v2273 = vld [vmem:[%s2077 + $0x19] sm:$0xff]
      %v2274 = vld [vmem:[%s2077 + $0x21] sm:$0xff]
      %v2275 = vld [vmem:[%s2077 + $0x31] sm:$0xff]
      %v2276 = vld [vmem:[%s2077 + $0x39] sm:$0xff]
      %v2277 = vld [vmem:[%s2077 + $0x49] sm:$0xff]
      %v2278 = vld [vmem:[%s2077 + $0x51] sm:$0xff]
      %v2279 = vld [vmem:[%s2077 + $0x61] sm:$0xff]
      %v2280 = vld [vmem:[%s2077 + $0x69] sm:$0xff]
      %v2281 = vld [vmem:[%s2077 + $0x79] sm:$0xff]
      %v2282 = vld [vmem:[%s2077 + $0x81] sm:$0xff]
      %v2283 = vld [vmem:[%s2077 + $0x91] sm:$0xff]
      %v2284 = vld [vmem:[%s2077 + $0x99] sm:$0xff]
      %v2285 = vld [vmem:[%s2077 + $0xa9] sm:$0xff]
      %v2286 = vld [vmem:[%s2077 + $0xb1] sm:$0xff]
      %v2287 = vld [vmem:[%s2077 + $0xc1] sm:$0xff]
      %v2288 = vld [vmem:[%s2077 + $0xc9] sm:$0xff]
      %v2289 = vld [vmem:[%s2077 + $0xd9] sm:$0xff]
      %v2290 = vld [vmem:[%s2077 + $0xe1] sm:$0xff]
      %v2291 = vld [vmem:[%s2077 + $0xf1] sm:$0xff]
      %v2292 = vld [vmem:[%s2077 + $0xf9] sm:$0xff]
      %v2293 = vld [vmem:[%s2077 + $0x109] sm:$0xff]
      %v2294 = vld [vmem:[%s2077 + $0x111] sm:$0xff]
      %v2295 = vld [vmem:[%s2077 + $0x121] sm:$0xff]
      %v2296 = vld [vmem:[%s2077 + $0x129] sm:$0xff]
      %v2297 = vld [vmem:[%s2077 + $0x139] sm:$0xff]
      %v2298 = vld [vmem:[%s2077 + $0x141] sm:$0xff]
      %v2299 = vld [vmem:[%s2077 + $0x151] sm:$0xff]
      %v2300 = vld [vmem:[%s2077 + $0x159] sm:$0xff]
      %v2301 = vld [vmem:[%s2077 + $0x169] sm:$0xff]
      %v2302 = vld [vmem:[%s2077 + $0x171] sm:$0xff]
      %2335 = vrot.lane.b32.xlu0 %v2271, 112
      %v2336 = vpop.permute.xlu0 %2335
      %2337 = vrot.lane.b32.xlu0 %v2272, 112
      %v2338 = vpop.permute.xlu0 %2337
      %2339 = vrot.lane.b32.xlu0 %v2273, 112
      %v2340 = vpop.permute.xlu0 %2339
      %2341 = vrot.lane.b32.xlu0 %v2274, 112
      %v2342 = vpop.permute.xlu0 %2341
      %2343 = vrot.lane.b32.xlu0 %v2275, 112
      %v2344 = vpop.permute.xlu0 %2343
      %2345 = vrot.lane.b32.xlu0 %v2276, 112
      %v2346 = vpop.permute.xlu0 %2345
      %2347 = vrot.lane.b32.xlu0 %v2277, 112
      %v2348 = vpop.permute.xlu0 %2347
      %2349 = vrot.lane.b32.xlu0 %v2278, 112
      %v2350 = vpop.permute.xlu0 %2349
      %2351 = vrot.lane.b32.xlu0 %v2279, 112
      %v2352 = vpop.permute.xlu0 %2351
      %2353 = vrot.lane.b32.xlu0 %v2280, 112
      %v2354 = vpop.permute.xlu0 %2353
      %2355 = vrot.lane.b32.xlu0 %v2281, 112
      %v2356 = vpop.permute.xlu0 %2355
      %2357 = vrot.lane.b32.xlu0 %v2282, 112
      %v2358 = vpop.permute.xlu0 %2357
      %2359 = vrot.lane.b32.xlu0 %v2283, 112
      %v2360 = vpop.permute.xlu0 %2359
      %2361 = vrot.lane.b32.xlu0 %v2284, 112
      %v2362 = vpop.permute.xlu0 %2361
      %2363 = vrot.lane.b32.xlu0 %v2285, 112
      %v2364 = vpop.permute.xlu0 %2363
      %2365 = vrot.lane.b32.xlu0 %v2286, 112
      %v2366 = vpop.permute.xlu0 %2365
      %2367 = vrot.lane.b32.xlu0 %v2287, 112
      %v2368 = vpop.permute.xlu0 %2367
      %2369 = vrot.lane.b32.xlu0 %v2288, 112
      %v2370 = vpop.permute.xlu0 %2369
      %2371 = vrot.lane.b32.xlu0 %v2289, 112
      %v2372 = vpop.permute.xlu0 %2371
      %2373 = vrot.lane.b32.xlu0 %v2290, 112
      %v2374 = vpop.permute.xlu0 %2373
      %2375 = vrot.lane.b32.xlu0 %v2291, 112
      %v2376 = vpop.permute.xlu0 %2375
      %2377 = vrot.lane.b32.xlu0 %v2292, 112
      %v2378 = vpop.permute.xlu0 %2377
      %2379 = vrot.lane.b32.xlu0 %v2293, 112
      %v2380 = vpop.permute.xlu0 %2379
      %2381 = vrot.lane.b32.xlu0 %v2294, 112
      %v2382 = vpop.permute.xlu0 %2381
      %2383 = vrot.lane.b32.xlu0 %v2295, 112
      %v2384 = vpop.permute.xlu0 %2383
      %2385 = vrot.lane.b32.xlu0 %v2296, 112
      %v2386 = vpop.permute.xlu0 %2385
      %2387 = vrot.lane.b32.xlu0 %v2297, 112
      %v2388 = vpop.permute.xlu0 %2387
      %2389 = vrot.lane.b32.xlu0 %v2298, 112
      %v2390 = vpop.permute.xlu0 %2389
      %2391 = vrot.lane.b32.xlu0 %v2299, 112
      %v2392 = vpop.permute.xlu0 %2391
      %2393 = vrot.lane.b32.xlu0 %v2300, 112
      %v2394 = vpop.permute.xlu0 %2393
      %2395 = vrot.lane.b32.xlu0 %v2301, 112
      %v2396 = vpop.permute.xlu0 %2395
      %2397 = vrot.lane.b32.xlu0 %v2302, 112
      %v2398 = vpop.permute.xlu0 %2397
      %vm2431 = vcmask 1048448
      %2432 = vst.msk [vmem:[#allocation3] sm:$0xff] %vm2431, %v2336
      %2433 = vst.msk [vmem:[#allocation3 + $0x10] sm:$0xff] %vm2431, %v2338
      %2434 = vst.msk [vmem:[#allocation3 + $0x20] sm:$0xff] %vm2431, %v2340
      %2435 = vst.msk [vmem:[#allocation3 + $0x30] sm:$0xff] %vm2431, %v2342
      %2436 = vst.msk [vmem:[#allocation3 + $0x40] sm:$0xff] %vm2431, %v2344
      %2437 = vst.msk [vmem:[#allocation3 + $0x50] sm:$0xff] %vm2431, %v2346
      %2438 = vst.msk [vmem:[#allocation3 + $0x60] sm:$0xff] %vm2431, %v2348
      %2439 = vst.msk [vmem:[#allocation3 + $0x70] sm:$0xff] %vm2431, %v2350
      %2440 = vst.msk [vmem:[#allocation3 + $0x80] sm:$0xff] %vm2431, %v2352
      %2441 = vst.msk [vmem:[#allocation3 + $0x90] sm:$0xff] %vm2431, %v2354
      %2442 = vst.msk [vmem:[#allocation3 + $0xa0] sm:$0xff] %vm2431, %v2356
      %2443 = vst.msk [vmem:[#allocation3 + $0xb0] sm:$0xff] %vm2431, %v2358
      %2444 = vst.msk [vmem:[#allocation3 + $0xc0] sm:$0xff] %vm2431, %v2360
      %2445 = vst.msk [vmem:[#allocation3 + $0xd0] sm:$0xff] %vm2431, %v2362
      %2446 = vst.msk [vmem:[#allocation3 + $0xe0] sm:$0xff] %vm2431, %v2364
      %2447 = vst.msk [vmem:[#allocation3 + $0xf0] sm:$0xff] %vm2431, %v2366
      %2448 = vst.msk [vmem:[#allocation3 + $0x100] sm:$0xff] %vm2431, %v2368
      %2449 = vst.msk [vmem:[#allocation3 + $0x110] sm:$0xff] %vm2431, %v2370
      %2450 = vst.msk [vmem:[#allocation3 + $0x120] sm:$0xff] %vm2431, %v2372
      %2451 = vst.msk [vmem:[#allocation3 + $0x130] sm:$0xff] %vm2431, %v2374
      %2452 = vst.msk [vmem:[#allocation3 + $0x140] sm:$0xff] %vm2431, %v2376
      %2453 = vst.msk [vmem:[#allocation3 + $0x150] sm:$0xff] %vm2431, %v2378
      %2454 = vst.msk [vmem:[#allocation3 + $0x160] sm:$0xff] %vm2431, %v2380
      %2455 = vst.msk [vmem:[#allocation3 + $0x170] sm:$0xff] %vm2431, %v2382
      %2456 = vst.msk [vmem:[#allocation3 + $0x180] sm:$0xff] %vm2431, %v2384
      %2457 = vst.msk [vmem:[#allocation3 + $0x190] sm:$0xff] %vm2431, %v2386
      %2458 = vst.msk [vmem:[#allocation3 + $0x1a0] sm:$0xff] %vm2431, %v2388
      %2459 = vst.msk [vmem:[#allocation3 + $0x1b0] sm:$0xff] %vm2431, %v2390
      %2460 = vst.msk [vmem:[#allocation3 + $0x1c0] sm:$0xff] %vm2431, %v2392
      %2461 = vst.msk [vmem:[#allocation3 + $0x1d0] sm:$0xff] %vm2431, %v2394
      %2462 = vst.msk [vmem:[#allocation3 + $0x1e0] sm:$0xff] %vm2431, %v2396
      %2463 = vst.msk [vmem:[#allocation3 + $0x1f0] sm:$0xff] %vm2431, %v2398
      %v2464 = vld [vmem:[%s2077 + $0x2] sm:$0xff]
      %v2465 = vld [vmem:[%s2077 + $0xa] sm:$0xff]
      %v2466 = vld [vmem:[%s2077 + $0x1a] sm:$0xff]
      %v2467 = vld [vmem:[%s2077 + $0x22] sm:$0xff]
      %v2468 = vld [vmem:[%s2077 + $0x32] sm:$0xff]
      %v2469 = vld [vmem:[%s2077 + $0x3a] sm:$0xff]
      %v2470 = vld [vmem:[%s2077 + $0x4a] sm:$0xff]
      %v2471 = vld [vmem:[%s2077 + $0x52] sm:$0xff]
      %v2472 = vld [vmem:[%s2077 + $0x62] sm:$0xff]
      %v2473 = vld [vmem:[%s2077 + $0x6a] sm:$0xff]
      %v2474 = vld [vmem:[%s2077 + $0x7a] sm:$0xff]
      %v2475 = vld [vmem:[%s2077 + $0x82] sm:$0xff]
      %v2476 = vld [vmem:[%s2077 + $0x92] sm:$0xff]
      %v2477 = vld [vmem:[%s2077 + $0x9a] sm:$0xff]
      %v2478 = vld [vmem:[%s2077 + $0xaa] sm:$0xff]
      %v2479 = vld [vmem:[%s2077 + $0xb2] sm:$0xff]
      %v2480 = vld [vmem:[%s2077 + $0xc2] sm:$0xff]
      %v2481 = vld [vmem:[%s2077 + $0xca] sm:$0xff]
      %v2482 = vld [vmem:[%s2077 + $0xda] sm:$0xff]
      %v2483 = vld [vmem:[%s2077 + $0xe2] sm:$0xff]
      %v2484 = vld [vmem:[%s2077 + $0xf2] sm:$0xff]
      %v2485 = vld [vmem:[%s2077 + $0xfa] sm:$0xff]
      %v2486 = vld [vmem:[%s2077 + $0x10a] sm:$0xff]
      %v2487 = vld [vmem:[%s2077 + $0x112] sm:$0xff]
      %v2488 = vld [vmem:[%s2077 + $0x122] sm:$0xff]
      %v2489 = vld [vmem:[%s2077 + $0x12a] sm:$0xff]
      %v2490 = vld [vmem:[%s2077 + $0x13a] sm:$0xff]
      %v2491 = vld [vmem:[%s2077 + $0x142] sm:$0xff]
      %v2492 = vld [vmem:[%s2077 + $0x152] sm:$0xff]
      %v2493 = vld [vmem:[%s2077 + $0x15a] sm:$0xff]
      %v2494 = vld [vmem:[%s2077 + $0x16a] sm:$0xff]
      %v2495 = vld [vmem:[%s2077 + $0x172] sm:$0xff]
      %2496 = vst.msk [vmem:[#allocation3 + $0x8] sm:$0xff] %vm333, %v2464
      %2497 = vst.msk [vmem:[#allocation3 + $0x18] sm:$0xff] %vm333, %v2465
      %2498 = vst.msk [vmem:[#allocation3 + $0x28] sm:$0xff] %vm333, %v2466
      %2499 = vst.msk [vmem:[#allocation3 + $0x38] sm:$0xff] %vm333, %v2467
      %2500 = vst.msk [vmem:[#allocation3 + $0x48] sm:$0xff] %vm333, %v2468
      %2501 = vst.msk [vmem:[#allocation3 + $0x58] sm:$0xff] %vm333, %v2469
      %2502 = vst.msk [vmem:[#allocation3 + $0x68] sm:$0xff] %vm333, %v2470
      %2503 = vst.msk [vmem:[#allocation3 + $0x78] sm:$0xff] %vm333, %v2471
      %2504 = vst.msk [vmem:[#allocation3 + $0x88] sm:$0xff] %vm333, %v2472
      %2505 = vst.msk [vmem:[#allocation3 + $0x98] sm:$0xff] %vm333, %v2473
      %2506 = vst.msk [vmem:[#allocation3 + $0xa8] sm:$0xff] %vm333, %v2474
      %2507 = vst.msk [vmem:[#allocation3 + $0xb8] sm:$0xff] %vm333, %v2475
      %2508 = vst.msk [vmem:[#allocation3 + $0xc8] sm:$0xff] %vm333, %v2476
      %2509 = vst.msk [vmem:[#allocation3 + $0xd8] sm:$0xff] %vm333, %v2477
      %2510 = vst.msk [vmem:[#allocation3 + $0xe8] sm:$0xff] %vm333, %v2478
      %2511 = vst.msk [vmem:[#allocation3 + $0xf8] sm:$0xff] %vm333, %v2479
      %2512 = vst.msk [vmem:[#allocation3 + $0x108] sm:$0xff] %vm333, %v2480
      %2513 = vst.msk [vmem:[#allocation3 + $0x118] sm:$0xff] %vm333, %v2481
      %2514 = vst.msk [vmem:[#allocation3 + $0x128] sm:$0xff] %vm333, %v2482
      %2515 = vst.msk [vmem:[#allocation3 + $0x138] sm:$0xff] %vm333, %v2483
      %2516 = vst.msk [vmem:[#allocation3 + $0x148] sm:$0xff] %vm333, %v2484
      %2517 = vst.msk [vmem:[#allocation3 + $0x158] sm:$0xff] %vm333, %v2485
      %2518 = vst.msk [vmem:[#allocation3 + $0x168] sm:$0xff] %vm333, %v2486
      %2519 = vst.msk [vmem:[#allocation3 + $0x178] sm:$0xff] %vm333, %v2487
      %2520 = vst.msk [vmem:[#allocation3 + $0x188] sm:$0xff] %vm333, %v2488
      %2521 = vst.msk [vmem:[#allocation3 + $0x198] sm:$0xff] %vm333, %v2489
      %2522 = vst.msk [vmem:[#allocation3 + $0x1a8] sm:$0xff] %vm333, %v2490
      %2523 = vst.msk [vmem:[#allocation3 + $0x1b8] sm:$0xff] %vm333, %v2491
      %2524 = vst.msk [vmem:[#allocation3 + $0x1c8] sm:$0xff] %vm333, %v2492
      %2525 = vst.msk [vmem:[#allocation3 + $0x1d8] sm:$0xff] %vm333, %v2493
      %2526 = vst.msk [vmem:[#allocation3 + $0x1e8] sm:$0xff] %vm333, %v2494
      %2527 = vst.msk [vmem:[#allocation3 + $0x1f8] sm:$0xff] %vm333, %v2495
      %v2528 = vld [vmem:[#allocation3] sm:$0xff]
      %v2529 = vld [vmem:[#allocation3 + $0x8] sm:$0xff]
      %v2530 = vld [vmem:[#allocation3 + $0x10] sm:$0xff]
      %v2531 = vld [vmem:[#allocation3 + $0x18] sm:$0xff]
      %v2532 = vld [vmem:[#allocation3 + $0x20] sm:$0xff]
      %v2533 = vld [vmem:[#allocation3 + $0x28] sm:$0xff]
      %v2534 = vld [vmem:[#allocation3 + $0x30] sm:$0xff]
      %v2535 = vld [vmem:[#allocation3 + $0x38] sm:$0xff]
      %v2536 = vld [vmem:[#allocation3 + $0x40] sm:$0xff]
      %v2537 = vld [vmem:[#allocation3 + $0x48] sm:$0xff]
      %v2538 = vld [vmem:[#allocation3 + $0x50] sm:$0xff]
      %v2539 = vld [vmem:[#allocation3 + $0x58] sm:$0xff]
      %v2540 = vld [vmem:[#allocation3 + $0x60] sm:$0xff]
      %v2541 = vld [vmem:[#allocation3 + $0x68] sm:$0xff]
      %v2542 = vld [vmem:[#allocation3 + $0x70] sm:$0xff]
      %v2543 = vld [vmem:[#allocation3 + $0x78] sm:$0xff]
      %v2544 = vld [vmem:[#allocation3 + $0x80] sm:$0xff]
      %v2545 = vld [vmem:[#allocation3 + $0x88] sm:$0xff]
      %v2546 = vld [vmem:[#allocation3 + $0x90] sm:$0xff]
      %v2547 = vld [vmem:[#allocation3 + $0x98] sm:$0xff]
      %v2548 = vld [vmem:[#allocation3 + $0xa0] sm:$0xff]
      %v2549 = vld [vmem:[#allocation3 + $0xa8] sm:$0xff]
      %v2550 = vld [vmem:[#allocation3 + $0xb0] sm:$0xff]
      %v2551 = vld [vmem:[#allocation3 + $0xb8] sm:$0xff]
      %v2552 = vld [vmem:[#allocation3 + $0xc0] sm:$0xff]
      %v2553 = vld [vmem:[#allocation3 + $0xc8] sm:$0xff]
      %v2554 = vld [vmem:[#allocation3 + $0xd0] sm:$0xff]
      %v2555 = vld [vmem:[#allocation3 + $0xd8] sm:$0xff]
      %v2556 = vld [vmem:[#allocation3 + $0xe0] sm:$0xff]
      %v2557 = vld [vmem:[#allocation3 + $0xe8] sm:$0xff]
      %v2558 = vld [vmem:[#allocation3 + $0xf0] sm:$0xff]
      %v2559 = vld [vmem:[#allocation3 + $0xf8] sm:$0xff]
      %v2560 = vld [vmem:[#allocation3 + $0x100] sm:$0xff]
      %v2561 = vld [vmem:[#allocation3 + $0x108] sm:$0xff]
      %v2562 = vld [vmem:[#allocation3 + $0x110] sm:$0xff]
      %v2563 = vld [vmem:[#allocation3 + $0x118] sm:$0xff]
      %v2564 = vld [vmem:[#allocation3 + $0x120] sm:$0xff]
      %v2565 = vld [vmem:[#allocation3 + $0x128] sm:$0xff]
      %v2566 = vld [vmem:[#allocation3 + $0x130] sm:$0xff]
      %v2567 = vld [vmem:[#allocation3 + $0x138] sm:$0xff]
      %v2568 = vld [vmem:[#allocation3 + $0x140] sm:$0xff]
      %v2569 = vld [vmem:[#allocation3 + $0x148] sm:$0xff]
      %v2570 = vld [vmem:[#allocation3 + $0x150] sm:$0xff]
      %v2571 = vld [vmem:[#allocation3 + $0x158] sm:$0xff]
      %v2572 = vld [vmem:[#allocation3 + $0x160] sm:$0xff]
      %v2573 = vld [vmem:[#allocation3 + $0x168] sm:$0xff]
      %v2574 = vld [vmem:[#allocation3 + $0x170] sm:$0xff]
      %v2575 = vld [vmem:[#allocation3 + $0x178] sm:$0xff]
      %v2576 = vld [vmem:[#allocation3 + $0x180] sm:$0xff]
      %v2577 = vld [vmem:[#allocation3 + $0x188] sm:$0xff]
      %v2578 = vld [vmem:[#allocation3 + $0x190] sm:$0xff]
      %v2579 = vld [vmem:[#allocation3 + $0x198] sm:$0xff]
      %v2580 = vld [vmem:[#allocation3 + $0x1a0] sm:$0xff]
      %v2581 = vld [vmem:[#allocation3 + $0x1a8] sm:$0xff]
      %v2582 = vld [vmem:[#allocation3 + $0x1b0] sm:$0xff]
      %v2583 = vld [vmem:[#allocation3 + $0x1b8] sm:$0xff]
      %v2584 = vld [vmem:[#allocation3 + $0x1c0] sm:$0xff]
      %v2585 = vld [vmem:[#allocation3 + $0x1c8] sm:$0xff]
      %v2586 = vld [vmem:[#allocation3 + $0x1d0] sm:$0xff]
      %v2587 = vld [vmem:[#allocation3 + $0x1d8] sm:$0xff]
      %v2588 = vld [vmem:[#allocation3 + $0x1e0] sm:$0xff]
      %v2589 = vld [vmem:[#allocation3 + $0x1e8] sm:$0xff]
      %v2590 = vld [vmem:[#allocation3 + $0x1f0] sm:$0xff]
      %v2591 = vld [vmem:[#allocation3 + $0x1f8] sm:$0xff]
      %v2592 = vld [vmem:[%s1] sm:$0xff]
      %v2593 = vld [vmem:[%s1 + $0x8] sm:$0xff]
      %v2594 = vld [vmem:[%s1 + $0x10] sm:$0xff]
      %v2595 = vld [vmem:[%s1 + $0x18] sm:$0xff]
      %v2596 = vld [vmem:[%s1 + $0x20] sm:$0xff]
      %v2597 = vld [vmem:[%s1 + $0x28] sm:$0xff]
      %v2598 = vld [vmem:[%s1 + $0x30] sm:$0xff]
      %v2599 = vld [vmem:[%s1 + $0x38] sm:$0xff]
      %v2600 = vld [vmem:[%s1 + $0x40] sm:$0xff]
      %v2601 = vld [vmem:[%s1 + $0x48] sm:$0xff]
      %v2602 = vld [vmem:[%s1 + $0x50] sm:$0xff]
      %v2603 = vld [vmem:[%s1 + $0x58] sm:$0xff]
      %v2604 = vld [vmem:[%s1 + $0x60] sm:$0xff]
      %v2605 = vld [vmem:[%s1 + $0x68] sm:$0xff]
      %v2606 = vld [vmem:[%s1 + $0x70] sm:$0xff]
      %v2607 = vld [vmem:[%s1 + $0x78] sm:$0xff]
      %v2608 = vld [vmem:[%s1 + $0x80] sm:$0xff]
      %v2609 = vld [vmem:[%s1 + $0x88] sm:$0xff]
      %v2610 = vld [vmem:[%s2] sm:$0x1]
      %v2612 = vlaneseq
      %v2613 = vshrl.u32 %v2612, 7
      %v2614 = vsub.s32 0, %v2613
      %v2615 = vrot.slane %v2610, %v2614
      %v2618 = vsel %vm333, %v2529, 0
      %v2621 = vsel %vm333, %v2531, 0
      %v2624 = vsel %vm333, %v2533, 0
      %v2627 = vsel %vm333, %v2535, 0
      %v2630 = vsel %vm333, %v2537, 0
      %v2633 = vsel %vm333, %v2539, 0
      %v2636 = vsel %vm333, %v2541, 0
      %v2639 = vsel %vm333, %v2543, 0
      %v2642 = vsel %vm333, %v2545, 0
      %v2645 = vsel %vm333, %v2547, 0
      %v2648 = vsel %vm333, %v2549, 0
      %v2651 = vsel %vm333, %v2551, 0
      %v2654 = vsel %vm333, %v2553, 0
      %v2657 = vsel %vm333, %v2555, 0
      %v2660 = vsel %vm333, %v2557, 0
      %v2663 = vsel %vm333, %v2559, 0
      %v2666 = vsel %vm333, %v2561, 0
      %v2669 = vsel %vm333, %v2563, 0
      %v2672 = vsel %vm333, %v2565, 0
      %v2675 = vsel %vm333, %v2567, 0
      %v2678 = vsel %vm333, %v2569, 0
      %v2681 = vsel %vm333, %v2571, 0
      %v2684 = vsel %vm333, %v2573, 0
      %v2687 = vsel %vm333, %v2575, 0
      %v2690 = vsel %vm333, %v2577, 0
      %v2693 = vsel %vm333, %v2579, 0
      %v2696 = vsel %vm333, %v2581, 0
      %v2699 = vsel %vm333, %v2583, 0
      %v2702 = vsel %vm333, %v2585, 0
      %v2705 = vsel %vm333, %v2587, 0
      %v2708 = vsel %vm333, %v2589, 0
      %v2711 = vsel %vm333, %v2591, 0
      %2713 = vmatprep.subr.mxu0 0.0
      %2714 = vmatpush1.msra.mxu0 %v2607
      %2715 = vmatprep.subr.mxu0 0.0
      %2716 = vmatpush1.msra.mxu0 %v2606
      %2717 = vmatprep.subr.mxu0 0.0
      %2718 = vmatpush1.msra.mxu0 %v2605
      %2719 = vmatprep.subr.mxu0 0.0
      %2720 = vmatpush1.msra.mxu0 %v2604
      %2721 = vmatprep.subr.mxu0 0.0
      %2722 = vmatpush1.msra.mxu0 %v2603
      %2723 = vmatprep.subr.mxu0 0.0
      %2724 = vmatpush1.msra.mxu0 %v2602
      %2725 = vmatprep.subr.mxu0 0.0
      %2726 = vmatpush1.msra.mxu0 %v2601
      %2727 = vmatprep.subr.mxu0 0.0
      %2728 = vmatpush1.msra.mxu0 %v2600
      %2729 = vmatprep.subr.mxu0 0.0
      %2730 = vmatpush1.msra.mxu0 %v2599
      %2731 = vmatprep.subr.mxu0 0.0
      %2732 = vmatpush1.msra.mxu0 %v2598
      %2733 = vmatprep.subr.mxu0 0.0
      %2734 = vmatpush1.msra.mxu0 %v2597
      %2735 = vmatprep.subr.mxu0 0.0
      %2736 = vmatpush1.msra.mxu0 %v2596
      %2737 = vmatprep.subr.mxu0 0.0
      %2738 = vmatpush1.msra.mxu0 %v2595
      %2739 = vmatprep.subr.mxu0 0.0
      %2740 = vmatpush1.msra.mxu0 %v2594
      %2741 = vmatprep.subr.mxu0 0.0
      %2742 = vmatpush1.msra.mxu0 %v2593
      %2743 = vmatprep.subr.mxu0 0.0
      %2744 = vmatpush1.msra.mxu0 %v2592
      %2745 = vmatprep.subr.mxu0 0.0
      %2746 = vmatpush2.msra.mxu0 0.0
      %2747 = vmatprep.subr.mxu0 0.0
      %2748 = vmatpush2.msra.mxu0 0.0
      %2749 = vmatprep.subr.mxu0 0.0
      %2750 = vmatpush2.msra.mxu0 0.0
      %2751 = vmatprep.subr.mxu0 0.0
      %2752 = vmatpush2.msra.mxu0 0.0
      %2753 = vmatprep.subr.mxu0 0.0
      %2754 = vmatpush2.msra.mxu0 0.0
      %2755 = vmatprep.subr.mxu0 0.0
      %2756 = vmatpush2.msra.mxu0 0.0
      %2757 = vmatprep.subr.mxu0 0.0
      %2758 = vmatpush2.msra.mxu0 0.0
      %2759 = vmatprep.subr.mxu0 0.0
      %2760 = vmatpush2.msra.mxu0 0.0
      %2761 = vmatprep.subr.mxu0 0.0
      %2762 = vmatpush2.msra.mxu0 0.0
      %2763 = vmatprep.subr.mxu0 0.0
      %2764 = vmatpush2.msra.mxu0 0.0
      %2765 = vmatprep.subr.mxu0 0.0
      %2766 = vmatpush2.msra.mxu0 0.0
      %2767 = vmatprep.subr.mxu0 0.0
      %2768 = vmatpush2.msra.mxu0 0.0
      %2769 = vmatprep.subr.mxu0 0.0
      %2770 = vmatpush2.msra.mxu0 0.0
      %2771 = vmatprep.subr.mxu0 0.0
      %2772 = vmatpush2.msra.mxu0 0.0
      %2773 = vmatprep.subr.mxu0 0.0
      %2774 = vmatpush2.msra.mxu0 %v2609
      %2775 = vmatprep.subr.mxu0 0.0
      %2776 = vmatpush2.msra.mxu0 %v2608
      %2777 = vmatprep.mubr.f32.mxu0 %v2618
      %2778 = vmatmul.mubr.f32.gmra.mxu0 %v2528
      %v2779 = vpop.f32.mrf.mxu0
      %v2780 = vadd.f32 %v2615, %v2779
      %v2781 = vpop.f32.mrf.mxu0
      %2782 = vmatprep.mubr.f32.mxu0 %v2621
      %2783 = vmatmul.mubr.f32.gmra.mxu0 %v2530
      %v2784 = vpop.f32.mrf.mxu0
      %v2785 = vadd.f32 %v2615, %v2784
      %v2786 = vpop.f32.mrf.mxu0
      %2787 = vmatprep.mubr.f32.mxu0 %v2624
      %2788 = vmatmul.mubr.f32.gmra.mxu0 %v2532
      %v2789 = vpop.f32.mrf.mxu0
      %v2790 = vadd.f32 %v2615, %v2789
      %v2791 = vpop.f32.mrf.mxu0
      %2792 = vmatprep.mubr.f32.mxu0 %v2627
      %2793 = vmatmul.mubr.f32.gmra.mxu0 %v2534
      %v2794 = vpop.f32.mrf.mxu0
      %v2795 = vadd.f32 %v2615, %v2794
      %v2796 = vpop.f32.mrf.mxu0
      %2797 = vmatprep.mubr.f32.mxu0 %v2630
      %2798 = vmatmul.mubr.f32.gmra.mxu0 %v2536
      %v2799 = vpop.f32.mrf.mxu0
      %v2800 = vadd.f32 %v2615, %v2799
      %v2801 = vpop.f32.mrf.mxu0
      %2802 = vmatprep.mubr.f32.mxu0 %v2633
      %2803 = vmatmul.mubr.f32.gmra.mxu0 %v2538
      %v2804 = vpop.f32.mrf.mxu0
      %v2805 = vadd.f32 %v2615, %v2804
      %v2806 = vpop.f32.mrf.mxu0
      %2807 = vmatprep.mubr.f32.mxu0 %v2636
      %2808 = vmatmul.mubr.f32.gmra.mxu0 %v2540
      %v2809 = vpop.f32.mrf.mxu0
      %v2810 = vadd.f32 %v2615, %v2809
      %v2811 = vpop.f32.mrf.mxu0
      %2812 = vmatprep.mubr.f32.mxu0 %v2639
      %2813 = vmatmul.mubr.f32.gmra.mxu0 %v2542
      %v2814 = vpop.f32.mrf.mxu0
      %v2815 = vadd.f32 %v2615, %v2814
      %v2816 = vpop.f32.mrf.mxu0
      %2817 = vmatprep.mubr.f32.mxu0 %v2642
      %2818 = vmatmul.mubr.f32.gmra.mxu0 %v2544
      %v2819 = vpop.f32.mrf.mxu0
      %v2820 = vadd.f32 %v2615, %v2819
      %v2821 = vpop.f32.mrf.mxu0
      %2822 = vmatprep.mubr.f32.mxu0 %v2645
      %2823 = vmatmul.mubr.f32.gmra.mxu0 %v2546
      %v2824 = vpop.f32.mrf.mxu0
      %v2825 = vadd.f32 %v2615, %v2824
      %v2826 = vpop.f32.mrf.mxu0
      %2827 = vmatprep.mubr.f32.mxu0 %v2648
      %2828 = vmatmul.mubr.f32.gmra.mxu0 %v2548
      %v2829 = vpop.f32.mrf.mxu0
      %v2830 = vadd.f32 %v2615, %v2829
      %v2831 = vpop.f32.mrf.mxu0
      %2832 = vmatprep.mubr.f32.mxu0 %v2651
      %2833 = vmatmul.mubr.f32.gmra.mxu0 %v2550
      %v2834 = vpop.f32.mrf.mxu0
      %v2835 = vadd.f32 %v2615, %v2834
      %v2836 = vpop.f32.mrf.mxu0
      %2837 = vmatprep.mubr.f32.mxu0 %v2654
      %2838 = vmatmul.mubr.f32.gmra.mxu0 %v2552
      %v2839 = vpop.f32.mrf.mxu0
      %v2840 = vadd.f32 %v2615, %v2839
      %v2841 = vpop.f32.mrf.mxu0
      %2842 = vmatprep.mubr.f32.mxu0 %v2657
      %2843 = vmatmul.mubr.f32.gmra.mxu0 %v2554
      %v2844 = vpop.f32.mrf.mxu0
      %v2845 = vadd.f32 %v2615, %v2844
      %v2846 = vpop.f32.mrf.mxu0
      %2847 = vmatprep.mubr.f32.mxu0 %v2660
      %2848 = vmatmul.mubr.f32.gmra.mxu0 %v2556
      %v2849 = vpop.f32.mrf.mxu0
      %v2850 = vadd.f32 %v2615, %v2849
      %v2851 = vpop.f32.mrf.mxu0
      %2852 = vmatprep.mubr.f32.mxu0 %v2663
      %2853 = vmatmul.mubr.f32.gmra.mxu0 %v2558
      %v2854 = vpop.f32.mrf.mxu0
      %v2855 = vadd.f32 %v2615, %v2854
      %v2856 = vpop.f32.mrf.mxu0
      %2857 = vmatprep.mubr.f32.mxu0 %v2666
      %2858 = vmatmul.mubr.f32.gmra.mxu0 %v2560
      %v2859 = vpop.f32.mrf.mxu0
      %v2860 = vadd.f32 %v2615, %v2859
      %v2861 = vpop.f32.mrf.mxu0
      %2862 = vmatprep.mubr.f32.mxu0 %v2669
      %2863 = vmatmul.mubr.f32.gmra.mxu0 %v2562
      %v2864 = vpop.f32.mrf.mxu0
      %v2865 = vadd.f32 %v2615, %v2864
      %v2866 = vpop.f32.mrf.mxu0
      %2867 = vmatprep.mubr.f32.mxu0 %v2672
      %2868 = vmatmul.mubr.f32.gmra.mxu0 %v2564
      %v2869 = vpop.f32.mrf.mxu0
      %v2870 = vadd.f32 %v2615, %v2869
      %v2871 = vpop.f32.mrf.mxu0
      %2872 = vmatprep.mubr.f32.mxu0 %v2675
      %2873 = vmatmul.mubr.f32.gmra.mxu0 %v2566
      %v2874 = vpop.f32.mrf.mxu0
      %v2875 = vadd.f32 %v2615, %v2874
      %v2876 = vpop.f32.mrf.mxu0
      %2877 = vmatprep.mubr.f32.mxu0 %v2678
      %2878 = vmatmul.mubr.f32.gmra.mxu0 %v2568
      %v2879 = vpop.f32.mrf.mxu0
      %v2880 = vadd.f32 %v2615, %v2879
      %v2881 = vpop.f32.mrf.mxu0
      %2882 = vmatprep.mubr.f32.mxu0 %v2681
      %2883 = vmatmul.mubr.f32.gmra.mxu0 %v2570
      %v2884 = vpop.f32.mrf.mxu0
      %v2885 = vadd.f32 %v2615, %v2884
      %v2886 = vpop.f32.mrf.mxu0
      %2887 = vmatprep.mubr.f32.mxu0 %v2684
      %2888 = vmatmul.mubr.f32.gmra.mxu0 %v2572
      %v2889 = vpop.f32.mrf.mxu0
      %v2890 = vadd.f32 %v2615, %v2889
      %v2891 = vpop.f32.mrf.mxu0
      %2892 = vmatprep.mubr.f32.mxu0 %v2687
      %2893 = vmatmul.mubr.f32.gmra.mxu0 %v2574
      %v2894 = vpop.f32.mrf.mxu0
      %v2895 = vadd.f32 %v2615, %v2894
      %v2896 = vpop.f32.mrf.mxu0
      %2897 = vmatprep.mubr.f32.mxu0 %v2690
      %2898 = vmatmul.mubr.f32.gmra.mxu0 %v2576
      %v2899 = vpop.f32.mrf.mxu0
      %v2900 = vadd.f32 %v2615, %v2899
      %v2901 = vpop.f32.mrf.mxu0
      %2902 = vmatprep.mubr.f32.mxu0 %v2693
      %2903 = vmatmul.mubr.f32.gmra.mxu0 %v2578
      %v2904 = vpop.f32.mrf.mxu0
      %v2905 = vadd.f32 %v2615, %v2904
      %v2906 = vpop.f32.mrf.mxu0
      %2907 = vmatprep.mubr.f32.mxu0 %v2696
      %2908 = vmatmul.mubr.f32.gmra.mxu0 %v2580
      %v2909 = vpop.f32.mrf.mxu0
      %v2910 = vadd.f32 %v2615, %v2909
      %v2911 = vpop.f32.mrf.mxu0
      %2912 = vmatprep.mubr.f32.mxu0 %v2699
      %2913 = vmatmul.mubr.f32.gmra.mxu0 %v2582
      %v2914 = vpop.f32.mrf.mxu0
      %v2915 = vadd.f32 %v2615, %v2914
      %v2916 = vpop.f32.mrf.mxu0
      %2917 = vmatprep.mubr.f32.mxu0 %v2702
      %2918 = vmatmul.mubr.f32.gmra.mxu0 %v2584
      %v2919 = vpop.f32.mrf.mxu0
      %v2920 = vadd.f32 %v2615, %v2919
      %v2921 = vpop.f32.mrf.mxu0
      %2922 = vmatprep.mubr.f32.mxu0 %v2705
      %2923 = vmatmul.mubr.f32.gmra.mxu0 %v2586
      %v2924 = vpop.f32.mrf.mxu0
      %v2925 = vadd.f32 %v2615, %v2924
      %v2926 = vpop.f32.mrf.mxu0
      %2927 = vmatprep.mubr.f32.mxu0 %v2708
      %2928 = vmatmul.mubr.f32.gmra.mxu0 %v2588
      %v2929 = vpop.f32.mrf.mxu0
      %v2930 = vadd.f32 %v2615, %v2929
      %v2931 = vpop.f32.mrf.mxu0
      %2932 = vmatprep.mubr.f32.mxu0 %v2711
      %2933 = vmatmul.mubr.f32.gmra.mxu0 %v2590
      %v2934 = vpop.f32.mrf.mxu0
      %v2935 = vadd.f32 %v2615, %v2934
      %v2936 = vpop.f32.mrf.mxu0
      %2937 = vdwg.mxu0
      %v2938 = vmax.f32 %v2780, 0.0
      %v2939 = vmax.f32 %v2785, 0.0
      %v2940 = vmax.f32 %v2790, 0.0
      %v2941 = vmax.f32 %v2795, 0.0
      %v2942 = vmax.f32 %v2800, 0.0
      %v2943 = vmax.f32 %v2805, 0.0
      %v2944 = vmax.f32 %v2810, 0.0
      %v2945 = vmax.f32 %v2815, 0.0
      %v2946 = vmax.f32 %v2820, 0.0
      %v2947 = vmax.f32 %v2825, 0.0
      %v2948 = vmax.f32 %v2830, 0.0
      %v2949 = vmax.f32 %v2835, 0.0
      %v2950 = vmax.f32 %v2840, 0.0
      %v2951 = vmax.f32 %v2845, 0.0
      %v2952 = vmax.f32 %v2850, 0.0
      %v2953 = vmax.f32 %v2855, 0.0
      %v2954 = vmax.f32 %v2860, 0.0
      %v2955 = vmax.f32 %v2865, 0.0
      %v2956 = vmax.f32 %v2870, 0.0
      %v2957 = vmax.f32 %v2875, 0.0
      %v2958 = vmax.f32 %v2880, 0.0
      %v2959 = vmax.f32 %v2885, 0.0
      %v2960 = vmax.f32 %v2890, 0.0
      %v2961 = vmax.f32 %v2895, 0.0
      %v2962 = vmax.f32 %v2900, 0.0
      %v2963 = vmax.f32 %v2905, 0.0
      %v2964 = vmax.f32 %v2910, 0.0
      %v2965 = vmax.f32 %v2915, 0.0
      %v2966 = vmax.f32 %v2920, 0.0
      %v2967 = vmax.f32 %v2925, 0.0
      %v2968 = vmax.f32 %v2930, 0.0
      %v2969 = vmax.f32 %v2935, 0.0
      %2970 = vst.msk [vmem:[%s1015 + $0x1] sm:$0xff] %vm333, %v2938
      %2971 = vst.msk [vmem:[%s1015 + $0x9] sm:$0xff] %vm333, %v2939
      %2972 = vst.msk [vmem:[%s1015 + $0x19] sm:$0xff] %vm333, %v2940
      %2973 = vst.msk [vmem:[%s1015 + $0x21] sm:$0xff] %vm333, %v2941
      %2974 = vst.msk [vmem:[%s1015 + $0x31] sm:$0xff] %vm333, %v2942
      %2975 = vst.msk [vmem:[%s1015 + $0x39] sm:$0xff] %vm333, %v2943
      %2976 = vst.msk [vmem:[%s1015 + $0x49] sm:$0xff] %vm333, %v2944
      %2977 = vst.msk [vmem:[%s1015 + $0x51] sm:$0xff] %vm333, %v2945
      %2978 = vst.msk [vmem:[%s1015 + $0x61] sm:$0xff] %vm333, %v2946
      %2979 = vst.msk [vmem:[%s1015 + $0x69] sm:$0xff] %vm333, %v2947
      %2980 = vst.msk [vmem:[%s1015 + $0x79] sm:$0xff] %vm333, %v2948
      %2981 = vst.msk [vmem:[%s1015 + $0x81] sm:$0xff] %vm333, %v2949
      %2982 = vst.msk [vmem:[%s1015 + $0x91] sm:$0xff] %vm333, %v2950
      %2983 = vst.msk [vmem:[%s1015 + $0x99] sm:$0xff] %vm333, %v2951
      %2984 = vst.msk [vmem:[%s1015 + $0xa9] sm:$0xff] %vm333, %v2952
      %2985 = vst.msk [vmem:[%s1015 + $0xb1] sm:$0xff] %vm333, %v2953
      %2986 = vst.msk [vmem:[%s1015 + $0xc1] sm:$0xff] %vm333, %v2954
      %2987 = vst.msk [vmem:[%s1015 + $0xc9] sm:$0xff] %vm333, %v2955
      %2988 = vst.msk [vmem:[%s1015 + $0xd9] sm:$0xff] %vm333, %v2956
      %2989 = vst.msk [vmem:[%s1015 + $0xe1] sm:$0xff] %vm333, %v2957
      %2990 = vst.msk [vmem:[%s1015 + $0xf1] sm:$0xff] %vm333, %v2958
      %2991 = vst.msk [vmem:[%s1015 + $0xf9] sm:$0xff] %vm333, %v2959
      %2992 = vst.msk [vmem:[%s1015 + $0x109] sm:$0xff] %vm333, %v2960
      %2993 = vst.msk [vmem:[%s1015 + $0x111] sm:$0xff] %vm333, %v2961
      %2994 = vst.msk [vmem:[%s1015 + $0x121] sm:$0xff] %vm333, %v2962
      %2995 = vst.msk [vmem:[%s1015 + $0x129] sm:$0xff] %vm333, %v2963
      %2996 = vst.msk [vmem:[%s1015 + $0x139] sm:$0xff] %vm333, %v2964
      %2997 = vst.msk [vmem:[%s1015 + $0x141] sm:$0xff] %vm333, %v2965
      %2998 = vst.msk [vmem:[%s1015 + $0x151] sm:$0xff] %vm333, %v2966
      %2999 = vst.msk [vmem:[%s1015 + $0x159] sm:$0xff] %vm333, %v2967
      %3000 = vst.msk [vmem:[%s1015 + $0x169] sm:$0xff] %vm333, %v2968
      %3001 = vst.msk [vmem:[%s1015 + $0x171] sm:$0xff] %vm333, %v2969
      %v3002 = vld [vmem:[#allocation2] sm:$0xff]
      %v3003 = vld [vmem:[#allocation2 + $0x8] sm:$0xff]
      %v3004 = vld [vmem:[#allocation2 + $0x18] sm:$0xff]
      %v3005 = vld [vmem:[#allocation2 + $0x20] sm:$0xff]
      %v3006 = vld [vmem:[#allocation2 + $0x30] sm:$0xff]
      %v3007 = vld [vmem:[#allocation2 + $0x38] sm:$0xff]
      %v3008 = vld [vmem:[#allocation2 + $0x48] sm:$0xff]
      %v3009 = vld [vmem:[#allocation2 + $0x50] sm:$0xff]
      %v3010 = vld [vmem:[#allocation2 + $0x60] sm:$0xff]
      %v3011 = vld [vmem:[#allocation2 + $0x68] sm:$0xff]
      %v3012 = vld [vmem:[#allocation2 + $0x78] sm:$0xff]
      %v3013 = vld [vmem:[#allocation2 + $0x80] sm:$0xff]
      %v3014 = vld [vmem:[#allocation2 + $0x90] sm:$0xff]
      %v3015 = vld [vmem:[#allocation2 + $0x98] sm:$0xff]
      %v3016 = vld [vmem:[#allocation2 + $0xa8] sm:$0xff]
      %v3017 = vld [vmem:[#allocation2 + $0xb0] sm:$0xff]
      %v3018 = vld [vmem:[#allocation2 + $0xc0] sm:$0xff]
      %v3019 = vld [vmem:[#allocation2 + $0xc8] sm:$0xff]
      %v3020 = vld [vmem:[#allocation2 + $0xd8] sm:$0xff]
      %v3021 = vld [vmem:[#allocation2 + $0xe0] sm:$0xff]
      %v3022 = vld [vmem:[#allocation2 + $0xf0] sm:$0xff]
      %v3023 = vld [vmem:[#allocation2 + $0xf8] sm:$0xff]
      %v3024 = vld [vmem:[#allocation2 + $0x108] sm:$0xff]
      %v3025 = vld [vmem:[#allocation2 + $0x110] sm:$0xff]
      %v3026 = vld [vmem:[#allocation2 + $0x120] sm:$0xff]
      %v3027 = vld [vmem:[#allocation2 + $0x128] sm:$0xff]
      %v3028 = vld [vmem:[#allocation2 + $0x138] sm:$0xff]
      %v3029 = vld [vmem:[#allocation2 + $0x140] sm:$0xff]
      %v3030 = vld [vmem:[#allocation2 + $0x150] sm:$0xff]
      %v3031 = vld [vmem:[#allocation2 + $0x158] sm:$0xff]
      %v3032 = vld [vmem:[#allocation2 + $0x168] sm:$0xff]
      %v3033 = vld [vmem:[#allocation2 + $0x170] sm:$0xff]
      %3034 = vst.msk [vmem:[#allocation3] sm:$0xff] %vm333, %v3002
      %3035 = vst.msk [vmem:[#allocation3 + $0x10] sm:$0xff] %vm333, %v3003
      %3036 = vst.msk [vmem:[#allocation3 + $0x20] sm:$0xff] %vm333, %v3004
      %3037 = vst.msk [vmem:[#allocation3 + $0x30] sm:$0xff] %vm333, %v3005
      %3038 = vst.msk [vmem:[#allocation3 + $0x40] sm:$0xff] %vm333, %v3006
      %3039 = vst.msk [vmem:[#allocation3 + $0x50] sm:$0xff] %vm333, %v3007
      %3040 = vst.msk [vmem:[#allocation3 + $0x60] sm:$0xff] %vm333, %v3008
      %3041 = vst.msk [vmem:[#allocation3 + $0x70] sm:$0xff] %vm333, %v3009
      %3042 = vst.msk [vmem:[#allocation3 + $0x80] sm:$0xff] %vm333, %v3010
      %3043 = vst.msk [vmem:[#allocation3 + $0x90] sm:$0xff] %vm333, %v3011
      %3044 = vst.msk [vmem:[#allocation3 + $0xa0] sm:$0xff] %vm333, %v3012
      %3045 = vst.msk [vmem:[#allocation3 + $0xb0] sm:$0xff] %vm333, %v3013
      %3046 = vst.msk [vmem:[#allocation3 + $0xc0] sm:$0xff] %vm333, %v3014
      %3047 = vst.msk [vmem:[#allocation3 + $0xd0] sm:$0xff] %vm333, %v3015
      %3048 = vst.msk [vmem:[#allocation3 + $0xe0] sm:$0xff] %vm333, %v3016
      %3049 = vst.msk [vmem:[#allocation3 + $0xf0] sm:$0xff] %vm333, %v3017
      %3050 = vst.msk [vmem:[#allocation3 + $0x100] sm:$0xff] %vm333, %v3018
      %3051 = vst.msk [vmem:[#allocation3 + $0x110] sm:$0xff] %vm333, %v3019
      %3052 = vst.msk [vmem:[#allocation3 + $0x120] sm:$0xff] %vm333, %v3020
      %3053 = vst.msk [vmem:[#allocation3 + $0x130] sm:$0xff] %vm333, %v3021
      %3054 = vst.msk [vmem:[#allocation3 + $0x140] sm:$0xff] %vm333, %v3022
      %3055 = vst.msk [vmem:[#allocation3 + $0x150] sm:$0xff] %vm333, %v3023
      %3056 = vst.msk [vmem:[#allocation3 + $0x160] sm:$0xff] %vm333, %v3024
      %3057 = vst.msk [vmem:[#allocation3 + $0x170] sm:$0xff] %vm333, %v3025
      %3058 = vst.msk [vmem:[#allocation3 + $0x180] sm:$0xff] %vm333, %v3026
      %3059 = vst.msk [vmem:[#allocation3 + $0x190] sm:$0xff] %vm333, %v3027
      %3060 = vst.msk [vmem:[#allocation3 + $0x1a0] sm:$0xff] %vm333, %v3028
      %3061 = vst.msk [vmem:[#allocation3 + $0x1b0] sm:$0xff] %vm333, %v3029
      %3062 = vst.msk [vmem:[#allocation3 + $0x1c0] sm:$0xff] %vm333, %v3030
      %3063 = vst.msk [vmem:[#allocation3 + $0x1d0] sm:$0xff] %vm333, %v3031
      %3064 = vst.msk [vmem:[#allocation3 + $0x1e0] sm:$0xff] %vm333, %v3032
      %3065 = vst.msk [vmem:[#allocation3 + $0x1f0] sm:$0xff] %vm333, %v3033
      %v3066 = vld [vmem:[#allocation2 + $0x1] sm:$0xff]
      %v3067 = vld [vmem:[#allocation2 + $0x9] sm:$0xff]
      %v3068 = vld [vmem:[#allocation2 + $0x19] sm:$0xff]
      %v3069 = vld [vmem:[#allocation2 + $0x21] sm:$0xff]
      %v3070 = vld [vmem:[#allocation2 + $0x31] sm:$0xff]
      %v3071 = vld [vmem:[#allocation2 + $0x39] sm:$0xff]
      %v3072 = vld [vmem:[#allocation2 + $0x49] sm:$0xff]
      %v3073 = vld [vmem:[#allocation2 + $0x51] sm:$0xff]
      %v3074 = vld [vmem:[#allocation2 + $0x61] sm:$0xff]
      %v3075 = vld [vmem:[#allocation2 + $0x69] sm:$0xff]
      %v3076 = vld [vmem:[#allocation2 + $0x79] sm:$0xff]
      %v3077 = vld [vmem:[#allocation2 + $0x81] sm:$0xff]
      %v3078 = vld [vmem:[#allocation2 + $0x91] sm:$0xff]
      %v3079 = vld [vmem:[#allocation2 + $0x99] sm:$0xff]
      %v3080 = vld [vmem:[#allocation2 + $0xa9] sm:$0xff]
      %v3081 = vld [vmem:[#allocation2 + $0xb1] sm:$0xff]
      %v3082 = vld [vmem:[#allocation2 + $0xc1] sm:$0xff]
      %v3083 = vld [vmem:[#allocation2 + $0xc9] sm:$0xff]
      %v3084 = vld [vmem:[#allocation2 + $0xd9] sm:$0xff]
      %v3085 = vld [vmem:[#allocation2 + $0xe1] sm:$0xff]
      %v3086 = vld [vmem:[#allocation2 + $0xf1] sm:$0xff]
      %v3087 = vld [vmem:[#allocation2 + $0xf9] sm:$0xff]
      %v3088 = vld [vmem:[#allocation2 + $0x109] sm:$0xff]
      %v3089 = vld [vmem:[#allocation2 + $0x111] sm:$0xff]
      %v3090 = vld [vmem:[#allocation2 + $0x121] sm:$0xff]
      %v3091 = vld [vmem:[#allocation2 + $0x129] sm:$0xff]
      %v3092 = vld [vmem:[#allocation2 + $0x139] sm:$0xff]
      %v3093 = vld [vmem:[#allocation2 + $0x141] sm:$0xff]
      %v3094 = vld [vmem:[#allocation2 + $0x151] sm:$0xff]
      %v3095 = vld [vmem:[#allocation2 + $0x159] sm:$0xff]
      %v3096 = vld [vmem:[#allocation2 + $0x169] sm:$0xff]
      %v3097 = vld [vmem:[#allocation2 + $0x171] sm:$0xff]
      %3130 = vrot.lane.b32.xlu0 %v3066, 16
      %v3131 = vpop.permute.xlu0 %3130
      %3132 = vrot.lane.b32.xlu0 %v3067, 16
      %v3133 = vpop.permute.xlu0 %3132
      %3134 = vrot.lane.b32.xlu0 %v3068, 16
      %v3135 = vpop.permute.xlu0 %3134
      %3136 = vrot.lane.b32.xlu0 %v3069, 16
      %v3137 = vpop.permute.xlu0 %3136
      %3138 = vrot.lane.b32.xlu0 %v3070, 16
      %v3139 = vpop.permute.xlu0 %3138
      %3140 = vrot.lane.b32.xlu0 %v3071, 16
      %v3141 = vpop.permute.xlu0 %3140
      %3142 = vrot.lane.b32.xlu0 %v3072, 16
      %v3143 = vpop.permute.xlu0 %3142
      %3144 = vrot.lane.b32.xlu0 %v3073, 16
      %v3145 = vpop.permute.xlu0 %3144
      %3146 = vrot.lane.b32.xlu0 %v3074, 16
      %v3147 = vpop.permute.xlu0 %3146
      %3148 = vrot.lane.b32.xlu0 %v3075, 16
      %v3149 = vpop.permute.xlu0 %3148
      %3150 = vrot.lane.b32.xlu0 %v3076, 16
      %v3151 = vpop.permute.xlu0 %3150
      %3152 = vrot.lane.b32.xlu0 %v3077, 16
      %v3153 = vpop.permute.xlu0 %3152
      %3154 = vrot.lane.b32.xlu0 %v3078, 16
      %v3155 = vpop.permute.xlu0 %3154
      %3156 = vrot.lane.b32.xlu0 %v3079, 16
      %v3157 = vpop.permute.xlu0 %3156
      %3158 = vrot.lane.b32.xlu0 %v3080, 16
      %v3159 = vpop.permute.xlu0 %3158
      %3160 = vrot.lane.b32.xlu0 %v3081, 16
      %v3161 = vpop.permute.xlu0 %3160
      %3162 = vrot.lane.b32.xlu0 %v3082, 16
      %v3163 = vpop.permute.xlu0 %3162
      %3164 = vrot.lane.b32.xlu0 %v3083, 16
      %v3165 = vpop.permute.xlu0 %3164
      %3166 = vrot.lane.b32.xlu0 %v3084, 16
      %v3167 = vpop.permute.xlu0 %3166
      %3168 = vrot.lane.b32.xlu0 %v3085, 16
      %v3169 = vpop.permute.xlu0 %3168
      %3170 = vrot.lane.b32.xlu0 %v3086, 16
      %v3171 = vpop.permute.xlu0 %3170
      %3172 = vrot.lane.b32.xlu0 %v3087, 16
      %v3173 = vpop.permute.xlu0 %3172
      %3174 = vrot.lane.b32.xlu0 %v3088, 16
      %v3175 = vpop.permute.xlu0 %3174
      %3176 = vrot.lane.b32.xlu0 %v3089, 16
      %v3177 = vpop.permute.xlu0 %3176
      %3178 = vrot.lane.b32.xlu0 %v3090, 16
      %v3179 = vpop.permute.xlu0 %3178
      %3180 = vrot.lane.b32.xlu0 %v3091, 16
      %v3181 = vpop.permute.xlu0 %3180
      %3182 = vrot.lane.b32.xlu0 %v3092, 16
      %v3183 = vpop.permute.xlu0 %3182
      %3184 = vrot.lane.b32.xlu0 %v3093, 16
      %v3185 = vpop.permute.xlu0 %3184
      %3186 = vrot.lane.b32.xlu0 %v3094, 16
      %v3187 = vpop.permute.xlu0 %3186
      %3188 = vrot.lane.b32.xlu0 %v3095, 16
      %v3189 = vpop.permute.xlu0 %3188
      %3190 = vrot.lane.b32.xlu0 %v3096, 16
      %v3191 = vpop.permute.xlu0 %3190
      %3192 = vrot.lane.b32.xlu0 %v3097, 16
      %v3193 = vpop.permute.xlu0 %3192
      %3226 = vst.msk [vmem:[#allocation3] sm:$0xff] %vm1272, %v3131
      %3227 = vst.msk [vmem:[#allocation3 + $0x10] sm:$0xff] %vm1272, %v3133
      %3228 = vst.msk [vmem:[#allocation3 + $0x20] sm:$0xff] %vm1272, %v3135
      %3229 = vst.msk [vmem:[#allocation3 + $0x30] sm:$0xff] %vm1272, %v3137
      %3230 = vst.msk [vmem:[#allocation3 + $0x40] sm:$0xff] %vm1272, %v3139
      %3231 = vst.msk [vmem:[#allocation3 + $0x50] sm:$0xff] %vm1272, %v3141
      %3232 = vst.msk [vmem:[#allocation3 + $0x60] sm:$0xff] %vm1272, %v3143
      %3233 = vst.msk [vmem:[#allocation3 + $0x70] sm:$0xff] %vm1272, %v3145
      %3234 = vst.msk [vmem:[#allocation3 + $0x80] sm:$0xff] %vm1272, %v3147
      %3235 = vst.msk [vmem:[#allocation3 + $0x90] sm:$0xff] %vm1272, %v3149
      %3236 = vst.msk [vmem:[#allocation3 + $0xa0] sm:$0xff] %vm1272, %v3151
      %3237 = vst.msk [vmem:[#allocation3 + $0xb0] sm:$0xff] %vm1272, %v3153
      %3238 = vst.msk [vmem:[#allocation3 + $0xc0] sm:$0xff] %vm1272, %v3155
      %3239 = vst.msk [vmem:[#allocation3 + $0xd0] sm:$0xff] %vm1272, %v3157
      %3240 = vst.msk [vmem:[#allocation3 + $0xe0] sm:$0xff] %vm1272, %v3159
      %3241 = vst.msk [vmem:[#allocation3 + $0xf0] sm:$0xff] %vm1272, %v3161
      %3242 = vst.msk [vmem:[#allocation3 + $0x100] sm:$0xff] %vm1272, %v3163
      %3243 = vst.msk [vmem:[#allocation3 + $0x110] sm:$0xff] %vm1272, %v3165
      %3244 = vst.msk [vmem:[#allocation3 + $0x120] sm:$0xff] %vm1272, %v3167
      %3245 = vst.msk [vmem:[#allocation3 + $0x130] sm:$0xff] %vm1272, %v3169
      %3246 = vst.msk [vmem:[#allocation3 + $0x140] sm:$0xff] %vm1272, %v3171
      %3247 = vst.msk [vmem:[#allocation3 + $0x150] sm:$0xff] %vm1272, %v3173
      %3248 = vst.msk [vmem:[#allocation3 + $0x160] sm:$0xff] %vm1272, %v3175
      %3249 = vst.msk [vmem:[#allocation3 + $0x170] sm:$0xff] %vm1272, %v3177
      %3250 = vst.msk [vmem:[#allocation3 + $0x180] sm:$0xff] %vm1272, %v3179
      %3251 = vst.msk [vmem:[#allocation3 + $0x190] sm:$0xff] %vm1272, %v3181
      %3252 = vst.msk [vmem:[#allocation3 + $0x1a0] sm:$0xff] %vm1272, %v3183
      %3253 = vst.msk [vmem:[#allocation3 + $0x1b0] sm:$0xff] %vm1272, %v3185
      %3254 = vst.msk [vmem:[#allocation3 + $0x1c0] sm:$0xff] %vm1272, %v3187
      %3255 = vst.msk [vmem:[#allocation3 + $0x1d0] sm:$0xff] %vm1272, %v3189
      %3256 = vst.msk [vmem:[#allocation3 + $0x1e0] sm:$0xff] %vm1272, %v3191
      %3257 = vst.msk [vmem:[#allocation3 + $0x1f0] sm:$0xff] %vm1272, %v3193
      %v3258 = vld [vmem:[#allocation2 + $0x2] sm:$0xff]
      %v3259 = vld [vmem:[#allocation2 + $0xa] sm:$0xff]
      %v3260 = vld [vmem:[#allocation2 + $0x1a] sm:$0xff]
      %v3261 = vld [vmem:[#allocation2 + $0x22] sm:$0xff]
      %v3262 = vld [vmem:[#allocation2 + $0x32] sm:$0xff]
      %v3263 = vld [vmem:[#allocation2 + $0x3a] sm:$0xff]
      %v3264 = vld [vmem:[#allocation2 + $0x4a] sm:$0xff]
      %v3265 = vld [vmem:[#allocation2 + $0x52] sm:$0xff]
      %v3266 = vld [vmem:[#allocation2 + $0x62] sm:$0xff]
      %v3267 = vld [vmem:[#allocation2 + $0x6a] sm:$0xff]
      %v3268 = vld [vmem:[#allocation2 + $0x7a] sm:$0xff]
      %v3269 = vld [vmem:[#allocation2 + $0x82] sm:$0xff]
      %v3270 = vld [vmem:[#allocation2 + $0x92] sm:$0xff]
      %v3271 = vld [vmem:[#allocation2 + $0x9a] sm:$0xff]
      %v3272 = vld [vmem:[#allocation2 + $0xaa] sm:$0xff]
      %v3273 = vld [vmem:[#allocation2 + $0xb2] sm:$0xff]
      %v3274 = vld [vmem:[#allocation2 + $0xc2] sm:$0xff]
      %v3275 = vld [vmem:[#allocation2 + $0xca] sm:$0xff]
      %v3276 = vld [vmem:[#allocation2 + $0xda] sm:$0xff]
      %v3277 = vld [vmem:[#allocation2 + $0xe2] sm:$0xff]
      %v3278 = vld [vmem:[#allocation2 + $0xf2] sm:$0xff]
      %v3279 = vld [vmem:[#allocation2 + $0xfa] sm:$0xff]
      %v3280 = vld [vmem:[#allocation2 + $0x10a] sm:$0xff]
      %v3281 = vld [vmem:[#allocation2 + $0x112] sm:$0xff]
      %v3282 = vld [vmem:[#allocation2 + $0x122] sm:$0xff]
      %v3283 = vld [vmem:[#allocation2 + $0x12a] sm:$0xff]
      %v3284 = vld [vmem:[#allocation2 + $0x13a] sm:$0xff]
      %v3285 = vld [vmem:[#allocation2 + $0x142] sm:$0xff]
      %v3286 = vld [vmem:[#allocation2 + $0x152] sm:$0xff]
      %v3287 = vld [vmem:[#allocation2 + $0x15a] sm:$0xff]
      %v3288 = vld [vmem:[#allocation2 + $0x16a] sm:$0xff]
      %v3289 = vld [vmem:[#allocation2 + $0x172] sm:$0xff]
      %3322 = vrot.lane.b32.xlu0 %v3258, 32
      %v3323 = vpop.permute.xlu0 %3322
      %3324 = vrot.lane.b32.xlu0 %v3259, 32
      %v3325 = vpop.permute.xlu0 %3324
      %3326 = vrot.lane.b32.xlu0 %v3260, 32
      %v3327 = vpop.permute.xlu0 %3326
      %3328 = vrot.lane.b32.xlu0 %v3261, 32
      %v3329 = vpop.permute.xlu0 %3328
      %3330 = vrot.lane.b32.xlu0 %v3262, 32
      %v3331 = vpop.permute.xlu0 %3330
      %3332 = vrot.lane.b32.xlu0 %v3263, 32
      %v3333 = vpop.permute.xlu0 %3332
      %3334 = vrot.lane.b32.xlu0 %v3264, 32
      %v3335 = vpop.permute.xlu0 %3334
      %3336 = vrot.lane.b32.xlu0 %v3265, 32
      %v3337 = vpop.permute.xlu0 %3336
      %3338 = vrot.lane.b32.xlu0 %v3266, 32
      %v3339 = vpop.permute.xlu0 %3338
      %3340 = vrot.lane.b32.xlu0 %v3267, 32
      %v3341 = vpop.permute.xlu0 %3340
      %3342 = vrot.lane.b32.xlu0 %v3268, 32
      %v3343 = vpop.permute.xlu0 %3342
      %3344 = vrot.lane.b32.xlu0 %v3269, 32
      %v3345 = vpop.permute.xlu0 %3344
      %3346 = vrot.lane.b32.xlu0 %v3270, 32
      %v3347 = vpop.permute.xlu0 %3346
      %3348 = vrot.lane.b32.xlu0 %v3271, 32
      %v3349 = vpop.permute.xlu0 %3348
      %3350 = vrot.lane.b32.xlu0 %v3272, 32
      %v3351 = vpop.permute.xlu0 %3350
      %3352 = vrot.lane.b32.xlu0 %v3273, 32
      %v3353 = vpop.permute.xlu0 %3352
      %3354 = vrot.lane.b32.xlu0 %v3274, 32
      %v3355 = vpop.permute.xlu0 %3354
      %3356 = vrot.lane.b32.xlu0 %v3275, 32
      %v3357 = vpop.permute.xlu0 %3356
      %3358 = vrot.lane.b32.xlu0 %v3276, 32
      %v3359 = vpop.permute.xlu0 %3358
      %3360 = vrot.lane.b32.xlu0 %v3277, 32
      %v3361 = vpop.permute.xlu0 %3360
      %3362 = vrot.lane.b32.xlu0 %v3278, 32
      %v3363 = vpop.permute.xlu0 %3362
      %3364 = vrot.lane.b32.xlu0 %v3279, 32
      %v3365 = vpop.permute.xlu0 %3364
      %3366 = vrot.lane.b32.xlu0 %v3280, 32
      %v3367 = vpop.permute.xlu0 %3366
      %3368 = vrot.lane.b32.xlu0 %v3281, 32
      %v3369 = vpop.permute.xlu0 %3368
      %3370 = vrot.lane.b32.xlu0 %v3282, 32
      %v3371 = vpop.permute.xlu0 %3370
      %3372 = vrot.lane.b32.xlu0 %v3283, 32
      %v3373 = vpop.permute.xlu0 %3372
      %3374 = vrot.lane.b32.xlu0 %v3284, 32
      %v3375 = vpop.permute.xlu0 %3374
      %3376 = vrot.lane.b32.xlu0 %v3285, 32
      %v3377 = vpop.permute.xlu0 %3376
      %3378 = vrot.lane.b32.xlu0 %v3286, 32
      %v3379 = vpop.permute.xlu0 %3378
      %3380 = vrot.lane.b32.xlu0 %v3287, 32
      %v3381 = vpop.permute.xlu0 %3380
      %3382 = vrot.lane.b32.xlu0 %v3288, 32
      %v3383 = vpop.permute.xlu0 %3382
      %3384 = vrot.lane.b32.xlu0 %v3289, 32
      %v3385 = vpop.permute.xlu0 %3384
      %3418 = vst.msk [vmem:[#allocation3] sm:$0xff] %vm1465, %v3323
      %3419 = vst.msk [vmem:[#allocation3 + $0x10] sm:$0xff] %vm1465, %v3325
      %3420 = vst.msk [vmem:[#allocation3 + $0x20] sm:$0xff] %vm1465, %v3327
      %3421 = vst.msk [vmem:[#allocation3 + $0x30] sm:$0xff] %vm1465, %v3329
      %3422 = vst.msk [vmem:[#allocation3 + $0x40] sm:$0xff] %vm1465, %v3331
      %3423 = vst.msk [vmem:[#allocation3 + $0x50] sm:$0xff] %vm1465, %v3333
      %3424 = vst.msk [vmem:[#allocation3 + $0x60] sm:$0xff] %vm1465, %v3335
      %3425 = vst.msk [vmem:[#allocation3 + $0x70] sm:$0xff] %vm1465, %v3337
      %3426 = vst.msk [vmem:[#allocation3 + $0x80] sm:$0xff] %vm1465, %v3339
      %3427 = vst.msk [vmem:[#allocation3 + $0x90] sm:$0xff] %vm1465, %v3341
      %3428 = vst.msk [vmem:[#allocation3 + $0xa0] sm:$0xff] %vm1465, %v3343
      %3429 = vst.msk [vmem:[#allocation3 + $0xb0] sm:$0xff] %vm1465, %v3345
      %3430 = vst.msk [vmem:[#allocation3 + $0xc0] sm:$0xff] %vm1465, %v3347
      %3431 = vst.msk [vmem:[#allocation3 + $0xd0] sm:$0xff] %vm1465, %v3349
      %3432 = vst.msk [vmem:[#allocation3 + $0xe0] sm:$0xff] %vm1465, %v3351
      %3433 = vst.msk [vmem:[#allocation3 + $0xf0] sm:$0xff] %vm1465, %v3353
      %3434 = vst.msk [vmem:[#allocation3 + $0x100] sm:$0xff] %vm1465, %v3355
      %3435 = vst.msk [vmem:[#allocation3 + $0x110] sm:$0xff] %vm1465, %v3357
      %3436 = vst.msk [vmem:[#allocation3 + $0x120] sm:$0xff] %vm1465, %v3359
      %3437 = vst.msk [vmem:[#allocation3 + $0x130] sm:$0xff] %vm1465, %v3361
      %3438 = vst.msk [vmem:[#allocation3 + $0x140] sm:$0xff] %vm1465, %v3363
      %3439 = vst.msk [vmem:[#allocation3 + $0x150] sm:$0xff] %vm1465, %v3365
      %3440 = vst.msk [vmem:[#allocation3 + $0x160] sm:$0xff] %vm1465, %v3367
      %3441 = vst.msk [vmem:[#allocation3 + $0x170] sm:$0xff] %vm1465, %v3369
      %3442 = vst.msk [vmem:[#allocation3 + $0x180] sm:$0xff] %vm1465, %v3371
      %3443 = vst.msk [vmem:[#allocation3 + $0x190] sm:$0xff] %vm1465, %v3373
      %3444 = vst.msk [vmem:[#allocation3 + $0x1a0] sm:$0xff] %vm1465, %v3375
      %3445 = vst.msk [vmem:[#allocation3 + $0x1b0] sm:$0xff] %vm1465, %v3377
      %3446 = vst.msk [vmem:[#allocation3 + $0x1c0] sm:$0xff] %vm1465, %v3379
      %3447 = vst.msk [vmem:[#allocation3 + $0x1d0] sm:$0xff] %vm1465, %v3381
      %3448 = vst.msk [vmem:[#allocation3 + $0x1e0] sm:$0xff] %vm1465, %v3383
      %3449 = vst.msk [vmem:[#allocation3 + $0x1f0] sm:$0xff] %vm1465, %v3385
      %v3450 = vld [vmem:[%s1015] sm:$0xff]
      %v3451 = vld [vmem:[%s1015 + $0x8] sm:$0xff]
      %v3452 = vld [vmem:[%s1015 + $0x18] sm:$0xff]
      %v3453 = vld [vmem:[%s1015 + $0x20] sm:$0xff]
      %v3454 = vld [vmem:[%s1015 + $0x30] sm:$0xff]
      %v3455 = vld [vmem:[%s1015 + $0x38] sm:$0xff]
      %v3456 = vld [vmem:[%s1015 + $0x48] sm:$0xff]
      %v3457 = vld [vmem:[%s1015 + $0x50] sm:$0xff]
      %v3458 = vld [vmem:[%s1015 + $0x60] sm:$0xff]
      %v3459 = vld [vmem:[%s1015 + $0x68] sm:$0xff]
      %v3460 = vld [vmem:[%s1015 + $0x78] sm:$0xff]
      %v3461 = vld [vmem:[%s1015 + $0x80] sm:$0xff]
      %v3462 = vld [vmem:[%s1015 + $0x90] sm:$0xff]
      %v3463 = vld [vmem:[%s1015 + $0x98] sm:$0xff]
      %v3464 = vld [vmem:[%s1015 + $0xa8] sm:$0xff]
      %v3465 = vld [vmem:[%s1015 + $0xb0] sm:$0xff]
      %v3466 = vld [vmem:[%s1015 + $0xc0] sm:$0xff]
      %v3467 = vld [vmem:[%s1015 + $0xc8] sm:$0xff]
      %v3468 = vld [vmem:[%s1015 + $0xd8] sm:$0xff]
      %v3469 = vld [vmem:[%s1015 + $0xe0] sm:$0xff]
      %v3470 = vld [vmem:[%s1015 + $0xf0] sm:$0xff]
      %v3471 = vld [vmem:[%s1015 + $0xf8] sm:$0xff]
      %v3472 = vld [vmem:[%s1015 + $0x108] sm:$0xff]
      %v3473 = vld [vmem:[%s1015 + $0x110] sm:$0xff]
      %v3474 = vld [vmem:[%s1015 + $0x120] sm:$0xff]
      %v3475 = vld [vmem:[%s1015 + $0x128] sm:$0xff]
      %v3476 = vld [vmem:[%s1015 + $0x138] sm:$0xff]
      %v3477 = vld [vmem:[%s1015 + $0x140] sm:$0xff]
      %v3478 = vld [vmem:[%s1015 + $0x150] sm:$0xff]
      %v3479 = vld [vmem:[%s1015 + $0x158] sm:$0xff]
      %v3480 = vld [vmem:[%s1015 + $0x168] sm:$0xff]
      %v3481 = vld [vmem:[%s1015 + $0x170] sm:$0xff]
      %3514 = vrot.lane.b32.xlu0 %v3450, 48
      %v3515 = vpop.permute.xlu0 %3514
      %3516 = vrot.lane.b32.xlu0 %v3451, 48
      %v3517 = vpop.permute.xlu0 %3516
      %3518 = vrot.lane.b32.xlu0 %v3452, 48
      %v3519 = vpop.permute.xlu0 %3518
      %3520 = vrot.lane.b32.xlu0 %v3453, 48
      %v3521 = vpop.permute.xlu0 %3520
      %3522 = vrot.lane.b32.xlu0 %v3454, 48
      %v3523 = vpop.permute.xlu0 %3522
      %3524 = vrot.lane.b32.xlu0 %v3455, 48
      %v3525 = vpop.permute.xlu0 %3524
      %3526 = vrot.lane.b32.xlu0 %v3456, 48
      %v3527 = vpop.permute.xlu0 %3526
      %3528 = vrot.lane.b32.xlu0 %v3457, 48
      %v3529 = vpop.permute.xlu0 %3528
      %3530 = vrot.lane.b32.xlu0 %v3458, 48
      %v3531 = vpop.permute.xlu0 %3530
      %3532 = vrot.lane.b32.xlu0 %v3459, 48
      %v3533 = vpop.permute.xlu0 %3532
      %3534 = vrot.lane.b32.xlu0 %v3460, 48
      %v3535 = vpop.permute.xlu0 %3534
      %3536 = vrot.lane.b32.xlu0 %v3461, 48
      %v3537 = vpop.permute.xlu0 %3536
      %3538 = vrot.lane.b32.xlu0 %v3462, 48
      %v3539 = vpop.permute.xlu0 %3538
      %3540 = vrot.lane.b32.xlu0 %v3463, 48
      %v3541 = vpop.permute.xlu0 %3540
      %3542 = vrot.lane.b32.xlu0 %v3464, 48
      %v3543 = vpop.permute.xlu0 %3542
      %3544 = vrot.lane.b32.xlu0 %v3465, 48
      %v3545 = vpop.permute.xlu0 %3544
      %3546 = vrot.lane.b32.xlu0 %v3466, 48
      %v3547 = vpop.permute.xlu0 %3546
      %3548 = vrot.lane.b32.xlu0 %v3467, 48
      %v3549 = vpop.permute.xlu0 %3548
      %3550 = vrot.lane.b32.xlu0 %v3468, 48
      %v3551 = vpop.permute.xlu0 %3550
      %3552 = vrot.lane.b32.xlu0 %v3469, 48
      %v3553 = vpop.permute.xlu0 %3552
      %3554 = vrot.lane.b32.xlu0 %v3470, 48
      %v3555 = vpop.permute.xlu0 %3554
      %3556 = vrot.lane.b32.xlu0 %v3471, 48
      %v3557 = vpop.permute.xlu0 %3556
      %3558 = vrot.lane.b32.xlu0 %v3472, 48
      %v3559 = vpop.permute.xlu0 %3558
      %3560 = vrot.lane.b32.xlu0 %v3473, 48
      %v3561 = vpop.permute.xlu0 %3560
      %3562 = vrot.lane.b32.xlu0 %v3474, 48
      %v3563 = vpop.permute.xlu0 %3562
      %3564 = vrot.lane.b32.xlu0 %v3475, 48
      %v3565 = vpop.permute.xlu0 %3564
      %3566 = vrot.lane.b32.xlu0 %v3476, 48
      %v3567 = vpop.permute.xlu0 %3566
      %3568 = vrot.lane.b32.xlu0 %v3477, 48
      %v3569 = vpop.permute.xlu0 %3568
      %3570 = vrot.lane.b32.xlu0 %v3478, 48
      %v3571 = vpop.permute.xlu0 %3570
      %3572 = vrot.lane.b32.xlu0 %v3479, 48
      %v3573 = vpop.permute.xlu0 %3572
      %3574 = vrot.lane.b32.xlu0 %v3480, 48
      %v3575 = vpop.permute.xlu0 %3574
      %3576 = vrot.lane.b32.xlu0 %v3481, 48
      %v3577 = vpop.permute.xlu0 %3576
      %3610 = vst.msk [vmem:[#allocation3] sm:$0xff] %vm1658, %v3515
      %3611 = vst.msk [vmem:[#allocation3 + $0x10] sm:$0xff] %vm1658, %v3517
      %3612 = vst.msk [vmem:[#allocation3 + $0x20] sm:$0xff] %vm1658, %v3519
      %3613 = vst.msk [vmem:[#allocation3 + $0x30] sm:$0xff] %vm1658, %v3521
      %3614 = vst.msk [vmem:[#allocation3 + $0x40] sm:$0xff] %vm1658, %v3523
      %3615 = vst.msk [vmem:[#allocation3 + $0x50] sm:$0xff] %vm1658, %v3525
      %3616 = vst.msk [vmem:[#allocation3 + $0x60] sm:$0xff] %vm1658, %v3527
      %3617 = vst.msk [vmem:[#allocation3 + $0x70] sm:$0xff] %vm1658, %v3529
      %3618 = vst.msk [vmem:[#allocation3 + $0x80] sm:$0xff] %vm1658, %v3531
      %3619 = vst.msk [vmem:[#allocation3 + $0x90] sm:$0xff] %vm1658, %v3533
      %3620 = vst.msk [vmem:[#allocation3 + $0xa0] sm:$0xff] %vm1658, %v3535
      %3621 = vst.msk [vmem:[#allocation3 + $0xb0] sm:$0xff] %vm1658, %v3537
      %3622 = vst.msk [vmem:[#allocation3 + $0xc0] sm:$0xff] %vm1658, %v3539
      %3623 = vst.msk [vmem:[#allocation3 + $0xd0] sm:$0xff] %vm1658, %v3541
      %3624 = vst.msk [vmem:[#allocation3 + $0xe0] sm:$0xff] %vm1658, %v3543
      %3625 = vst.msk [vmem:[#allocation3 + $0xf0] sm:$0xff] %vm1658, %v3545
      %3626 = vst.msk [vmem:[#allocation3 + $0x100] sm:$0xff] %vm1658, %v3547
      %3627 = vst.msk [vmem:[#allocation3 + $0x110] sm:$0xff] %vm1658, %v3549
      %3628 = vst.msk [vmem:[#allocation3 + $0x120] sm:$0xff] %vm1658, %v3551
      %3629 = vst.msk [vmem:[#allocation3 + $0x130] sm:$0xff] %vm1658, %v3553
      %3630 = vst.msk [vmem:[#allocation3 + $0x140] sm:$0xff] %vm1658, %v3555
      %3631 = vst.msk [vmem:[#allocation3 + $0x150] sm:$0xff] %vm1658, %v3557
      %3632 = vst.msk [vmem:[#allocation3 + $0x160] sm:$0xff] %vm1658, %v3559
      %3633 = vst.msk [vmem:[#allocation3 + $0x170] sm:$0xff] %vm1658, %v3561
      %3634 = vst.msk [vmem:[#allocation3 + $0x180] sm:$0xff] %vm1658, %v3563
      %3635 = vst.msk [vmem:[#allocation3 + $0x190] sm:$0xff] %vm1658, %v3565
      %3636 = vst.msk [vmem:[#allocation3 + $0x1a0] sm:$0xff] %vm1658, %v3567
      %3637 = vst.msk [vmem:[#allocation3 + $0x1b0] sm:$0xff] %vm1658, %v3569
      %3638 = vst.msk [vmem:[#allocation3 + $0x1c0] sm:$0xff] %vm1658, %v3571
      %3639 = vst.msk [vmem:[#allocation3 + $0x1d0] sm:$0xff] %vm1658, %v3573
      %3640 = vst.msk [vmem:[#allocation3 + $0x1e0] sm:$0xff] %vm1658, %v3575
      %3641 = vst.msk [vmem:[#allocation3 + $0x1f0] sm:$0xff] %vm1658, %v3577
      %v3642 = vld [vmem:[%s1015 + $0x1] sm:$0xff]
      %v3643 = vld [vmem:[%s1015 + $0x9] sm:$0xff]
      %v3644 = vld [vmem:[%s1015 + $0x19] sm:$0xff]
      %v3645 = vld [vmem:[%s1015 + $0x21] sm:$0xff]
      %v3646 = vld [vmem:[%s1015 + $0x31] sm:$0xff]
      %v3647 = vld [vmem:[%s1015 + $0x39] sm:$0xff]
      %v3648 = vld [vmem:[%s1015 + $0x49] sm:$0xff]
      %v3649 = vld [vmem:[%s1015 + $0x51] sm:$0xff]
      %v3650 = vld [vmem:[%s1015 + $0x61] sm:$0xff]
      %v3651 = vld [vmem:[%s1015 + $0x69] sm:$0xff]
      %v3652 = vld [vmem:[%s1015 + $0x79] sm:$0xff]
      %v3653 = vld [vmem:[%s1015 + $0x81] sm:$0xff]
      %v3654 = vld [vmem:[%s1015 + $0x91] sm:$0xff]
      %v3655 = vld [vmem:[%s1015 + $0x99] sm:$0xff]
      %v3656 = vld [vmem:[%s1015 + $0xa9] sm:$0xff]
      %v3657 = vld [vmem:[%s1015 + $0xb1] sm:$0xff]
      %v3658 = vld [vmem:[%s1015 + $0xc1] sm:$0xff]
      %v3659 = vld [vmem:[%s1015 + $0xc9] sm:$0xff]
      %v3660 = vld [vmem:[%s1015 + $0xd9] sm:$0xff]
      %v3661 = vld [vmem:[%s1015 + $0xe1] sm:$0xff]
      %v3662 = vld [vmem:[%s1015 + $0xf1] sm:$0xff]
      %v3663 = vld [vmem:[%s1015 + $0xf9] sm:$0xff]
      %v3664 = vld [vmem:[%s1015 + $0x109] sm:$0xff]
      %v3665 = vld [vmem:[%s1015 + $0x111] sm:$0xff]
      %v3666 = vld [vmem:[%s1015 + $0x121] sm:$0xff]
      %v3667 = vld [vmem:[%s1015 + $0x129] sm:$0xff]
      %v3668 = vld [vmem:[%s1015 + $0x139] sm:$0xff]
      %v3669 = vld [vmem:[%s1015 + $0x141] sm:$0xff]
      %v3670 = vld [vmem:[%s1015 + $0x151] sm:$0xff]
      %v3671 = vld [vmem:[%s1015 + $0x159] sm:$0xff]
      %v3672 = vld [vmem:[%s1015 + $0x169] sm:$0xff]
      %v3673 = vld [vmem:[%s1015 + $0x171] sm:$0xff]
      %3706 = vrot.lane.b32.xlu0 %v3642, 64
      %v3707 = vpop.permute.xlu0 %3706
      %3708 = vrot.lane.b32.xlu0 %v3643, 64
      %v3709 = vpop.permute.xlu0 %3708
      %3710 = vrot.lane.b32.xlu0 %v3644, 64
      %v3711 = vpop.permute.xlu0 %3710
      %3712 = vrot.lane.b32.xlu0 %v3645, 64
      %v3713 = vpop.permute.xlu0 %3712
      %3714 = vrot.lane.b32.xlu0 %v3646, 64
      %v3715 = vpop.permute.xlu0 %3714
      %3716 = vrot.lane.b32.xlu0 %v3647, 64
      %v3717 = vpop.permute.xlu0 %3716
      %3718 = vrot.lane.b32.xlu0 %v3648, 64
      %v3719 = vpop.permute.xlu0 %3718
      %3720 = vrot.lane.b32.xlu0 %v3649, 64
      %v3721 = vpop.permute.xlu0 %3720
      %3722 = vrot.lane.b32.xlu0 %v3650, 64
      %v3723 = vpop.permute.xlu0 %3722
      %3724 = vrot.lane.b32.xlu0 %v3651, 64
      %v3725 = vpop.permute.xlu0 %3724
      %3726 = vrot.lane.b32.xlu0 %v3652, 64
      %v3727 = vpop.permute.xlu0 %3726
      %3728 = vrot.lane.b32.xlu0 %v3653, 64
      %v3729 = vpop.permute.xlu0 %3728
      %3730 = vrot.lane.b32.xlu0 %v3654, 64
      %v3731 = vpop.permute.xlu0 %3730
      %3732 = vrot.lane.b32.xlu0 %v3655, 64
      %v3733 = vpop.permute.xlu0 %3732
      %3734 = vrot.lane.b32.xlu0 %v3656, 64
      %v3735 = vpop.permute.xlu0 %3734
      %3736 = vrot.lane.b32.xlu0 %v3657, 64
      %v3737 = vpop.permute.xlu0 %3736
      %3738 = vrot.lane.b32.xlu0 %v3658, 64
      %v3739 = vpop.permute.xlu0 %3738
      %3740 = vrot.lane.b32.xlu0 %v3659, 64
      %v3741 = vpop.permute.xlu0 %3740
      %3742 = vrot.lane.b32.xlu0 %v3660, 64
      %v3743 = vpop.permute.xlu0 %3742
      %3744 = vrot.lane.b32.xlu0 %v3661, 64
      %v3745 = vpop.permute.xlu0 %3744
      %3746 = vrot.lane.b32.xlu0 %v3662, 64
      %v3747 = vpop.permute.xlu0 %3746
      %3748 = vrot.lane.b32.xlu0 %v3663, 64
      %v3749 = vpop.permute.xlu0 %3748
      %3750 = vrot.lane.b32.xlu0 %v3664, 64
      %v3751 = vpop.permute.xlu0 %3750
      %3752 = vrot.lane.b32.xlu0 %v3665, 64
      %v3753 = vpop.permute.xlu0 %3752
      %3754 = vrot.lane.b32.xlu0 %v3666, 64
      %v3755 = vpop.permute.xlu0 %3754
      %3756 = vrot.lane.b32.xlu0 %v3667, 64
      %v3757 = vpop.permute.xlu0 %3756
      %3758 = vrot.lane.b32.xlu0 %v3668, 64
      %v3759 = vpop.permute.xlu0 %3758
      %3760 = vrot.lane.b32.xlu0 %v3669, 64
      %v3761 = vpop.permute.xlu0 %3760
      %3762 = vrot.lane.b32.xlu0 %v3670, 64
      %v3763 = vpop.permute.xlu0 %3762
      %3764 = vrot.lane.b32.xlu0 %v3671, 64
      %v3765 = vpop.permute.xlu0 %3764
      %3766 = vrot.lane.b32.xlu0 %v3672, 64
      %v3767 = vpop.permute.xlu0 %3766
      %3768 = vrot.lane.b32.xlu0 %v3673, 64
      %v3769 = vpop.permute.xlu0 %3768
      %3802 = vst.msk [vmem:[#allocation3] sm:$0xff] %vm1851, %v3707
      %3803 = vst.msk [vmem:[#allocation3 + $0x10] sm:$0xff] %vm1851, %v3709
      %3804 = vst.msk [vmem:[#allocation3 + $0x20] sm:$0xff] %vm1851, %v3711
      %3805 = vst.msk [vmem:[#allocation3 + $0x30] sm:$0xff] %vm1851, %v3713
      %3806 = vst.msk [vmem:[#allocation3 + $0x40] sm:$0xff] %vm1851, %v3715
      %3807 = vst.msk [vmem:[#allocation3 + $0x50] sm:$0xff] %vm1851, %v3717
      %3808 = vst.msk [vmem:[#allocation3 + $0x60] sm:$0xff] %vm1851, %v3719
      %3809 = vst.msk [vmem:[#allocation3 + $0x70] sm:$0xff] %vm1851, %v3721
      %3810 = vst.msk [vmem:[#allocation3 + $0x80] sm:$0xff] %vm1851, %v3723
      %3811 = vst.msk [vmem:[#allocation3 + $0x90] sm:$0xff] %vm1851, %v3725
      %3812 = vst.msk [vmem:[#allocation3 + $0xa0] sm:$0xff] %vm1851, %v3727
      %3813 = vst.msk [vmem:[#allocation3 + $0xb0] sm:$0xff] %vm1851, %v3729
      %3814 = vst.msk [vmem:[#allocation3 + $0xc0] sm:$0xff] %vm1851, %v3731
      %3815 = vst.msk [vmem:[#allocation3 + $0xd0] sm:$0xff] %vm1851, %v3733
      %3816 = vst.msk [vmem:[#allocation3 + $0xe0] sm:$0xff] %vm1851, %v3735
      %3817 = vst.msk [vmem:[#allocation3 + $0xf0] sm:$0xff] %vm1851, %v3737
      %3818 = vst.msk [vmem:[#allocation3 + $0x100] sm:$0xff] %vm1851, %v3739
      %3819 = vst.msk [vmem:[#allocation3 + $0x110] sm:$0xff] %vm1851, %v3741
      %3820 = vst.msk [vmem:[#allocation3 + $0x120] sm:$0xff] %vm1851, %v3743
      %3821 = vst.msk [vmem:[#allocation3 + $0x130] sm:$0xff] %vm1851, %v3745
      %3822 = vst.msk [vmem:[#allocation3 + $0x140] sm:$0xff] %vm1851, %v3747
      %3823 = vst.msk [vmem:[#allocation3 + $0x150] sm:$0xff] %vm1851, %v3749
      %3824 = vst.msk [vmem:[#allocation3 + $0x160] sm:$0xff] %vm1851, %v3751
      %3825 = vst.msk [vmem:[#allocation3 + $0x170] sm:$0xff] %vm1851, %v3753
      %3826 = vst.msk [vmem:[#allocation3 + $0x180] sm:$0xff] %vm1851, %v3755
      %3827 = vst.msk [vmem:[#allocation3 + $0x190] sm:$0xff] %vm1851, %v3757
      %3828 = vst.msk [vmem:[#allocation3 + $0x1a0] sm:$0xff] %vm1851, %v3759
      %3829 = vst.msk [vmem:[#allocation3 + $0x1b0] sm:$0xff] %vm1851, %v3761
      %3830 = vst.msk [vmem:[#allocation3 + $0x1c0] sm:$0xff] %vm1851, %v3763
      %3831 = vst.msk [vmem:[#allocation3 + $0x1d0] sm:$0xff] %vm1851, %v3765
      %3832 = vst.msk [vmem:[#allocation3 + $0x1e0] sm:$0xff] %vm1851, %v3767
      %3833 = vst.msk [vmem:[#allocation3 + $0x1f0] sm:$0xff] %vm1851, %v3769
      %v3834 = vld [vmem:[%s1015 + $0x2] sm:$0xff]
      %v3835 = vld [vmem:[%s1015 + $0xa] sm:$0xff]
      %v3836 = vld [vmem:[%s1015 + $0x1a] sm:$0xff]
      %v3837 = vld [vmem:[%s1015 + $0x22] sm:$0xff]
      %v3838 = vld [vmem:[%s1015 + $0x32] sm:$0xff]
      %v3839 = vld [vmem:[%s1015 + $0x3a] sm:$0xff]
      %v3840 = vld [vmem:[%s1015 + $0x4a] sm:$0xff]
      %v3841 = vld [vmem:[%s1015 + $0x52] sm:$0xff]
      %v3842 = vld [vmem:[%s1015 + $0x62] sm:$0xff]
      %v3843 = vld [vmem:[%s1015 + $0x6a] sm:$0xff]
      %v3844 = vld [vmem:[%s1015 + $0x7a] sm:$0xff]
      %v3845 = vld [vmem:[%s1015 + $0x82] sm:$0xff]
      %v3846 = vld [vmem:[%s1015 + $0x92] sm:$0xff]
      %v3847 = vld [vmem:[%s1015 + $0x9a] sm:$0xff]
      %v3848 = vld [vmem:[%s1015 + $0xaa] sm:$0xff]
      %v3849 = vld [vmem:[%s1015 + $0xb2] sm:$0xff]
      %v3850 = vld [vmem:[%s1015 + $0xc2] sm:$0xff]
      %v3851 = vld [vmem:[%s1015 + $0xca] sm:$0xff]
      %v3852 = vld [vmem:[%s1015 + $0xda] sm:$0xff]
      %v3853 = vld [vmem:[%s1015 + $0xe2] sm:$0xff]
      %v3854 = vld [vmem:[%s1015 + $0xf2] sm:$0xff]
      %v3855 = vld [vmem:[%s1015 + $0xfa] sm:$0xff]
      %v3856 = vld [vmem:[%s1015 + $0x10a] sm:$0xff]
      %v3857 = vld [vmem:[%s1015 + $0x112] sm:$0xff]
      %v3858 = vld [vmem:[%s1015 + $0x122] sm:$0xff]
      %v3859 = vld [vmem:[%s1015 + $0x12a] sm:$0xff]
      %v3860 = vld [vmem:[%s1015 + $0x13a] sm:$0xff]
      %v3861 = vld [vmem:[%s1015 + $0x142] sm:$0xff]
      %v3862 = vld [vmem:[%s1015 + $0x152] sm:$0xff]
      %v3863 = vld [vmem:[%s1015 + $0x15a] sm:$0xff]
      %v3864 = vld [vmem:[%s1015 + $0x16a] sm:$0xff]
      %v3865 = vld [vmem:[%s1015 + $0x172] sm:$0xff]
      %3898 = vrot.lane.b32.xlu0 %v3834, 80
      %v3899 = vpop.permute.xlu0 %3898
      %3900 = vrot.lane.b32.xlu0 %v3835, 80
      %v3901 = vpop.permute.xlu0 %3900
      %3902 = vrot.lane.b32.xlu0 %v3836, 80
      %v3903 = vpop.permute.xlu0 %3902
      %3904 = vrot.lane.b32.xlu0 %v3837, 80
      %v3905 = vpop.permute.xlu0 %3904
      %3906 = vrot.lane.b32.xlu0 %v3838, 80
      %v3907 = vpop.permute.xlu0 %3906
      %3908 = vrot.lane.b32.xlu0 %v3839, 80
      %v3909 = vpop.permute.xlu0 %3908
      %3910 = vrot.lane.b32.xlu0 %v3840, 80
      %v3911 = vpop.permute.xlu0 %3910
      %3912 = vrot.lane.b32.xlu0 %v3841, 80
      %v3913 = vpop.permute.xlu0 %3912
      %3914 = vrot.lane.b32.xlu0 %v3842, 80
      %v3915 = vpop.permute.xlu0 %3914
      %3916 = vrot.lane.b32.xlu0 %v3843, 80
      %v3917 = vpop.permute.xlu0 %3916
      %3918 = vrot.lane.b32.xlu0 %v3844, 80
      %v3919 = vpop.permute.xlu0 %3918
      %3920 = vrot.lane.b32.xlu0 %v3845, 80
      %v3921 = vpop.permute.xlu0 %3920
      %3922 = vrot.lane.b32.xlu0 %v3846, 80
      %v3923 = vpop.permute.xlu0 %3922
      %3924 = vrot.lane.b32.xlu0 %v3847, 80
      %v3925 = vpop.permute.xlu0 %3924
      %3926 = vrot.lane.b32.xlu0 %v3848, 80
      %v3927 = vpop.permute.xlu0 %3926
      %3928 = vrot.lane.b32.xlu0 %v3849, 80
      %v3929 = vpop.permute.xlu0 %3928
      %3930 = vrot.lane.b32.xlu0 %v3850, 80
      %v3931 = vpop.permute.xlu0 %3930
      %3932 = vrot.lane.b32.xlu0 %v3851, 80
      %v3933 = vpop.permute.xlu0 %3932
      %3934 = vrot.lane.b32.xlu0 %v3852, 80
      %v3935 = vpop.permute.xlu0 %3934
      %3936 = vrot.lane.b32.xlu0 %v3853, 80
      %v3937 = vpop.permute.xlu0 %3936
      %3938 = vrot.lane.b32.xlu0 %v3854, 80
      %v3939 = vpop.permute.xlu0 %3938
      %3940 = vrot.lane.b32.xlu0 %v3855, 80
      %v3941 = vpop.permute.xlu0 %3940
      %3942 = vrot.lane.b32.xlu0 %v3856, 80
      %v3943 = vpop.permute.xlu0 %3942
      %3944 = vrot.lane.b32.xlu0 %v3857, 80
      %v3945 = vpop.permute.xlu0 %3944
      %3946 = vrot.lane.b32.xlu0 %v3858, 80
      %v3947 = vpop.permute.xlu0 %3946
      %3948 = vrot.lane.b32.xlu0 %v3859, 80
      %v3949 = vpop.permute.xlu0 %3948
      %3950 = vrot.lane.b32.xlu0 %v3860, 80
      %v3951 = vpop.permute.xlu0 %3950
      %3952 = vrot.lane.b32.xlu0 %v3861, 80
      %v3953 = vpop.permute.xlu0 %3952
      %3954 = vrot.lane.b32.xlu0 %v3862, 80
      %v3955 = vpop.permute.xlu0 %3954
      %3956 = vrot.lane.b32.xlu0 %v3863, 80
      %v3957 = vpop.permute.xlu0 %3956
      %3958 = vrot.lane.b32.xlu0 %v3864, 80
      %v3959 = vpop.permute.xlu0 %3958
      %3960 = vrot.lane.b32.xlu0 %v3865, 80
      %v3961 = vpop.permute.xlu0 %3960
      %3994 = vst.msk [vmem:[#allocation3] sm:$0xff] %vm2044, %v3899
      %3995 = vst.msk [vmem:[#allocation3 + $0x10] sm:$0xff] %vm2044, %v3901
      %3996 = vst.msk [vmem:[#allocation3 + $0x20] sm:$0xff] %vm2044, %v3903
      %3997 = vst.msk [vmem:[#allocation3 + $0x30] sm:$0xff] %vm2044, %v3905
      %3998 = vst.msk [vmem:[#allocation3 + $0x40] sm:$0xff] %vm2044, %v3907
      %3999 = vst.msk [vmem:[#allocation3 + $0x50] sm:$0xff] %vm2044, %v3909
      %4000 = vst.msk [vmem:[#allocation3 + $0x60] sm:$0xff] %vm2044, %v3911
      %4001 = vst.msk [vmem:[#allocation3 + $0x70] sm:$0xff] %vm2044, %v3913
      %4002 = vst.msk [vmem:[#allocation3 + $0x80] sm:$0xff] %vm2044, %v3915
      %4003 = vst.msk [vmem:[#allocation3 + $0x90] sm:$0xff] %vm2044, %v3917
      %4004 = vst.msk [vmem:[#allocation3 + $0xa0] sm:$0xff] %vm2044, %v3919
      %4005 = vst.msk [vmem:[#allocation3 + $0xb0] sm:$0xff] %vm2044, %v3921
      %4006 = vst.msk [vmem:[#allocation3 + $0xc0] sm:$0xff] %vm2044, %v3923
      %4007 = vst.msk [vmem:[#allocation3 + $0xd0] sm:$0xff] %vm2044, %v3925
      %4008 = vst.msk [vmem:[#allocation3 + $0xe0] sm:$0xff] %vm2044, %v3927
      %4009 = vst.msk [vmem:[#allocation3 + $0xf0] sm:$0xff] %vm2044, %v3929
      %4010 = vst.msk [vmem:[#allocation3 + $0x100] sm:$0xff] %vm2044, %v3931
      %4011 = vst.msk [vmem:[#allocation3 + $0x110] sm:$0xff] %vm2044, %v3933
      %4012 = vst.msk [vmem:[#allocation3 + $0x120] sm:$0xff] %vm2044, %v3935
      %4013 = vst.msk [vmem:[#allocation3 + $0x130] sm:$0xff] %vm2044, %v3937
      %4014 = vst.msk [vmem:[#allocation3 + $0x140] sm:$0xff] %vm2044, %v3939
      %4015 = vst.msk [vmem:[#allocation3 + $0x150] sm:$0xff] %vm2044, %v3941
      %4016 = vst.msk [vmem:[#allocation3 + $0x160] sm:$0xff] %vm2044, %v3943
      %4017 = vst.msk [vmem:[#allocation3 + $0x170] sm:$0xff] %vm2044, %v3945
      %4018 = vst.msk [vmem:[#allocation3 + $0x180] sm:$0xff] %vm2044, %v3947
      %4019 = vst.msk [vmem:[#allocation3 + $0x190] sm:$0xff] %vm2044, %v3949
      %4020 = vst.msk [vmem:[#allocation3 + $0x1a0] sm:$0xff] %vm2044, %v3951
      %4021 = vst.msk [vmem:[#allocation3 + $0x1b0] sm:$0xff] %vm2044, %v3953
      %4022 = vst.msk [vmem:[#allocation3 + $0x1c0] sm:$0xff] %vm2044, %v3955
      %4023 = vst.msk [vmem:[#allocation3 + $0x1d0] sm:$0xff] %vm2044, %v3957
      %4024 = vst.msk [vmem:[#allocation3 + $0x1e0] sm:$0xff] %vm2044, %v3959
      %4025 = vst.msk [vmem:[#allocation3 + $0x1f0] sm:$0xff] %vm2044, %v3961
      %v4026 = vld [vmem:[%s2077] sm:$0xff]
      %v4027 = vld [vmem:[%s2077 + $0x8] sm:$0xff]
      %v4028 = vld [vmem:[%s2077 + $0x18] sm:$0xff]
      %v4029 = vld [vmem:[%s2077 + $0x20] sm:$0xff]
      %v4030 = vld [vmem:[%s2077 + $0x30] sm:$0xff]
      %v4031 = vld [vmem:[%s2077 + $0x38] sm:$0xff]
      %v4032 = vld [vmem:[%s2077 + $0x48] sm:$0xff]
      %v4033 = vld [vmem:[%s2077 + $0x50] sm:$0xff]
      %v4034 = vld [vmem:[%s2077 + $0x60] sm:$0xff]
      %v4035 = vld [vmem:[%s2077 + $0x68] sm:$0xff]
      %v4036 = vld [vmem:[%s2077 + $0x78] sm:$0xff]
      %v4037 = vld [vmem:[%s2077 + $0x80] sm:$0xff]
      %v4038 = vld [vmem:[%s2077 + $0x90] sm:$0xff]
      %v4039 = vld [vmem:[%s2077 + $0x98] sm:$0xff]
      %v4040 = vld [vmem:[%s2077 + $0xa8] sm:$0xff]
      %v4041 = vld [vmem:[%s2077 + $0xb0] sm:$0xff]
      %v4042 = vld [vmem:[%s2077 + $0xc0] sm:$0xff]
      %v4043 = vld [vmem:[%s2077 + $0xc8] sm:$0xff]
      %v4044 = vld [vmem:[%s2077 + $0xd8] sm:$0xff]
      %v4045 = vld [vmem:[%s2077 + $0xe0] sm:$0xff]
      %v4046 = vld [vmem:[%s2077 + $0xf0] sm:$0xff]
      %v4047 = vld [vmem:[%s2077 + $0xf8] sm:$0xff]
      %v4048 = vld [vmem:[%s2077 + $0x108] sm:$0xff]
      %v4049 = vld [vmem:[%s2077 + $0x110] sm:$0xff]
      %v4050 = vld [vmem:[%s2077 + $0x120] sm:$0xff]
      %v4051 = vld [vmem:[%s2077 + $0x128] sm:$0xff]
      %v4052 = vld [vmem:[%s2077 + $0x138] sm:$0xff]
      %v4053 = vld [vmem:[%s2077 + $0x140] sm:$0xff]
      %v4054 = vld [vmem:[%s2077 + $0x150] sm:$0xff]
      %v4055 = vld [vmem:[%s2077 + $0x158] sm:$0xff]
      %v4056 = vld [vmem:[%s2077 + $0x168] sm:$0xff]
      %v4057 = vld [vmem:[%s2077 + $0x170] sm:$0xff]
      %4090 = vrot.lane.b32.xlu0 %v4026, 96
      %v4091 = vpop.permute.xlu0 %4090
      %4092 = vrot.lane.b32.xlu0 %v4027, 96
      %v4093 = vpop.permute.xlu0 %4092
      %4094 = vrot.lane.b32.xlu0 %v4028, 96
      %v4095 = vpop.permute.xlu0 %4094
      %4096 = vrot.lane.b32.xlu0 %v4029, 96
      %v4097 = vpop.permute.xlu0 %4096
      %4098 = vrot.lane.b32.xlu0 %v4030, 96
      %v4099 = vpop.permute.xlu0 %4098
      %4100 = vrot.lane.b32.xlu0 %v4031, 96
      %v4101 = vpop.permute.xlu0 %4100
      %4102 = vrot.lane.b32.xlu0 %v4032, 96
      %v4103 = vpop.permute.xlu0 %4102
      %4104 = vrot.lane.b32.xlu0 %v4033, 96
      %v4105 = vpop.permute.xlu0 %4104
      %4106 = vrot.lane.b32.xlu0 %v4034, 96
      %v4107 = vpop.permute.xlu0 %4106
      %4108 = vrot.lane.b32.xlu0 %v4035, 96
      %v4109 = vpop.permute.xlu0 %4108
      %4110 = vrot.lane.b32.xlu0 %v4036, 96
      %v4111 = vpop.permute.xlu0 %4110
      %4112 = vrot.lane.b32.xlu0 %v4037, 96
      %v4113 = vpop.permute.xlu0 %4112
      %4114 = vrot.lane.b32.xlu0 %v4038, 96
      %v4115 = vpop.permute.xlu0 %4114
      %4116 = vrot.lane.b32.xlu0 %v4039, 96
      %v4117 = vpop.permute.xlu0 %4116
      %4118 = vrot.lane.b32.xlu0 %v4040, 96
      %v4119 = vpop.permute.xlu0 %4118
      %4120 = vrot.lane.b32.xlu0 %v4041, 96
      %v4121 = vpop.permute.xlu0 %4120
      %4122 = vrot.lane.b32.xlu0 %v4042, 96
      %v4123 = vpop.permute.xlu0 %4122
      %4124 = vrot.lane.b32.xlu0 %v4043, 96
      %v4125 = vpop.permute.xlu0 %4124
      %4126 = vrot.lane.b32.xlu0 %v4044, 96
      %v4127 = vpop.permute.xlu0 %4126
      %4128 = vrot.lane.b32.xlu0 %v4045, 96
      %v4129 = vpop.permute.xlu0 %4128
      %4130 = vrot.lane.b32.xlu0 %v4046, 96
      %v4131 = vpop.permute.xlu0 %4130
      %4132 = vrot.lane.b32.xlu0 %v4047, 96
      %v4133 = vpop.permute.xlu0 %4132
      %4134 = vrot.lane.b32.xlu0 %v4048, 96
      %v4135 = vpop.permute.xlu0 %4134
      %4136 = vrot.lane.b32.xlu0 %v4049, 96
      %v4137 = vpop.permute.xlu0 %4136
      %4138 = vrot.lane.b32.xlu0 %v4050, 96
      %v4139 = vpop.permute.xlu0 %4138
      %4140 = vrot.lane.b32.xlu0 %v4051, 96
      %v4141 = vpop.permute.xlu0 %4140
      %4142 = vrot.lane.b32.xlu0 %v4052, 96
      %v4143 = vpop.permute.xlu0 %4142
      %4144 = vrot.lane.b32.xlu0 %v4053, 96
      %v4145 = vpop.permute.xlu0 %4144
      %4146 = vrot.lane.b32.xlu0 %v4054, 96
      %v4147 = vpop.permute.xlu0 %4146
      %4148 = vrot.lane.b32.xlu0 %v4055, 96
      %v4149 = vpop.permute.xlu0 %4148
      %4150 = vrot.lane.b32.xlu0 %v4056, 96
      %v4151 = vpop.permute.xlu0 %4150
      %4152 = vrot.lane.b32.xlu0 %v4057, 96
      %v4153 = vpop.permute.xlu0 %4152
      %4186 = vst.msk [vmem:[#allocation3] sm:$0xff] %vm2238, %v4091
      %4187 = vst.msk [vmem:[#allocation3 + $0x10] sm:$0xff] %vm2238, %v4093
      %4188 = vst.msk [vmem:[#allocation3 + $0x20] sm:$0xff] %vm2238, %v4095
      %4189 = vst.msk [vmem:[#allocation3 + $0x30] sm:$0xff] %vm2238, %v4097
      %4190 = vst.msk [vmem:[#allocation3 + $0x40] sm:$0xff] %vm2238, %v4099
      %4191 = vst.msk [vmem:[#allocation3 + $0x50] sm:$0xff] %vm2238, %v4101
      %4192 = vst.msk [vmem:[#allocation3 + $0x60] sm:$0xff] %vm2238, %v4103
      %4193 = vst.msk [vmem:[#allocation3 + $0x70] sm:$0xff] %vm2238, %v4105
      %4194 = vst.msk [vmem:[#allocation3 + $0x80] sm:$0xff] %vm2238, %v4107
      %4195 = vst.msk [vmem:[#allocation3 + $0x90] sm:$0xff] %vm2238, %v4109
      %4196 = vst.msk [vmem:[#allocation3 + $0xa0] sm:$0xff] %vm2238, %v4111
      %4197 = vst.msk [vmem:[#allocation3 + $0xb0] sm:$0xff] %vm2238, %v4113
      %4198 = vst.msk [vmem:[#allocation3 + $0xc0] sm:$0xff] %vm2238, %v4115
      %4199 = vst.msk [vmem:[#allocation3 + $0xd0] sm:$0xff] %vm2238, %v4117
      %4200 = vst.msk [vmem:[#allocation3 + $0xe0] sm:$0xff] %vm2238, %v4119
      %4201 = vst.msk [vmem:[#allocation3 + $0xf0] sm:$0xff] %vm2238, %v4121
      %4202 = vst.msk [vmem:[#allocation3 + $0x100] sm:$0xff] %vm2238, %v4123
      %4203 = vst.msk [vmem:[#allocation3 + $0x110] sm:$0xff] %vm2238, %v4125
      %4204 = vst.msk [vmem:[#allocation3 + $0x120] sm:$0xff] %vm2238, %v4127
      %4205 = vst.msk [vmem:[#allocation3 + $0x130] sm:$0xff] %vm2238, %v4129
      %4206 = vst.msk [vmem:[#allocation3 + $0x140] sm:$0xff] %vm2238, %v4131
      %4207 = vst.msk [vmem:[#allocation3 + $0x150] sm:$0xff] %vm2238, %v4133
      %4208 = vst.msk [vmem:[#allocation3 + $0x160] sm:$0xff] %vm2238, %v4135
      %4209 = vst.msk [vmem:[#allocation3 + $0x170] sm:$0xff] %vm2238, %v4137
      %4210 = vst.msk [vmem:[#allocation3 + $0x180] sm:$0xff] %vm2238, %v4139
      %4211 = vst.msk [vmem:[#allocation3 + $0x190] sm:$0xff] %vm2238, %v4141
      %4212 = vst.msk [vmem:[#allocation3 + $0x1a0] sm:$0xff] %vm2238, %v4143
      %4213 = vst.msk [vmem:[#allocation3 + $0x1b0] sm:$0xff] %vm2238, %v4145
      %4214 = vst.msk [vmem:[#allocation3 + $0x1c0] sm:$0xff] %vm2238, %v4147
      %4215 = vst.msk [vmem:[#allocation3 + $0x1d0] sm:$0xff] %vm2238, %v4149
      %4216 = vst.msk [vmem:[#allocation3 + $0x1e0] sm:$0xff] %vm2238, %v4151
      %4217 = vst.msk [vmem:[#allocation3 + $0x1f0] sm:$0xff] %vm2238, %v4153
      %v4218 = vld [vmem:[%s2077 + $0x1] sm:$0xff]
      %v4219 = vld [vmem:[%s2077 + $0x9] sm:$0xff]
      %v4220 = vld [vmem:[%s2077 + $0x19] sm:$0xff]
      %v4221 = vld [vmem:[%s2077 + $0x21] sm:$0xff]
      %v4222 = vld [vmem:[%s2077 + $0x31] sm:$0xff]
      %v4223 = vld [vmem:[%s2077 + $0x39] sm:$0xff]
      %v4224 = vld [vmem:[%s2077 + $0x49] sm:$0xff]
      %v4225 = vld [vmem:[%s2077 + $0x51] sm:$0xff]
      %v4226 = vld [vmem:[%s2077 + $0x61] sm:$0xff]
      %v4227 = vld [vmem:[%s2077 + $0x69] sm:$0xff]
      %v4228 = vld [vmem:[%s2077 + $0x79] sm:$0xff]
      %v4229 = vld [vmem:[%s2077 + $0x81] sm:$0xff]
      %v4230 = vld [vmem:[%s2077 + $0x91] sm:$0xff]
      %v4231 = vld [vmem:[%s2077 + $0x99] sm:$0xff]
      %v4232 = vld [vmem:[%s2077 + $0xa9] sm:$0xff]
      %v4233 = vld [vmem:[%s2077 + $0xb1] sm:$0xff]
      %v4234 = vld [vmem:[%s2077 + $0xc1] sm:$0xff]
      %v4235 = vld [vmem:[%s2077 + $0xc9] sm:$0xff]
      %v4236 = vld [vmem:[%s2077 + $0xd9] sm:$0xff]
      %v4237 = vld [vmem:[%s2077 + $0xe1] sm:$0xff]
      %v4238 = vld [vmem:[%s2077 + $0xf1] sm:$0xff]
      %v4239 = vld [vmem:[%s2077 + $0xf9] sm:$0xff]
      %v4240 = vld [vmem:[%s2077 + $0x109] sm:$0xff]
      %v4241 = vld [vmem:[%s2077 + $0x111] sm:$0xff]
      %v4242 = vld [vmem:[%s2077 + $0x121] sm:$0xff]
      %v4243 = vld [vmem:[%s2077 + $0x129] sm:$0xff]
      %v4244 = vld [vmem:[%s2077 + $0x139] sm:$0xff]
      %v4245 = vld [vmem:[%s2077 + $0x141] sm:$0xff]
      %v4246 = vld [vmem:[%s2077 + $0x151] sm:$0xff]
      %v4247 = vld [vmem:[%s2077 + $0x159] sm:$0xff]
      %v4248 = vld [vmem:[%s2077 + $0x169] sm:$0xff]
      %v4249 = vld [vmem:[%s2077 + $0x171] sm:$0xff]
      %4282 = vrot.lane.b32.xlu0 %v4218, 112
      %v4283 = vpop.permute.xlu0 %4282
      %4284 = vrot.lane.b32.xlu0 %v4219, 112
      %v4285 = vpop.permute.xlu0 %4284
      %4286 = vrot.lane.b32.xlu0 %v4220, 112
      %v4287 = vpop.permute.xlu0 %4286
      %4288 = vrot.lane.b32.xlu0 %v4221, 112
      %v4289 = vpop.permute.xlu0 %4288
      %4290 = vrot.lane.b32.xlu0 %v4222, 112
      %v4291 = vpop.permute.xlu0 %4290
      %4292 = vrot.lane.b32.xlu0 %v4223, 112
      %v4293 = vpop.permute.xlu0 %4292
      %4294 = vrot.lane.b32.xlu0 %v4224, 112
      %v4295 = vpop.permute.xlu0 %4294
      %4296 = vrot.lane.b32.xlu0 %v4225, 112
      %v4297 = vpop.permute.xlu0 %4296
      %4298 = vrot.lane.b32.xlu0 %v4226, 112
      %v4299 = vpop.permute.xlu0 %4298
      %4300 = vrot.lane.b32.xlu0 %v4227, 112
      %v4301 = vpop.permute.xlu0 %4300
      %4302 = vrot.lane.b32.xlu0 %v4228, 112
      %v4303 = vpop.permute.xlu0 %4302
      %4304 = vrot.lane.b32.xlu0 %v4229, 112
      %v4305 = vpop.permute.xlu0 %4304
      %4306 = vrot.lane.b32.xlu0 %v4230, 112
      %v4307 = vpop.permute.xlu0 %4306
      %4308 = vrot.lane.b32.xlu0 %v4231, 112
      %v4309 = vpop.permute.xlu0 %4308
      %4310 = vrot.lane.b32.xlu0 %v4232, 112
      %v4311 = vpop.permute.xlu0 %4310
      %4312 = vrot.lane.b32.xlu0 %v4233, 112
      %v4313 = vpop.permute.xlu0 %4312
      %4314 = vrot.lane.b32.xlu0 %v4234, 112
      %v4315 = vpop.permute.xlu0 %4314
      %4316 = vrot.lane.b32.xlu0 %v4235, 112
      %v4317 = vpop.permute.xlu0 %4316
      %4318 = vrot.lane.b32.xlu0 %v4236, 112
      %v4319 = vpop.permute.xlu0 %4318
      %4320 = vrot.lane.b32.xlu0 %v4237, 112
      %v4321 = vpop.permute.xlu0 %4320
      %4322 = vrot.lane.b32.xlu0 %v4238, 112
      %v4323 = vpop.permute.xlu0 %4322
      %4324 = vrot.lane.b32.xlu0 %v4239, 112
      %v4325 = vpop.permute.xlu0 %4324
      %4326 = vrot.lane.b32.xlu0 %v4240, 112
      %v4327 = vpop.permute.xlu0 %4326
      %4328 = vrot.lane.b32.xlu0 %v4241, 112
      %v4329 = vpop.permute.xlu0 %4328
      %4330 = vrot.lane.b32.xlu0 %v4242, 112
      %v4331 = vpop.permute.xlu0 %4330
      %4332 = vrot.lane.b32.xlu0 %v4243, 112
      %v4333 = vpop.permute.xlu0 %4332
      %4334 = vrot.lane.b32.xlu0 %v4244, 112
      %v4335 = vpop.permute.xlu0 %4334
      %4336 = vrot.lane.b32.xlu0 %v4245, 112
      %v4337 = vpop.permute.xlu0 %4336
      %4338 = vrot.lane.b32.xlu0 %v4246, 112
      %v4339 = vpop.permute.xlu0 %4338
      %4340 = vrot.lane.b32.xlu0 %v4247, 112
      %v4341 = vpop.permute.xlu0 %4340
      %4342 = vrot.lane.b32.xlu0 %v4248, 112
      %v4343 = vpop.permute.xlu0 %4342
      %4344 = vrot.lane.b32.xlu0 %v4249, 112
      %v4345 = vpop.permute.xlu0 %4344
      %4378 = vst.msk [vmem:[#allocation3] sm:$0xff] %vm2431, %v4283
      %4379 = vst.msk [vmem:[#allocation3 + $0x10] sm:$0xff] %vm2431, %v4285
      %4380 = vst.msk [vmem:[#allocation3 + $0x20] sm:$0xff] %vm2431, %v4287
      %4381 = vst.msk [vmem:[#allocation3 + $0x30] sm:$0xff] %vm2431, %v4289
      %4382 = vst.msk [vmem:[#allocation3 + $0x40] sm:$0xff] %vm2431, %v4291
      %4383 = vst.msk [vmem:[#allocation3 + $0x50] sm:$0xff] %vm2431, %v4293
      %4384 = vst.msk [vmem:[#allocation3 + $0x60] sm:$0xff] %vm2431, %v4295
      %4385 = vst.msk [vmem:[#allocation3 + $0x70] sm:$0xff] %vm2431, %v4297
      %4386 = vst.msk [vmem:[#allocation3 + $0x80] sm:$0xff] %vm2431, %v4299
      %4387 = vst.msk [vmem:[#allocation3 + $0x90] sm:$0xff] %vm2431, %v4301
      %4388 = vst.msk [vmem:[#allocation3 + $0xa0] sm:$0xff] %vm2431, %v4303
      %4389 = vst.msk [vmem:[#allocation3 + $0xb0] sm:$0xff] %vm2431, %v4305
      %4390 = vst.msk [vmem:[#allocation3 + $0xc0] sm:$0xff] %vm2431, %v4307
      %4391 = vst.msk [vmem:[#allocation3 + $0xd0] sm:$0xff] %vm2431, %v4309
      %4392 = vst.msk [vmem:[#allocation3 + $0xe0] sm:$0xff] %vm2431, %v4311
      %4393 = vst.msk [vmem:[#allocation3 + $0xf0] sm:$0xff] %vm2431, %v4313
      %4394 = vst.msk [vmem:[#allocation3 + $0x100] sm:$0xff] %vm2431, %v4315
      %4395 = vst.msk [vmem:[#allocation3 + $0x110] sm:$0xff] %vm2431, %v4317
      %4396 = vst.msk [vmem:[#allocation3 + $0x120] sm:$0xff] %vm2431, %v4319
      %4397 = vst.msk [vmem:[#allocation3 + $0x130] sm:$0xff] %vm2431, %v4321
      %4398 = vst.msk [vmem:[#allocation3 + $0x140] sm:$0xff] %vm2431, %v4323
      %4399 = vst.msk [vmem:[#allocation3 + $0x150] sm:$0xff] %vm2431, %v4325
      %4400 = vst.msk [vmem:[#allocation3 + $0x160] sm:$0xff] %vm2431, %v4327
      %4401 = vst.msk [vmem:[#allocation3 + $0x170] sm:$0xff] %vm2431, %v4329
      %4402 = vst.msk [vmem:[#allocation3 + $0x180] sm:$0xff] %vm2431, %v4331
      %4403 = vst.msk [vmem:[#allocation3 + $0x190] sm:$0xff] %vm2431, %v4333
      %4404 = vst.msk [vmem:[#allocation3 + $0x1a0] sm:$0xff] %vm2431, %v4335
      %4405 = vst.msk [vmem:[#allocation3 + $0x1b0] sm:$0xff] %vm2431, %v4337
      %4406 = vst.msk [vmem:[#allocation3 + $0x1c0] sm:$0xff] %vm2431, %v4339
      %4407 = vst.msk [vmem:[#allocation3 + $0x1d0] sm:$0xff] %vm2431, %v4341
      %4408 = vst.msk [vmem:[#allocation3 + $0x1e0] sm:$0xff] %vm2431, %v4343
      %4409 = vst.msk [vmem:[#allocation3 + $0x1f0] sm:$0xff] %vm2431, %v4345
      %v4410 = vld [vmem:[%s2077 + $0x2] sm:$0xff]
      %v4411 = vld [vmem:[%s2077 + $0xa] sm:$0xff]
      %v4412 = vld [vmem:[%s2077 + $0x1a] sm:$0xff]
      %v4413 = vld [vmem:[%s2077 + $0x22] sm:$0xff]
      %v4414 = vld [vmem:[%s2077 + $0x32] sm:$0xff]
      %v4415 = vld [vmem:[%s2077 + $0x3a] sm:$0xff]
      %v4416 = vld [vmem:[%s2077 + $0x4a] sm:$0xff]
      %v4417 = vld [vmem:[%s2077 + $0x52] sm:$0xff]
      %v4418 = vld [vmem:[%s2077 + $0x62] sm:$0xff]
      %v4419 = vld [vmem:[%s2077 + $0x6a] sm:$0xff]
      %v4420 = vld [vmem:[%s2077 + $0x7a] sm:$0xff]
      %v4421 = vld [vmem:[%s2077 + $0x82] sm:$0xff]
      %v4422 = vld [vmem:[%s2077 + $0x92] sm:$0xff]
      %v4423 = vld [vmem:[%s2077 + $0x9a] sm:$0xff]
      %v4424 = vld [vmem:[%s2077 + $0xaa] sm:$0xff]
      %v4425 = vld [vmem:[%s2077 + $0xb2] sm:$0xff]
      %v4426 = vld [vmem:[%s2077 + $0xc2] sm:$0xff]
      %v4427 = vld [vmem:[%s2077 + $0xca] sm:$0xff]
      %v4428 = vld [vmem:[%s2077 + $0xda] sm:$0xff]
      %v4429 = vld [vmem:[%s2077 + $0xe2] sm:$0xff]
      %v4430 = vld [vmem:[%s2077 + $0xf2] sm:$0xff]
      %v4431 = vld [vmem:[%s2077 + $0xfa] sm:$0xff]
      %v4432 = vld [vmem:[%s2077 + $0x10a] sm:$0xff]
      %v4433 = vld [vmem:[%s2077 + $0x112] sm:$0xff]
      %v4434 = vld [vmem:[%s2077 + $0x122] sm:$0xff]
      %v4435 = vld [vmem:[%s2077 + $0x12a] sm:$0xff]
      %v4436 = vld [vmem:[%s2077 + $0x13a] sm:$0xff]
      %v4437 = vld [vmem:[%s2077 + $0x142] sm:$0xff]
      %v4438 = vld [vmem:[%s2077 + $0x152] sm:$0xff]
      %v4439 = vld [vmem:[%s2077 + $0x15a] sm:$0xff]
      %v4440 = vld [vmem:[%s2077 + $0x16a] sm:$0xff]
      %v4441 = vld [vmem:[%s2077 + $0x172] sm:$0xff]
      %4442 = vst.msk [vmem:[#allocation3 + $0x8] sm:$0xff] %vm333, %v4410
      %4443 = vst.msk [vmem:[#allocation3 + $0x18] sm:$0xff] %vm333, %v4411
      %4444 = vst.msk [vmem:[#allocation3 + $0x28] sm:$0xff] %vm333, %v4412
      %4445 = vst.msk [vmem:[#allocation3 + $0x38] sm:$0xff] %vm333, %v4413
      %4446 = vst.msk [vmem:[#allocation3 + $0x48] sm:$0xff] %vm333, %v4414
      %4447 = vst.msk [vmem:[#allocation3 + $0x58] sm:$0xff] %vm333, %v4415
      %4448 = vst.msk [vmem:[#allocation3 + $0x68] sm:$0xff] %vm333, %v4416
      %4449 = vst.msk [vmem:[#allocation3 + $0x78] sm:$0xff] %vm333, %v4417
      %4450 = vst.msk [vmem:[#allocation3 + $0x88] sm:$0xff] %vm333, %v4418
      %4451 = vst.msk [vmem:[#allocation3 + $0x98] sm:$0xff] %vm333, %v4419
      %4452 = vst.msk [vmem:[#allocation3 + $0xa8] sm:$0xff] %vm333, %v4420
      %4453 = vst.msk [vmem:[#allocation3 + $0xb8] sm:$0xff] %vm333, %v4421
      %4454 = vst.msk [vmem:[#allocation3 + $0xc8] sm:$0xff] %vm333, %v4422
      %4455 = vst.msk [vmem:[#allocation3 + $0xd8] sm:$0xff] %vm333, %v4423
      %4456 = vst.msk [vmem:[#allocation3 + $0xe8] sm:$0xff] %vm333, %v4424
      %4457 = vst.msk [vmem:[#allocation3 + $0xf8] sm:$0xff] %vm333, %v4425
      %4458 = vst.msk [vmem:[#allocation3 + $0x108] sm:$0xff] %vm333, %v4426
      %4459 = vst.msk [vmem:[#allocation3 + $0x118] sm:$0xff] %vm333, %v4427
      %4460 = vst.msk [vmem:[#allocation3 + $0x128] sm:$0xff] %vm333, %v4428
      %4461 = vst.msk [vmem:[#allocation3 + $0x138] sm:$0xff] %vm333, %v4429
      %4462 = vst.msk [vmem:[#allocation3 + $0x148] sm:$0xff] %vm333, %v4430
      %4463 = vst.msk [vmem:[#allocation3 + $0x158] sm:$0xff] %vm333, %v4431
      %4464 = vst.msk [vmem:[#allocation3 + $0x168] sm:$0xff] %vm333, %v4432
      %4465 = vst.msk [vmem:[#allocation3 + $0x178] sm:$0xff] %vm333, %v4433
      %4466 = vst.msk [vmem:[#allocation3 + $0x188] sm:$0xff] %vm333, %v4434
      %4467 = vst.msk [vmem:[#allocation3 + $0x198] sm:$0xff] %vm333, %v4435
      %4468 = vst.msk [vmem:[#allocation3 + $0x1a8] sm:$0xff] %vm333, %v4436
      %4469 = vst.msk [vmem:[#allocation3 + $0x1b8] sm:$0xff] %vm333, %v4437
      %4470 = vst.msk [vmem:[#allocation3 + $0x1c8] sm:$0xff] %vm333, %v4438
      %4471 = vst.msk [vmem:[#allocation3 + $0x1d8] sm:$0xff] %vm333, %v4439
      %4472 = vst.msk [vmem:[#allocation3 + $0x1e8] sm:$0xff] %vm333, %v4440
      %4473 = vst.msk [vmem:[#allocation3 + $0x1f8] sm:$0xff] %vm333, %v4441
      %v4474 = vld [vmem:[#allocation3] sm:$0xff]
      %v4475 = vld [vmem:[#allocation3 + $0x8] sm:$0xff]
      %v4476 = vld [vmem:[#allocation3 + $0x10] sm:$0xff]
      %v4477 = vld [vmem:[#allocation3 + $0x18] sm:$0xff]
      %v4478 = vld [vmem:[#allocation3 + $0x20] sm:$0xff]
      %v4479 = vld [vmem:[#allocation3 + $0x28] sm:$0xff]
      %v4480 = vld [vmem:[#allocation3 + $0x30] sm:$0xff]
      %v4481 = vld [vmem:[#allocation3 + $0x38] sm:$0xff]
      %v4482 = vld [vmem:[#allocation3 + $0x40] sm:$0xff]
      %v4483 = vld [vmem:[#allocation3 + $0x48] sm:$0xff]
      %v4484 = vld [vmem:[#allocation3 + $0x50] sm:$0xff]
      %v4485 = vld [vmem:[#allocation3 + $0x58] sm:$0xff]
      %v4486 = vld [vmem:[#allocation3 + $0x60] sm:$0xff]
      %v4487 = vld [vmem:[#allocation3 + $0x68] sm:$0xff]
      %v4488 = vld [vmem:[#allocation3 + $0x70] sm:$0xff]
      %v4489 = vld [vmem:[#allocation3 + $0x78] sm:$0xff]
      %v4490 = vld [vmem:[#allocation3 + $0x80] sm:$0xff]
      %v4491 = vld [vmem:[#allocation3 + $0x88] sm:$0xff]
      %v4492 = vld [vmem:[#allocation3 + $0x90] sm:$0xff]
      %v4493 = vld [vmem:[#allocation3 + $0x98] sm:$0xff]
      %v4494 = vld [vmem:[#allocation3 + $0xa0] sm:$0xff]
      %v4495 = vld [vmem:[#allocation3 + $0xa8] sm:$0xff]
      %v4496 = vld [vmem:[#allocation3 + $0xb0] sm:$0xff]
      %v4497 = vld [vmem:[#allocation3 + $0xb8] sm:$0xff]
      %v4498 = vld [vmem:[#allocation3 + $0xc0] sm:$0xff]
      %v4499 = vld [vmem:[#allocation3 + $0xc8] sm:$0xff]
      %v4500 = vld [vmem:[#allocation3 + $0xd0] sm:$0xff]
      %v4501 = vld [vmem:[#allocation3 + $0xd8] sm:$0xff]
      %v4502 = vld [vmem:[#allocation3 + $0xe0] sm:$0xff]
      %v4503 = vld [vmem:[#allocation3 + $0xe8] sm:$0xff]
      %v4504 = vld [vmem:[#allocation3 + $0xf0] sm:$0xff]
      %v4505 = vld [vmem:[#allocation3 + $0xf8] sm:$0xff]
      %v4506 = vld [vmem:[#allocation3 + $0x100] sm:$0xff]
      %v4507 = vld [vmem:[#allocation3 + $0x108] sm:$0xff]
      %v4508 = vld [vmem:[#allocation3 + $0x110] sm:$0xff]
      %v4509 = vld [vmem:[#allocation3 + $0x118] sm:$0xff]
      %v4510 = vld [vmem:[#allocation3 + $0x120] sm:$0xff]
      %v4511 = vld [vmem:[#allocation3 + $0x128] sm:$0xff]
      %v4512 = vld [vmem:[#allocation3 + $0x130] sm:$0xff]
      %v4513 = vld [vmem:[#allocation3 + $0x138] sm:$0xff]
      %v4514 = vld [vmem:[#allocation3 + $0x140] sm:$0xff]
      %v4515 = vld [vmem:[#allocation3 + $0x148] sm:$0xff]
      %v4516 = vld [vmem:[#allocation3 + $0x150] sm:$0xff]
      %v4517 = vld [vmem:[#allocation3 + $0x158] sm:$0xff]
      %v4518 = vld [vmem:[#allocation3 + $0x160] sm:$0xff]
      %v4519 = vld [vmem:[#allocation3 + $0x168] sm:$0xff]
      %v4520 = vld [vmem:[#allocation3 + $0x170] sm:$0xff]
      %v4521 = vld [vmem:[#allocation3 + $0x178] sm:$0xff]
      %v4522 = vld [vmem:[#allocation3 + $0x180] sm:$0xff]
      %v4523 = vld [vmem:[#allocation3 + $0x188] sm:$0xff]
      %v4524 = vld [vmem:[#allocation3 + $0x190] sm:$0xff]
      %v4525 = vld [vmem:[#allocation3 + $0x198] sm:$0xff]
      %v4526 = vld [vmem:[#allocation3 + $0x1a0] sm:$0xff]
      %v4527 = vld [vmem:[#allocation3 + $0x1a8] sm:$0xff]
      %v4528 = vld [vmem:[#allocation3 + $0x1b0] sm:$0xff]
      %v4529 = vld [vmem:[#allocation3 + $0x1b8] sm:$0xff]
      %v4530 = vld [vmem:[#allocation3 + $0x1c0] sm:$0xff]
      %v4531 = vld [vmem:[#allocation3 + $0x1c8] sm:$0xff]
      %v4532 = vld [vmem:[#allocation3 + $0x1d0] sm:$0xff]
      %v4533 = vld [vmem:[#allocation3 + $0x1d8] sm:$0xff]
      %v4534 = vld [vmem:[#allocation3 + $0x1e0] sm:$0xff]
      %v4535 = vld [vmem:[#allocation3 + $0x1e8] sm:$0xff]
      %v4536 = vld [vmem:[#allocation3 + $0x1f0] sm:$0xff]
      %v4537 = vld [vmem:[#allocation3 + $0x1f8] sm:$0xff]
      %v4538 = vld [vmem:[%s3] sm:$0xff]
      %v4539 = vld [vmem:[%s3 + $0x8] sm:$0xff]
      %v4540 = vld [vmem:[%s3 + $0x10] sm:$0xff]
      %v4541 = vld [vmem:[%s3 + $0x18] sm:$0xff]
      %v4542 = vld [vmem:[%s3 + $0x20] sm:$0xff]
      %v4543 = vld [vmem:[%s3 + $0x28] sm:$0xff]
      %v4544 = vld [vmem:[%s3 + $0x30] sm:$0xff]
      %v4545 = vld [vmem:[%s3 + $0x38] sm:$0xff]
      %v4546 = vld [vmem:[%s3 + $0x40] sm:$0xff]
      %v4547 = vld [vmem:[%s3 + $0x48] sm:$0xff]
      %v4548 = vld [vmem:[%s3 + $0x50] sm:$0xff]
      %v4549 = vld [vmem:[%s3 + $0x58] sm:$0xff]
      %v4550 = vld [vmem:[%s3 + $0x60] sm:$0xff]
      %v4551 = vld [vmem:[%s3 + $0x68] sm:$0xff]
      %v4552 = vld [vmem:[%s3 + $0x70] sm:$0xff]
      %v4553 = vld [vmem:[%s3 + $0x78] sm:$0xff]
      %v4554 = vld [vmem:[%s3 + $0x80] sm:$0xff]
      %v4555 = vld [vmem:[%s3 + $0x88] sm:$0xff]
      %v4556 = vld [vmem:[%s4] sm:$0x1]
      %v4558 = vlaneseq
      %v4559 = vshrl.u32 %v4558, 7
      %v4560 = vsub.s32 0, %v4559
      %v4561 = vrot.slane %v4556, %v4560
      %v4564 = vsel %vm333, %v4475, 0
      %v4567 = vsel %vm333, %v4477, 0
      %v4570 = vsel %vm333, %v4479, 0
      %v4573 = vsel %vm333, %v4481, 0
      %v4576 = vsel %vm333, %v4483, 0
      %v4579 = vsel %vm333, %v4485, 0
      %v4582 = vsel %vm333, %v4487, 0
      %v4585 = vsel %vm333, %v4489, 0
      %v4588 = vsel %vm333, %v4491, 0
      %v4591 = vsel %vm333, %v4493, 0
      %v4594 = vsel %vm333, %v4495, 0
      %v4597 = vsel %vm333, %v4497, 0
      %v4600 = vsel %vm333, %v4499, 0
      %v4603 = vsel %vm333, %v4501, 0
      %v4606 = vsel %vm333, %v4503, 0
      %v4609 = vsel %vm333, %v4505, 0
      %v4612 = vsel %vm333, %v4507, 0
      %v4615 = vsel %vm333, %v4509, 0
      %v4618 = vsel %vm333, %v4511, 0
      %v4621 = vsel %vm333, %v4513, 0
      %v4624 = vsel %vm333, %v4515, 0
      %v4627 = vsel %vm333, %v4517, 0
      %v4630 = vsel %vm333, %v4519, 0
      %v4633 = vsel %vm333, %v4521, 0
      %v4636 = vsel %vm333, %v4523, 0
      %v4639 = vsel %vm333, %v4525, 0
      %v4642 = vsel %vm333, %v4527, 0
      %v4645 = vsel %vm333, %v4529, 0
      %v4648 = vsel %vm333, %v4531, 0
      %v4651 = vsel %vm333, %v4533, 0
      %v4654 = vsel %vm333, %v4535, 0
      %v4657 = vsel %vm333, %v4537, 0
      %4659 = vmatprep.subr.mxu0 0.0
      %4660 = vmatpush1.msra.mxu0 %v4553
      %4661 = vmatprep.subr.mxu0 0.0
      %4662 = vmatpush1.msra.mxu0 %v4552
      %4663 = vmatprep.subr.mxu0 0.0
      %4664 = vmatpush1.msra.mxu0 %v4551
      %4665 = vmatprep.subr.mxu0 0.0
      %4666 = vmatpush1.msra.mxu0 %v4550
      %4667 = vmatprep.subr.mxu0 0.0
      %4668 = vmatpush1.msra.mxu0 %v4549
      %4669 = vmatprep.subr.mxu0 0.0
      %4670 = vmatpush1.msra.mxu0 %v4548
      %4671 = vmatprep.subr.mxu0 0.0
      %4672 = vmatpush1.msra.mxu0 %v4547
      %4673 = vmatprep.subr.mxu0 0.0
      %4674 = vmatpush1.msra.mxu0 %v4546
      %4675 = vmatprep.subr.mxu0 0.0
      %4676 = vmatpush1.msra.mxu0 %v4545
      %4677 = vmatprep.subr.mxu0 0.0
      %4678 = vmatpush1.msra.mxu0 %v4544
      %4679 = vmatprep.subr.mxu0 0.0
      %4680 = vmatpush1.msra.mxu0 %v4543
      %4681 = vmatprep.subr.mxu0 0.0
      %4682 = vmatpush1.msra.mxu0 %v4542
      %4683 = vmatprep.subr.mxu0 0.0
      %4684 = vmatpush1.msra.mxu0 %v4541
      %4685 = vmatprep.subr.mxu0 0.0
      %4686 = vmatpush1.msra.mxu0 %v4540
      %4687 = vmatprep.subr.mxu0 0.0
      %4688 = vmatpush1.msra.mxu0 %v4539
      %4689 = vmatprep.subr.mxu0 0.0
      %4690 = vmatpush1.msra.mxu0 %v4538
      %4691 = vmatprep.subr.mxu0 0.0
      %4692 = vmatpush2.msra.mxu0 0.0
      %4693 = vmatprep.subr.mxu0 0.0
      %4694 = vmatpush2.msra.mxu0 0.0
      %4695 = vmatprep.subr.mxu0 0.0
      %4696 = vmatpush2.msra.mxu0 0.0
      %4697 = vmatprep.subr.mxu0 0.0
      %4698 = vmatpush2.msra.mxu0 0.0
      %4699 = vmatprep.subr.mxu0 0.0
      %4700 = vmatpush2.msra.mxu0 0.0
      %4701 = vmatprep.subr.mxu0 0.0
      %4702 = vmatpush2.msra.mxu0 0.0
      %4703 = vmatprep.subr.mxu0 0.0
      %4704 = vmatpush2.msra.mxu0 0.0
      %4705 = vmatprep.subr.mxu0 0.0
      %4706 = vmatpush2.msra.mxu0 0.0
      %4707 = vmatprep.subr.mxu0 0.0
      %4708 = vmatpush2.msra.mxu0 0.0
      %4709 = vmatprep.subr.mxu0 0.0
      %4710 = vmatpush2.msra.mxu0 0.0
      %4711 = vmatprep.subr.mxu0 0.0
      %4712 = vmatpush2.msra.mxu0 0.0
      %4713 = vmatprep.subr.mxu0 0.0
      %4714 = vmatpush2.msra.mxu0 0.0
      %4715 = vmatprep.subr.mxu0 0.0
      %4716 = vmatpush2.msra.mxu0 0.0
      %4717 = vmatprep.subr.mxu0 0.0
      %4718 = vmatpush2.msra.mxu0 0.0
      %4719 = vmatprep.subr.mxu0 0.0
      %4720 = vmatpush2.msra.mxu0 %v4555
      %4721 = vmatprep.subr.mxu0 0.0
      %4722 = vmatpush2.msra.mxu0 %v4554
      %4723 = vmatprep.mubr.f32.mxu0 %v4564
      %4724 = vmatmul.mubr.f32.gmra.mxu0 %v4474
      %v4725 = vpop.f32.mrf.mxu0
      %v4726 = vadd.f32 %v4561, %v4725
      %v4727 = vpop.f32.mrf.mxu0
      %4728 = vmatprep.mubr.f32.mxu0 %v4567
      %4729 = vmatmul.mubr.f32.gmra.mxu0 %v4476
      %v4730 = vpop.f32.mrf.mxu0
      %v4731 = vadd.f32 %v4561, %v4730
      %v4732 = vpop.f32.mrf.mxu0
      %4733 = vmatprep.mubr.f32.mxu0 %v4570
      %4734 = vmatmul.mubr.f32.gmra.mxu0 %v4478
      %v4735 = vpop.f32.mrf.mxu0
      %v4736 = vadd.f32 %v4561, %v4735
      %v4737 = vpop.f32.mrf.mxu0
      %4738 = vmatprep.mubr.f32.mxu0 %v4573
      %4739 = vmatmul.mubr.f32.gmra.mxu0 %v4480
      %v4740 = vpop.f32.mrf.mxu0
      %v4741 = vadd.f32 %v4561, %v4740
      %v4742 = vpop.f32.mrf.mxu0
      %4743 = vmatprep.mubr.f32.mxu0 %v4576
      %4744 = vmatmul.mubr.f32.gmra.mxu0 %v4482
      %v4745 = vpop.f32.mrf.mxu0
      %v4746 = vadd.f32 %v4561, %v4745
      %v4747 = vpop.f32.mrf.mxu0
      %4748 = vmatprep.mubr.f32.mxu0 %v4579
      %4749 = vmatmul.mubr.f32.gmra.mxu0 %v4484
      %v4750 = vpop.f32.mrf.mxu0
      %v4751 = vadd.f32 %v4561, %v4750
      %v4752 = vpop.f32.mrf.mxu0
      %4753 = vmatprep.mubr.f32.mxu0 %v4582
      %4754 = vmatmul.mubr.f32.gmra.mxu0 %v4486
      %v4755 = vpop.f32.mrf.mxu0
      %v4756 = vadd.f32 %v4561, %v4755
      %v4757 = vpop.f32.mrf.mxu0
      %4758 = vmatprep.mubr.f32.mxu0 %v4585
      %4759 = vmatmul.mubr.f32.gmra.mxu0 %v4488
      %v4760 = vpop.f32.mrf.mxu0
      %v4761 = vadd.f32 %v4561, %v4760
      %v4762 = vpop.f32.mrf.mxu0
      %4763 = vmatprep.mubr.f32.mxu0 %v4588
      %4764 = vmatmul.mubr.f32.gmra.mxu0 %v4490
      %v4765 = vpop.f32.mrf.mxu0
      %v4766 = vadd.f32 %v4561, %v4765
      %v4767 = vpop.f32.mrf.mxu0
      %4768 = vmatprep.mubr.f32.mxu0 %v4591
      %4769 = vmatmul.mubr.f32.gmra.mxu0 %v4492
      %v4770 = vpop.f32.mrf.mxu0
      %v4771 = vadd.f32 %v4561, %v4770
      %v4772 = vpop.f32.mrf.mxu0
      %4773 = vmatprep.mubr.f32.mxu0 %v4594
      %4774 = vmatmul.mubr.f32.gmra.mxu0 %v4494
      %v4775 = vpop.f32.mrf.mxu0
      %v4776 = vadd.f32 %v4561, %v4775
      %v4777 = vpop.f32.mrf.mxu0
      %4778 = vmatprep.mubr.f32.mxu0 %v4597
      %4779 = vmatmul.mubr.f32.gmra.mxu0 %v4496
      %v4780 = vpop.f32.mrf.mxu0
      %v4781 = vadd.f32 %v4561, %v4780
      %v4782 = vpop.f32.mrf.mxu0
      %4783 = vmatprep.mubr.f32.mxu0 %v4600
      %4784 = vmatmul.mubr.f32.gmra.mxu0 %v4498
      %v4785 = vpop.f32.mrf.mxu0
      %v4786 = vadd.f32 %v4561, %v4785
      %v4787 = vpop.f32.mrf.mxu0
      %4788 = vmatprep.mubr.f32.mxu0 %v4603
      %4789 = vmatmul.mubr.f32.gmra.mxu0 %v4500
      %v4790 = vpop.f32.mrf.mxu0
      %v4791 = vadd.f32 %v4561, %v4790
      %v4792 = vpop.f32.mrf.mxu0
      %4793 = vmatprep.mubr.f32.mxu0 %v4606
      %4794 = vmatmul.mubr.f32.gmra.mxu0 %v4502
      %v4795 = vpop.f32.mrf.mxu0
      %v4796 = vadd.f32 %v4561, %v4795
      %v4797 = vpop.f32.mrf.mxu0
      %4798 = vmatprep.mubr.f32.mxu0 %v4609
      %4799 = vmatmul.mubr.f32.gmra.mxu0 %v4504
      %v4800 = vpop.f32.mrf.mxu0
      %v4801 = vadd.f32 %v4561, %v4800
      %v4802 = vpop.f32.mrf.mxu0
      %4803 = vmatprep.mubr.f32.mxu0 %v4612
      %4804 = vmatmul.mubr.f32.gmra.mxu0 %v4506
      %v4805 = vpop.f32.mrf.mxu0
      %v4806 = vadd.f32 %v4561, %v4805
      %v4807 = vpop.f32.mrf.mxu0
      %4808 = vmatprep.mubr.f32.mxu0 %v4615
      %4809 = vmatmul.mubr.f32.gmra.mxu0 %v4508
      %v4810 = vpop.f32.mrf.mxu0
      %v4811 = vadd.f32 %v4561, %v4810
      %v4812 = vpop.f32.mrf.mxu0
      %4813 = vmatprep.mubr.f32.mxu0 %v4618
      %4814 = vmatmul.mubr.f32.gmra.mxu0 %v4510
      %v4815 = vpop.f32.mrf.mxu0
      %v4816 = vadd.f32 %v4561, %v4815
      %v4817 = vpop.f32.mrf.mxu0
      %4818 = vmatprep.mubr.f32.mxu0 %v4621
      %4819 = vmatmul.mubr.f32.gmra.mxu0 %v4512
      %v4820 = vpop.f32.mrf.mxu0
      %v4821 = vadd.f32 %v4561, %v4820
      %v4822 = vpop.f32.mrf.mxu0
      %4823 = vmatprep.mubr.f32.mxu0 %v4624
      %4824 = vmatmul.mubr.f32.gmra.mxu0 %v4514
      %v4825 = vpop.f32.mrf.mxu0
      %v4826 = vadd.f32 %v4561, %v4825
      %v4827 = vpop.f32.mrf.mxu0
      %4828 = vmatprep.mubr.f32.mxu0 %v4627
      %4829 = vmatmul.mubr.f32.gmra.mxu0 %v4516
      %v4830 = vpop.f32.mrf.mxu0
      %v4831 = vadd.f32 %v4561, %v4830
      %v4832 = vpop.f32.mrf.mxu0
      %4833 = vmatprep.mubr.f32.mxu0 %v4630
      %4834 = vmatmul.mubr.f32.gmra.mxu0 %v4518
      %v4835 = vpop.f32.mrf.mxu0
      %v4836 = vadd.f32 %v4561, %v4835
      %v4837 = vpop.f32.mrf.mxu0
      %4838 = vmatprep.mubr.f32.mxu0 %v4633
      %4839 = vmatmul.mubr.f32.gmra.mxu0 %v4520
      %v4840 = vpop.f32.mrf.mxu0
      %v4841 = vadd.f32 %v4561, %v4840
      %v4842 = vpop.f32.mrf.mxu0
      %4843 = vmatprep.mubr.f32.mxu0 %v4636
      %4844 = vmatmul.mubr.f32.gmra.mxu0 %v4522
      %v4845 = vpop.f32.mrf.mxu0
      %v4846 = vadd.f32 %v4561, %v4845
      %v4847 = vpop.f32.mrf.mxu0
      %4848 = vmatprep.mubr.f32.mxu0 %v4639
      %4849 = vmatmul.mubr.f32.gmra.mxu0 %v4524
      %v4850 = vpop.f32.mrf.mxu0
      %v4851 = vadd.f32 %v4561, %v4850
      %v4852 = vpop.f32.mrf.mxu0
      %4853 = vmatprep.mubr.f32.mxu0 %v4642
      %4854 = vmatmul.mubr.f32.gmra.mxu0 %v4526
      %v4855 = vpop.f32.mrf.mxu0
      %v4856 = vadd.f32 %v4561, %v4855
      %v4857 = vpop.f32.mrf.mxu0
      %4858 = vmatprep.mubr.f32.mxu0 %v4645
      %4859 = vmatmul.mubr.f32.gmra.mxu0 %v4528
      %v4860 = vpop.f32.mrf.mxu0
      %v4861 = vadd.f32 %v4561, %v4860
      %v4862 = vpop.f32.mrf.mxu0
      %4863 = vmatprep.mubr.f32.mxu0 %v4648
      %4864 = vmatmul.mubr.f32.gmra.mxu0 %v4530
      %v4865 = vpop.f32.mrf.mxu0
      %v4866 = vadd.f32 %v4561, %v4865
      %v4867 = vpop.f32.mrf.mxu0
      %4868 = vmatprep.mubr.f32.mxu0 %v4651
      %4869 = vmatmul.mubr.f32.gmra.mxu0 %v4532
      %v4870 = vpop.f32.mrf.mxu0
      %v4871 = vadd.f32 %v4561, %v4870
      %v4872 = vpop.f32.mrf.mxu0
      %4873 = vmatprep.mubr.f32.mxu0 %v4654
      %4874 = vmatmul.mubr.f32.gmra.mxu0 %v4534
      %v4875 = vpop.f32.mrf.mxu0
      %v4876 = vadd.f32 %v4561, %v4875
      %v4877 = vpop.f32.mrf.mxu0
      %4878 = vmatprep.mubr.f32.mxu0 %v4657
      %4879 = vmatmul.mubr.f32.gmra.mxu0 %v4536
      %v4880 = vpop.f32.mrf.mxu0
      %v4881 = vadd.f32 %v4561, %v4880
      %v4882 = vpop.f32.mrf.mxu0
      %4883 = vdwg.mxu0
      %v4884 = vsel %vm333, %v4726, 0.0
      %v4885 = vsel %vm333, %v4736, 0.0
      %v4886 = vadd.f32 %v4884, %v4885
      %v4887 = vsel %vm333, %v4746, 0.0
      %v4888 = vadd.f32 %v4886, %v4887
      %v4889 = vsel %vm333, %v4756, 0.0
      %v4890 = vadd.f32 %v4888, %v4889
      %v4891 = vsel %vm333, %v4766, 0.0
      %v4892 = vadd.f32 %v4890, %v4891
      %v4893 = vsel %vm333, %v4776, 0.0
      %v4894 = vadd.f32 %v4892, %v4893
      %v4895 = vsel %vm333, %v4786, 0.0
      %v4896 = vadd.f32 %v4894, %v4895
      %v4897 = vsel %vm333, %v4796, 0.0
      %v4898 = vadd.f32 %v4896, %v4897
      %v4899 = vsel %vm333, %v4806, 0.0
      %v4900 = vadd.f32 %v4898, %v4899
      %v4901 = vsel %vm333, %v4816, 0.0
      %v4902 = vadd.f32 %v4900, %v4901
      %v4903 = vsel %vm333, %v4826, 0.0
      %v4904 = vadd.f32 %v4902, %v4903
      %v4905 = vsel %vm333, %v4836, 0.0
      %v4906 = vadd.f32 %v4904, %v4905
      %v4907 = vsel %vm333, %v4846, 0.0
      %v4908 = vadd.f32 %v4906, %v4907
      %v4909 = vsel %vm333, %v4856, 0.0
      %v4910 = vadd.f32 %v4908, %v4909
      %v4911 = vsel %vm333, %v4866, 0.0
      %v4912 = vadd.f32 %v4910, %v4911
      %v4913 = vsel %vm333, %v4876, 0.0
      %v4914 = vadd.f32 %v4912, %v4913
      %v4915 = vsel %vm333, %v4731, 0.0
      %v4916 = vsel %vm333, %v4741, 0.0
      %v4917 = vadd.f32 %v4915, %v4916
      %v4918 = vsel %vm333, %v4751, 0.0
      %v4919 = vadd.f32 %v4917, %v4918
      %v4920 = vsel %vm333, %v4761, 0.0
      %v4921 = vadd.f32 %v4919, %v4920
      %v4922 = vsel %vm333, %v4771, 0.0
      %v4923 = vadd.f32 %v4921, %v4922
      %v4924 = vsel %vm333, %v4781, 0.0
      %v4925 = vadd.f32 %v4923, %v4924
      %v4926 = vsel %vm333, %v4791, 0.0
      %v4927 = vadd.f32 %v4925, %v4926
      %v4928 = vsel %vm333, %v4801, 0.0
      %v4929 = vadd.f32 %v4927, %v4928
      %v4930 = vsel %vm333, %v4811, 0.0
      %v4931 = vadd.f32 %v4929, %v4930
      %v4932 = vsel %vm333, %v4821, 0.0
      %v4933 = vadd.f32 %v4931, %v4932
      %v4934 = vsel %vm333, %v4831, 0.0
      %v4935 = vadd.f32 %v4933, %v4934
      %v4936 = vsel %vm333, %v4841, 0.0
      %v4937 = vadd.f32 %v4935, %v4936
      %v4938 = vsel %vm333, %v4851, 0.0
      %v4939 = vadd.f32 %v4937, %v4938
      %v4940 = vsel %vm333, %v4861, 0.0
      %v4941 = vadd.f32 %v4939, %v4940
      %v4942 = vsel %vm333, %v4871, 0.0
      %v4943 = vadd.f32 %v4941, %v4942
      %v4944 = vsel %vm333, %v4881, 0.0
      %v4945 = vadd.f32 %v4943, %v4944
      %v4946 = vsel %vm333, %v4914, 0.0
      %v4947 = vsel %vm333, %v4945, 0.0
      %v4948 = vadd.f32 %v4946, %v4947
      %v4949 = vrot.slane %v4948, 4
      %v4950 = vadd.f32 %v4948, %v4949
      %v4951 = vrot.slane %v4950, 2
      %v4952 = vadd.f32 %v4950, %v4951
      %v4953 = vrot.slane %v4952, 1
      %v4954 = vadd.f32 %v4952, %v4953
      %v4955 = vmul.f32 %v4954, 0.00390625
      %v4956 = vld [vmem:[%s5] sm:$0xf]
      %v4957 = vmul.f32 %v4956, %v4955
      %vm4958 = vcmask 125952
      %v4959 = vsel %vm4958, %v4957, 0.0
      %4960 = vadd.xlane.f32.xlu0 %v4959
      %v4961 = vpop.xlane.xlu0 %4960
      %v4962 = vld [vmem:[%s6] sm:$0xf]
      %v4963 = vadd.f32 %v4961, %v4962
      %v4964 = vmax.f32 %v4963, 0.0
      %v4965 = vld [vmem:[%s7] sm:$0xf]
      %4967 = vset.pattern.permute.xlu0 0
      %4968 = vperm.xlu0 %4967, %v4964
      %v4969 = vpop.permute.xlu0 %4968
      %v4971 = vmul.f32 %v4965, %v4969
      %v4972 = vsel %vm4958, %v4971, 0.0
      %v4973 = vrot.slane %v4972, 4
      %v4974 = vadd.f32 %v4972, %v4973
      %v4975 = vrot.slane %v4974, 2
      %v4976 = vadd.f32 %v4974, %v4975
      %v4977 = vrot.slane %v4976, 1
      %v4978 = vadd.f32 %v4976, %v4977
      %v4979 = vld [vmem:[%s8] sm:$0x1]
      %v4980 = vadd.f32 %v4978, %v4979
      %v4981 = vxor.u32 %v4980, 2147483648
      %v4982 = vmul.f32 %v4981, 1.442695
      %v4983 = vpow.pop %v4982
      %v4984 = vadd.f32 %v4983, 1.0
      %v4985 = vrcp.pop %v4984
      %v4986 = vmul.f32 1.0, %v4985
      %v4987 = vlaneseq
      %v4988 = vshrl.u32 %v4987, 7
      %v4989 = vsub.s32 0, %v4988
      %v4990 = vrot.slane %v4986, %v4989
      %v4991 = vmul.f32 %v4726, %v4990
      %v4992 = vmul.f32 %v4731, %v4990
      %v4993 = vmul.f32 %v4736, %v4990
      %v4994 = vmul.f32 %v4741, %v4990
      %v4995 = vmul.f32 %v4746, %v4990
      %v4996 = vmul.f32 %v4751, %v4990
      %v4997 = vmul.f32 %v4756, %v4990
      %v4998 = vmul.f32 %v4761, %v4990
      %v4999 = vmul.f32 %v4766, %v4990
      %v5000 = vmul.f32 %v4771, %v4990
      %v5001 = vmul.f32 %v4776, %v4990
      %v5002 = vmul.f32 %v4781, %v4990
      %v5003 = vmul.f32 %v4786, %v4990
      %v5004 = vmul.f32 %v4791, %v4990
      %v5005 = vmul.f32 %v4796, %v4990
      %v5006 = vmul.f32 %v4801, %v4990
      %v5007 = vmul.f32 %v4806, %v4990
      %v5008 = vmul.f32 %v4811, %v4990
      %v5009 = vmul.f32 %v4816, %v4990
      %v5010 = vmul.f32 %v4821, %v4990
      %v5011 = vmul.f32 %v4826, %v4990
      %v5012 = vmul.f32 %v4831, %v4990
      %v5013 = vmul.f32 %v4836, %v4990
      %v5014 = vmul.f32 %v4841, %v4990
      %v5015 = vmul.f32 %v4846, %v4990
      %v5016 = vmul.f32 %v4851, %v4990
      %v5017 = vmul.f32 %v4856, %v4990
      %v5018 = vmul.f32 %v4861, %v4990
      %v5019 = vmul.f32 %v4866, %v4990
      %v5020 = vmul.f32 %v4871, %v4990
      %v5021 = vmul.f32 %v4876, %v4990
      %v5022 = vmul.f32 %v4881, %v4990
      %v5023 = vcombine.low %v4991, %v4995
      %v5024 = vcombine.high %v4991, %v4995
      %v5026 = vunpack.c.l.s4 1983009808
      %v5027 = vunpack.c.0.s8 %v5026
      %v5028 = vlaneseq
      %v5029 = vshrl.u32 %v5028, 7
      %v5030 = vsub.s32 %v5027, %v5029
      %v5031 = vrot.slane %v5023, %v5030
      %v5033 = vunpack.c.l.s4 1983009808
      %v5034 = vunpack.c.0.s8 %v5033
      %v5035 = vlaneseq
      %v5036 = vshrl.u32 %v5035, 7
      %v5037 = vsub.s32 %v5034, %v5036
      %v5038 = vrot.slane %v5024, %v5037
      %v5039 = vcombine.low %v4993, %v4997
      %v5040 = vcombine.high %v4993, %v4997
      %v5042 = vunpack.c.l.s4 1983009808
      %v5043 = vunpack.c.0.s8 %v5042
      %v5044 = vlaneseq
      %v5045 = vshrl.u32 %v5044, 7
      %v5046 = vsub.s32 %v5043, %v5045
      %v5047 = vrot.slane %v5039, %v5046
      %v5049 = vunpack.c.l.s4 1983009808
      %v5050 = vunpack.c.0.s8 %v5049
      %v5051 = vlaneseq
      %v5052 = vshrl.u32 %v5051, 7
      %v5053 = vsub.s32 %v5050, %v5052
      %v5054 = vrot.slane %v5040, %v5053
      %v5055 = vcombine.low %v4999, %v5003
      %v5056 = vcombine.high %v4999, %v5003
      %v5058 = vunpack.c.l.s4 1983009808
      %v5059 = vunpack.c.0.s8 %v5058
      %v5060 = vlaneseq
      %v5061 = vshrl.u32 %v5060, 7
      %v5062 = vsub.s32 %v5059, %v5061
      %v5063 = vrot.slane %v5055, %v5062
      %v5065 = vunpack.c.l.s4 1983009808
      %v5066 = vunpack.c.0.s8 %v5065
      %v5067 = vlaneseq
      %v5068 = vshrl.u32 %v5067, 7
      %v5069 = vsub.s32 %v5066, %v5068
      %v5070 = vrot.slane %v5056, %v5069
      %v5071 = vcombine.low %v5001, %v5005
      %v5072 = vcombine.high %v5001, %v5005
      %v5074 = vunpack.c.l.s4 1983009808
      %v5075 = vunpack.c.0.s8 %v5074
      %v5076 = vlaneseq
      %v5077 = vshrl.u32 %v5076, 7
      %v5078 = vsub.s32 %v5075, %v5077
      %v5079 = vrot.slane %v5071, %v5078
      %v5081 = vunpack.c.l.s4 1983009808
      %v5082 = vunpack.c.0.s8 %v5081
      %v5083 = vlaneseq
      %v5084 = vshrl.u32 %v5083, 7
      %v5085 = vsub.s32 %v5082, %v5084
      %v5086 = vrot.slane %v5072, %v5085
      %v5087 = vcombine.low %v5031, %v5047
      %v5088 = vcombine.high %v5031, %v5047
      %v5090 = vunpack.c.l.s4 1934713408
      %v5091 = vunpack.c.0.s8 %v5090
      %v5092 = vlaneseq
      %v5093 = vshrl.u32 %v5092, 7
      %v5094 = vsub.s32 %v5091, %v5093
      %v5095 = vrot.slane %v5087, %v5094
      %v5097 = vunpack.c.l.s4 1934713408
      %v5098 = vunpack.c.0.s8 %v5097
      %v5099 = vlaneseq
      %v5100 = vshrl.u32 %v5099, 7
      %v5101 = vsub.s32 %v5098, %v5100
      %v5102 = vrot.slane %v5088, %v5101
      %v5103 = vcombine.low %v5038, %v5054
      %v5104 = vcombine.high %v5038, %v5054
      %v5106 = vunpack.c.l.s4 1934713408
      %v5107 = vunpack.c.0.s8 %v5106
      %v5108 = vlaneseq
      %v5109 = vshrl.u32 %v5108, 7
      %v5110 = vsub.s32 %v5107, %v5109
      %v5111 = vrot.slane %v5103, %v5110
      %v5113 = vunpack.c.l.s4 1934713408
      %v5114 = vunpack.c.0.s8 %v5113
      %v5115 = vlaneseq
      %v5116 = vshrl.u32 %v5115, 7
      %v5117 = vsub.s32 %v5114, %v5116
      %v5118 = vrot.slane %v5104, %v5117
      %v5119 = vcombine.low %v5063, %v5079
      %v5120 = vcombine.high %v5063, %v5079
      %v5122 = vunpack.c.l.s4 1934713408
      %v5123 = vunpack.c.0.s8 %v5122
      %v5124 = vlaneseq
      %v5125 = vshrl.u32 %v5124, 7
      %v5126 = vsub.s32 %v5123, %v5125
      %v5127 = vrot.slane %v5119, %v5126
      %v5129 = vunpack.c.l.s4 1934713408
      %v5130 = vunpack.c.0.s8 %v5129
      %v5131 = vlaneseq
      %v5132 = vshrl.u32 %v5131, 7
      %v5133 = vsub.s32 %v5130, %v5132
      %v5134 = vrot.slane %v5120, %v5133
      %v5135 = vcombine.low %v5070, %v5086
      %v5136 = vcombine.high %v5070, %v5086
      %v5138 = vunpack.c.l.s4 1934713408
      %v5139 = vunpack.c.0.s8 %v5138
      %v5140 = vlaneseq
      %v5141 = vshrl.u32 %v5140, 7
      %v5142 = vsub.s32 %v5139, %v5141
      %v5143 = vrot.slane %v5135, %v5142
      %v5145 = vunpack.c.l.s4 1934713408
      %v5146 = vunpack.c.0.s8 %v5145
      %v5147 = vlaneseq
      %v5148 = vshrl.u32 %v5147, 7
      %v5149 = vsub.s32 %v5146, %v5148
      %v5150 = vrot.slane %v5136, %v5149
      %v5151 = vcombine.low %v5095, %v5127
      %v5152 = vcombine.high %v5095, %v5127
      %v5153 = vcombine.low %v5102, %v5134
      %v5154 = vcombine.high %v5102, %v5134
      %v5155 = vcombine.low %v5111, %v5143
      %v5156 = vcombine.high %v5111, %v5143
      %v5157 = vcombine.low %v5118, %v5150
      %v5158 = vcombine.high %v5118, %v5150
      %v5159 = vcombine.low %v5007, %v5011
      %v5160 = vcombine.high %v5007, %v5011
      %v5162 = vunpack.c.l.s4 1983009808
      %v5163 = vunpack.c.0.s8 %v5162
      %v5164 = vlaneseq
      %v5165 = vshrl.u32 %v5164, 7
      %v5166 = vsub.s32 %v5163, %v5165
      %v5167 = vrot.slane %v5159, %v5166
      %v5169 = vunpack.c.l.s4 1983009808
      %v5170 = vunpack.c.0.s8 %v5169
      %v5171 = vlaneseq
      %v5172 = vshrl.u32 %v5171, 7
      %v5173 = vsub.s32 %v5170, %v5172
      %v5174 = vrot.slane %v5160, %v5173
      %v5175 = vcombine.low %v5009, %v5013
      %v5176 = vcombine.high %v5009, %v5013
      %v5178 = vunpack.c.l.s4 1983009808
      %v5179 = vunpack.c.0.s8 %v5178
      %v5180 = vlaneseq
      %v5181 = vshrl.u32 %v5180, 7
      %v5182 = vsub.s32 %v5179, %v5181
      %v5183 = vrot.slane %v5175, %v5182
      %v5185 = vunpack.c.l.s4 1983009808
      %v5186 = vunpack.c.0.s8 %v5185
      %v5187 = vlaneseq
      %v5188 = vshrl.u32 %v5187, 7
      %v5189 = vsub.s32 %v5186, %v5188
      %v5190 = vrot.slane %v5176, %v5189
      %v5191 = vcombine.low %v5015, %v5019
      %v5192 = vcombine.high %v5015, %v5019
      %v5194 = vunpack.c.l.s4 1983009808
      %v5195 = vunpack.c.0.s8 %v5194
      %v5196 = vlaneseq
      %v5197 = vshrl.u32 %v5196, 7
      %v5198 = vsub.s32 %v5195, %v5197
      %v5199 = vrot.slane %v5191, %v5198
      %v5201 = vunpack.c.l.s4 1983009808
      %v5202 = vunpack.c.0.s8 %v5201
      %v5203 = vlaneseq
      %v5204 = vshrl.u32 %v5203, 7
      %v5205 = vsub.s32 %v5202, %v5204
      %v5206 = vrot.slane %v5192, %v5205
      %v5207 = vcombine.low %v5017, %v5021
      %v5208 = vcombine.high %v5017, %v5021
      %v5210 = vunpack.c.l.s4 1983009808
      %v5211 = vunpack.c.0.s8 %v5210
      %v5212 = vlaneseq
      %v5213 = vshrl.u32 %v5212, 7
      %v5214 = vsub.s32 %v5211, %v5213
      %v5215 = vrot.slane %v5207, %v5214
      %v5217 = vunpack.c.l.s4 1983009808
      %v5218 = vunpack.c.0.s8 %v5217
      %v5219 = vlaneseq
      %v5220 = vshrl.u32 %v5219, 7
      %v5221 = vsub.s32 %v5218, %v5220
      %v5222 = vrot.slane %v5208, %v5221
      %v5223 = vcombine.low %v5167, %v5183
      %v5224 = vcombine.high %v5167, %v5183
      %v5226 = vunpack.c.l.s4 1934713408
      %v5227 = vunpack.c.0.s8 %v5226
      %v5228 = vlaneseq
      %v5229 = vshrl.u32 %v5228, 7
      %v5230 = vsub.s32 %v5227, %v5229
      %v5231 = vrot.slane %v5223, %v5230
      %v5233 = vunpack.c.l.s4 1934713408
      %v5234 = vunpack.c.0.s8 %v5233
      %v5235 = vlaneseq
      %v5236 = vshrl.u32 %v5235, 7
      %v5237 = vsub.s32 %v5234, %v5236
      %v5238 = vrot.slane %v5224, %v5237
      %v5239 = vcombine.low %v5174, %v5190
      %v5240 = vcombine.high %v5174, %v5190
      %v5242 = vunpack.c.l.s4 1934713408
      %v5243 = vunpack.c.0.s8 %v5242
      %v5244 = vlaneseq
      %v5245 = vshrl.u32 %v5244, 7
      %v5246 = vsub.s32 %v5243, %v5245
      %v5247 = vrot.slane %v5239, %v5246
      %v5249 = vunpack.c.l.s4 1934713408
      %v5250 = vunpack.c.0.s8 %v5249
      %v5251 = vlaneseq
      %v5252 = vshrl.u32 %v5251, 7
      %v5253 = vsub.s32 %v5250, %v5252
      %v5254 = vrot.slane %v5240, %v5253
      %v5255 = vcombine.low %v5199, %v5215
      %v5256 = vcombine.high %v5199, %v5215
      %v5258 = vunpack.c.l.s4 1934713408
      %v5259 = vunpack.c.0.s8 %v5258
      %v5260 = vlaneseq
      %v5261 = vshrl.u32 %v5260, 7
      %v5262 = vsub.s32 %v5259, %v5261
      %v5263 = vrot.slane %v5255, %v5262
      %v5265 = vunpack.c.l.s4 1934713408
      %v5266 = vunpack.c.0.s8 %v5265
      %v5267 = vlaneseq
      %v5268 = vshrl.u32 %v5267, 7
      %v5269 = vsub.s32 %v5266, %v5268
      %v5270 = vrot.slane %v5256, %v5269
      %v5271 = vcombine.low %v5206, %v5222
      %v5272 = vcombine.high %v5206, %v5222
      %v5274 = vunpack.c.l.s4 1934713408
      %v5275 = vunpack.c.0.s8 %v5274
      %v5276 = vlaneseq
      %v5277 = vshrl.u32 %v5276, 7
      %v5278 = vsub.s32 %v5275, %v5277
      %v5279 = vrot.slane %v5271, %v5278
      %v5281 = vunpack.c.l.s4 1934713408
      %v5282 = vunpack.c.0.s8 %v5281
      %v5283 = vlaneseq
      %v5284 = vshrl.u32 %v5283, 7
      %v5285 = vsub.s32 %v5282, %v5284
      %v5286 = vrot.slane %v5272, %v5285
      %v5287 = vcombine.low %v5231, %v5263
      %v5288 = vcombine.high %v5231, %v5263
      %v5289 = vcombine.low %v5238, %v5270
      %v5290 = vcombine.high %v5238, %v5270
      %v5291 = vcombine.low %v5247, %v5279
      %v5292 = vcombine.high %v5247, %v5279
      %v5293 = vcombine.low %v5254, %v5286
      %v5294 = vcombine.high %v5254, %v5286
      %v5295 = vcombine.low %v4992, %v4996
      %v5296 = vcombine.high %v4992, %v4996
      %v5298 = vunpack.c.l.s4 1983009808
      %v5299 = vunpack.c.0.s8 %v5298
      %v5300 = vlaneseq
      %v5301 = vshrl.u32 %v5300, 7
      %v5302 = vsub.s32 %v5299, %v5301
      %v5303 = vrot.slane %v5295, %v5302
      %v5305 = vunpack.c.l.s4 1983009808
      %v5306 = vunpack.c.0.s8 %v5305
      %v5307 = vlaneseq
      %v5308 = vshrl.u32 %v5307, 7
      %v5309 = vsub.s32 %v5306, %v5308
      %v5310 = vrot.slane %v5296, %v5309
      %v5311 = vcombine.low %v4994, %v4998
      %v5312 = vcombine.high %v4994, %v4998
      %v5314 = vunpack.c.l.s4 1983009808
      %v5315 = vunpack.c.0.s8 %v5314
      %v5316 = vlaneseq
      %v5317 = vshrl.u32 %v5316, 7
      %v5318 = vsub.s32 %v5315, %v5317
      %v5319 = vrot.slane %v5311, %v5318
      %v5321 = vunpack.c.l.s4 1983009808
      %v5322 = vunpack.c.0.s8 %v5321
      %v5323 = vlaneseq
      %v5324 = vshrl.u32 %v5323, 7
      %v5325 = vsub.s32 %v5322, %v5324
      %v5326 = vrot.slane %v5312, %v5325
      %v5327 = vcombine.low %v5000, %v5004
      %v5328 = vcombine.high %v5000, %v5004
      %v5330 = vunpack.c.l.s4 1983009808
      %v5331 = vunpack.c.0.s8 %v5330
      %v5332 = vlaneseq
      %v5333 = vshrl.u32 %v5332, 7
      %v5334 = vsub.s32 %v5331, %v5333
      %v5335 = vrot.slane %v5327, %v5334
      %v5337 = vunpack.c.l.s4 1983009808
      %v5338 = vunpack.c.0.s8 %v5337
      %v5339 = vlaneseq
      %v5340 = vshrl.u32 %v5339, 7
      %v5341 = vsub.s32 %v5338, %v5340
      %v5342 = vrot.slane %v5328, %v5341
      %v5343 = vcombine.low %v5002, %v5006
      %v5344 = vcombine.high %v5002, %v5006
      %v5346 = vunpack.c.l.s4 1983009808
      %v5347 = vunpack.c.0.s8 %v5346
      %v5348 = vlaneseq
      %v5349 = vshrl.u32 %v5348, 7
      %v5350 = vsub.s32 %v5347, %v5349
      %v5351 = vrot.slane %v5343, %v5350
      %v5353 = vunpack.c.l.s4 1983009808
      %v5354 = vunpack.c.0.s8 %v5353
      %v5355 = vlaneseq
      %v5356 = vshrl.u32 %v5355, 7
      %v5357 = vsub.s32 %v5354, %v5356
      %v5358 = vrot.slane %v5344, %v5357
      %v5359 = vcombine.low %v5303, %v5319
      %v5360 = vcombine.high %v5303, %v5319
      %v5362 = vunpack.c.l.s4 1934713408
      %v5363 = vunpack.c.0.s8 %v5362
      %v5364 = vlaneseq
      %v5365 = vshrl.u32 %v5364, 7
      %v5366 = vsub.s32 %v5363, %v5365
      %v5367 = vrot.slane %v5359, %v5366
      %v5369 = vunpack.c.l.s4 1934713408
      %v5370 = vunpack.c.0.s8 %v5369
      %v5371 = vlaneseq
      %v5372 = vshrl.u32 %v5371, 7
      %v5373 = vsub.s32 %v5370, %v5372
      %v5374 = vrot.slane %v5360, %v5373
      %v5375 = vcombine.low %v5310, %v5326
      %v5376 = vcombine.high %v5310, %v5326
      %v5378 = vunpack.c.l.s4 1934713408
      %v5379 = vunpack.c.0.s8 %v5378
      %v5380 = vlaneseq
      %v5381 = vshrl.u32 %v5380, 7
      %v5382 = vsub.s32 %v5379, %v5381
      %v5383 = vrot.slane %v5375, %v5382
      %v5385 = vunpack.c.l.s4 1934713408
      %v5386 = vunpack.c.0.s8 %v5385
      %v5387 = vlaneseq
      %v5388 = vshrl.u32 %v5387, 7
      %v5389 = vsub.s32 %v5386, %v5388
      %v5390 = vrot.slane %v5376, %v5389
      %v5391 = vcombine.low %v5335, %v5351
      %v5392 = vcombine.high %v5335, %v5351
      %v5394 = vunpack.c.l.s4 1934713408
      %v5395 = vunpack.c.0.s8 %v5394
      %v5396 = vlaneseq
      %v5397 = vshrl.u32 %v5396, 7
      %v5398 = vsub.s32 %v5395, %v5397
      %v5399 = vrot.slane %v5391, %v5398
      %v5401 = vunpack.c.l.s4 1934713408
      %v5402 = vunpack.c.0.s8 %v5401
      %v5403 = vlaneseq
      %v5404 = vshrl.u32 %v5403, 7
      %v5405 = vsub.s32 %v5402, %v5404
      %v5406 = vrot.slane %v5392, %v5405
      %v5407 = vcombine.low %v5342, %v5358
      %v5408 = vcombine.high %v5342, %v5358
      %v5410 = vunpack.c.l.s4 1934713408
      %v5411 = vunpack.c.0.s8 %v5410
      %v5412 = vlaneseq
      %v5413 = vshrl.u32 %v5412, 7
      %v5414 = vsub.s32 %v5411, %v5413
      %v5415 = vrot.slane %v5407, %v5414
      %v5417 = vunpack.c.l.s4 1934713408
      %v5418 = vunpack.c.0.s8 %v5417
      %v5419 = vlaneseq
      %v5420 = vshrl.u32 %v5419, 7
      %v5421 = vsub.s32 %v5418, %v5420
      %v5422 = vrot.slane %v5408, %v5421
      %v5423 = vcombine.low %v5367, %v5399
      %v5424 = vcombine.high %v5367, %v5399
      %v5425 = vcombine.low %v5374, %v5406
      %v5426 = vcombine.high %v5374, %v5406
      %v5427 = vcombine.low %v5383, %v5415
      %v5428 = vcombine.high %v5383, %v5415
      %v5429 = vcombine.low %v5390, %v5422
      %v5430 = vcombine.high %v5390, %v5422
      %v5431 = vcombine.low %v5008, %v5012
      %v5432 = vcombine.high %v5008, %v5012
      %v5434 = vunpack.c.l.s4 1983009808
      %v5435 = vunpack.c.0.s8 %v5434
      %v5436 = vlaneseq
      %v5437 = vshrl.u32 %v5436, 7
      %v5438 = vsub.s32 %v5435, %v5437
      %v5439 = vrot.slane %v5431, %v5438
      %v5441 = vunpack.c.l.s4 1983009808
      %v5442 = vunpack.c.0.s8 %v5441
      %v5443 = vlaneseq
      %v5444 = vshrl.u32 %v5443, 7
      %v5445 = vsub.s32 %v5442, %v5444
      %v5446 = vrot.slane %v5432, %v5445
      %v5447 = vcombine.low %v5010, %v5014
      %v5448 = vcombine.high %v5010, %v5014
      %v5450 = vunpack.c.l.s4 1983009808
      %v5451 = vunpack.c.0.s8 %v5450
      %v5452 = vlaneseq
      %v5453 = vshrl.u32 %v5452, 7
      %v5454 = vsub.s32 %v5451, %v5453
      %v5455 = vrot.slane %v5447, %v5454
      %v5457 = vunpack.c.l.s4 1983009808
      %v5458 = vunpack.c.0.s8 %v5457
      %v5459 = vlaneseq
      %v5460 = vshrl.u32 %v5459, 7
      %v5461 = vsub.s32 %v5458, %v5460
      %v5462 = vrot.slane %v5448, %v5461
      %v5463 = vcombine.low %v5016, %v5020
      %v5464 = vcombine.high %v5016, %v5020
      %v5466 = vunpack.c.l.s4 1983009808
      %v5467 = vunpack.c.0.s8 %v5466
      %v5468 = vlaneseq
      %v5469 = vshrl.u32 %v5468, 7
      %v5470 = vsub.s32 %v5467, %v5469
      %v5471 = vrot.slane %v5463, %v5470
      %v5473 = vunpack.c.l.s4 1983009808
      %v5474 = vunpack.c.0.s8 %v5473
      %v5475 = vlaneseq
      %v5476 = vshrl.u32 %v5475, 7
      %v5477 = vsub.s32 %v5474, %v5476
      %v5478 = vrot.slane %v5464, %v5477
      %v5479 = vcombine.low %v5018, %v5022
      %v5480 = vcombine.high %v5018, %v5022
      %v5482 = vunpack.c.l.s4 1983009808
      %v5483 = vunpack.c.0.s8 %v5482
      %v5484 = vlaneseq
      %v5485 = vshrl.u32 %v5484, 7
      %v5486 = vsub.s32 %v5483, %v5485
      %v5487 = vrot.slane %v5479, %v5486
      %v5489 = vunpack.c.l.s4 1983009808
      %v5490 = vunpack.c.0.s8 %v5489
      %v5491 = vlaneseq
      %v5492 = vshrl.u32 %v5491, 7
      %v5493 = vsub.s32 %v5490, %v5492
      %v5494 = vrot.slane %v5480, %v5493
      %v5495 = vcombine.low %v5439, %v5455
      %v5496 = vcombine.high %v5439, %v5455
      %v5498 = vunpack.c.l.s4 1934713408
      %v5499 = vunpack.c.0.s8 %v5498
      %v5500 = vlaneseq
      %v5501 = vshrl.u32 %v5500, 7
      %v5502 = vsub.s32 %v5499, %v5501
      %v5503 = vrot.slane %v5495, %v5502
      %v5505 = vunpack.c.l.s4 1934713408
      %v5506 = vunpack.c.0.s8 %v5505
      %v5507 = vlaneseq
      %v5508 = vshrl.u32 %v5507, 7
      %v5509 = vsub.s32 %v5506, %v5508
      %v5510 = vrot.slane %v5496, %v5509
      %v5511 = vcombine.low %v5446, %v5462
      %v5512 = vcombine.high %v5446, %v5462
      %v5514 = vunpack.c.l.s4 1934713408
      %v5515 = vunpack.c.0.s8 %v5514
      %v5516 = vlaneseq
      %v5517 = vshrl.u32 %v5516, 7
      %v5518 = vsub.s32 %v5515, %v5517
      %v5519 = vrot.slane %v5511, %v5518
      %v5521 = vunpack.c.l.s4 1934713408
      %v5522 = vunpack.c.0.s8 %v5521
      %v5523 = vlaneseq
      %v5524 = vshrl.u32 %v5523, 7
      %v5525 = vsub.s32 %v5522, %v5524
      %v5526 = vrot.slane %v5512, %v5525
      %v5527 = vcombine.low %v5471, %v5487
      %v5528 = vcombine.high %v5471, %v5487
      %v5530 = vunpack.c.l.s4 1934713408
      %v5531 = vunpack.c.0.s8 %v5530
      %v5532 = vlaneseq
      %v5533 = vshrl.u32 %v5532, 7
      %v5534 = vsub.s32 %v5531, %v5533
      %v5535 = vrot.slane %v5527, %v5534
      %v5537 = vunpack.c.l.s4 1934713408
      %v5538 = vunpack.c.0.s8 %v5537
      %v5539 = vlaneseq
      %v5540 = vshrl.u32 %v5539, 7
      %v5541 = vsub.s32 %v5538, %v5540
      %v5542 = vrot.slane %v5528, %v5541
      %v5543 = vcombine.low %v5478, %v5494
      %v5544 = vcombine.high %v5478, %v5494
      %v5546 = vunpack.c.l.s4 1934713408
      %v5547 = vunpack.c.0.s8 %v5546
      %v5548 = vlaneseq
      %v5549 = vshrl.u32 %v5548, 7
      %v5550 = vsub.s32 %v5547, %v5549
      %v5551 = vrot.slane %v5543, %v5550
      %v5553 = vunpack.c.l.s4 1934713408
      %v5554 = vunpack.c.0.s8 %v5553
      %v5555 = vlaneseq
      %v5556 = vshrl.u32 %v5555, 7
      %v5557 = vsub.s32 %v5554, %v5556
      %v5558 = vrot.slane %v5544, %v5557
      %v5559 = vcombine.low %v5503, %v5535
      %v5560 = vcombine.high %v5503, %v5535
      %v5561 = vcombine.low %v5510, %v5542
      %v5562 = vcombine.high %v5510, %v5542
      %v5563 = vcombine.low %v5519, %v5551
      %v5564 = vcombine.high %v5519, %v5551
      %v5565 = vcombine.low %v5526, %v5558
      %v5566 = vcombine.high %v5526, %v5558
      %5569 = vrot.lane.b32.xlu0 %v5152, 16
      %v5570 = vpop.permute.xlu0 %5569
      %5571 = vrot.lane.b32.xlu0 %v5288, 16
      %v5572 = vpop.permute.xlu0 %5571
      %5577 = vrot.lane.b32.xlu0 %v5153, 32
      %v5578 = vpop.permute.xlu0 %5577
      %5579 = vrot.lane.b32.xlu0 %v5289, 32
      %v5580 = vpop.permute.xlu0 %5579
      %5585 = vrot.lane.b32.xlu0 %v5154, 48
      %v5586 = vpop.permute.xlu0 %5585
      %5587 = vrot.lane.b32.xlu0 %v5290, 48
      %v5588 = vpop.permute.xlu0 %5587
      %5593 = vrot.lane.b32.xlu0 %v5155, 64
      %v5594 = vpop.permute.xlu0 %5593
      %5595 = vrot.lane.b32.xlu0 %v5291, 64
      %v5596 = vpop.permute.xlu0 %5595
      %5601 = vrot.lane.b32.xlu0 %v5156, 80
      %v5602 = vpop.permute.xlu0 %5601
      %5603 = vrot.lane.b32.xlu0 %v5292, 80
      %v5604 = vpop.permute.xlu0 %5603
      %5609 = vrot.lane.b32.xlu0 %v5157, 96
      %v5610 = vpop.permute.xlu0 %5609
      %5611 = vrot.lane.b32.xlu0 %v5293, 96
      %v5612 = vpop.permute.xlu0 %5611
      %5617 = vrot.lane.b32.xlu0 %v5158, 112
      %v5618 = vpop.permute.xlu0 %5617
      %5619 = vrot.lane.b32.xlu0 %v5294, 112
      %v5620 = vpop.permute.xlu0 %5619
      %5625 = vrot.lane.b32.xlu0 %v5424, 16
      %v5626 = vpop.permute.xlu0 %5625
      %5627 = vrot.lane.b32.xlu0 %v5560, 16
      %v5628 = vpop.permute.xlu0 %5627
      %5633 = vrot.lane.b32.xlu0 %v5425, 32
      %v5634 = vpop.permute.xlu0 %5633
      %5635 = vrot.lane.b32.xlu0 %v5561, 32
      %v5636 = vpop.permute.xlu0 %5635
      %5641 = vrot.lane.b32.xlu0 %v5426, 48
      %v5642 = vpop.permute.xlu0 %5641
      %5643 = vrot.lane.b32.xlu0 %v5562, 48
      %v5644 = vpop.permute.xlu0 %5643
      %5649 = vrot.lane.b32.xlu0 %v5427, 64
      %v5650 = vpop.permute.xlu0 %5649
      %5651 = vrot.lane.b32.xlu0 %v5563, 64
      %v5652 = vpop.permute.xlu0 %5651
      %5657 = vrot.lane.b32.xlu0 %v5428, 80
      %v5658 = vpop.permute.xlu0 %5657
      %5659 = vrot.lane.b32.xlu0 %v5564, 80
      %v5660 = vpop.permute.xlu0 %5659
      %5665 = vrot.lane.b32.xlu0 %v5429, 96
      %v5666 = vpop.permute.xlu0 %5665
      %5667 = vrot.lane.b32.xlu0 %v5565, 96
      %v5668 = vpop.permute.xlu0 %5667
      %5673 = vrot.lane.b32.xlu0 %v5430, 112
      %v5674 = vpop.permute.xlu0 %5673
      %5675 = vrot.lane.b32.xlu0 %v5566, 112
      %v5676 = vpop.permute.xlu0 %5675
      %v5679 = vsel %vm333, %v5151, %v5570
      %v5680 = vsel %vm333, %v5287, %v5572
      %vm5681 = vcmask 261120
      %v5682 = vsel %vm5681, %v5679, %v5578
      %v5683 = vsel %vm5681, %v5680, %v5580
      %vm5684 = vcmask 392192
      %v5685 = vsel %vm5684, %v5682, %v5586
      %v5686 = vsel %vm5684, %v5683, %v5588
      %vm5687 = vcmask 523264
      %v5688 = vsel %vm5687, %v5685, %v5594
      %v5689 = vsel %vm5687, %v5686, %v5596
      %vm5690 = vcmask 654336
      %v5691 = vsel %vm5690, %v5688, %v5602
      %v5692 = vsel %vm5690, %v5689, %v5604
      %vm5693 = vcmask 785408
      %v5694 = vsel %vm5693, %v5691, %v5610
      %v5695 = vsel %vm5693, %v5692, %v5612
      %vm5696 = vcmask 916480
      %v5697 = vsel %vm5696, %v5694, %v5618
      %v5698 = vsel %vm5696, %v5695, %v5620
      %v5699 = vsel %vm333, %v5423, %v5626
      %v5700 = vsel %vm333, %v5559, %v5628
      %v5701 = vsel %vm5681, %v5699, %v5634
      %v5702 = vsel %vm5681, %v5700, %v5636
      %v5703 = vsel %vm5684, %v5701, %v5642
      %v5704 = vsel %vm5684, %v5702, %v5644
      %v5705 = vsel %vm5687, %v5703, %v5650
      %v5706 = vsel %vm5687, %v5704, %v5652
      %v5707 = vsel %vm5690, %v5705, %v5658
      %v5708 = vsel %vm5690, %v5706, %v5660
      %v5709 = vsel %vm5693, %v5707, %v5666
      %v5710 = vsel %vm5693, %v5708, %v5668
      %v5711 = vsel %vm5696, %v5709, %v5674
      %v5712 = vsel %vm5696, %v5710, %v5676
      %v5713 = vadd.f32 %v5697, %v379
      %v5714 = vadd.f32 %v5711, %v380
      %v5715 = vadd.f32 %v5698, %v381
      %v5716 = vadd.f32 %v5712, %v382
      %5717 = vst [vmem:[%s332] sm:$0xff] %v5713
      %5718 = vst [vmem:[%s332 + $0x8] sm:$0xff] %v5714
      %5719 = vst [vmem:[%s332 + $0x10] sm:$0xff] %v5715
      %5720 = vst [vmem:[%s332 + $0x18] sm:$0xff] %v5716
      %p5721 = scmp.lt.s32.totalorder %s20, 1
      %s5722 = scalar_select %p5721, %s20, 1
      %s5723 = smul.addr %s5722, 4
      %s5724 = smul.addr %s5723, 8
      %s5725 = scalar_lea.vmem %s9, %s5724
      // Predicated region
      $region57: #{rcab_forward.1} parent=55 // pred_check
        %p5726 = pneg %p232
      $region58: #{rcab_forward.1} parent=55 // pred_check_branch
        %5728 = sbr.rel (%p5726) target = $region60
      $region59: #{rcab_forward.1} parent=55 // pred_region
        _
      $region60: #{rcab_forward.1} parent=55 // pred_fallthru
        _
    $region56: #{rcab_forward.1} parent=5 // pred_fallthru
      _
    %p5729 = scmp.le.s32.totalorder 2, %s15
    // Predicated region
    $region61: #{rcab_forward.1} parent=5 // pred_check
      %p5730 = pneg %p5729
    $region62: #{rcab_forward.1} parent=5 // pred_check_branch
      %5732 = sbr.rel (%p5730) target = $region64
    $region63: #{rcab_forward.1} parent=5 // pred_region
      %s5733 = ssub.s32 %s15, 2
      // Predicated region
      $region65: #{rcab_forward.1} parent=63 // pred_check
        %p5734 = pneg %p238
      $region66: #{rcab_forward.1} parent=63 // pred_check_branch
        %5736 = sbr.rel (%p5734) target = $region68
      $region67: #{rcab_forward.1} parent=63 // pred_region
        %p5737 = scmp.lt.s32.totalorder %s21, 1
        %s5738 = scalar_select %p5737, %s21, 1
        %s5739 = smul.addr %s5738, 4
        %s5740 = smul.addr %s5739, 8
        %s5741 = scalar_lea.vmem %s9, %s5740
      $region68: #{rcab_forward.1} parent=63 // pred_fallthru
        _
    $region64: #{rcab_forward.1} parent=5 // pred_fallthru
      _
  $region6: #{rcab_forward.1} parent=0 // loop_footer
    %s19 = sadd.s32 1, %s15
  $region7: #{rcab_forward.1} parent=0 // loop_footer_branch
    %14 = sbr.rel target = $region3
  $region8: #{rcab_forward.1} parent=0 // loop_exit
    _

</llo_original>
